<compile_context>
chip_gen: v7x
topology: tpu7x:2x2x1
jax: 0.10.0
libtpu: 0.0.40
codegen_flags: <defaults>
</compile_context>

<pallas_src>
import functools

import jax
import jax.numpy as jnp
import numpy as np
from jax.experimental import pallas as pl
from jax.experimental.pallas import tpu as pltpu


# ----------------------------------------------------------------------------
# Helpers
# ----------------------------------------------------------------------------
def _round_up(x: int, m: int) -> int:
    return ((x + m - 1) // m) * m


def _physical_vmem_bytes() -> int:
    """Physical VMEM per core (128 MiB v5e/v6e, 64 MiB v7x); safe fallback."""
    try:
        info = pltpu.get_tpu_info()
        cap = getattr(info, "vmem_capacity_bytes", None)
        if cap:
            return int(cap)
    except Exception:
        pass
    return 64 * 1024 * 1024  # conservative (v7x-sized) fallback


def _pick_block_h(H: int, target: int = 512):
    """Largest multiple-of-128 divisor of H that is <= target (None if none)."""
    best = None
    bh = 128
    while bh <= min(H, target):
        if H % bh == 0:
            best = bh
        bh += 128
    return best


_SQRT_HALF = 0.7071067811865476


def _erf_approx(x):
    """Abramowitz & Stegun 7.1.26 erf (|abs err| <= 1.5e-7), f32, VPU/EUP only."""
    p = 0.3275911
    a1, a2, a3, a4, a5 = 0.254829592, -0.284496736, 1.421413741, -1.453152027, 1.061405429
    ax = jnp.abs(x)
    t = 1.0 / (1.0 + p * ax)
    poly = ((((a5 * t + a4) * t + a3) * t + a2) * t + a1) * t
    y = 1.0 - poly * jnp.exp(-(ax * ax))
    return jnp.where(x < 0.0, -y, y)


def _gelu(x, approximate):
    if approximate:
        # tanh form: lands on the EUP (its own VLIW slot, ~free next to the MXU).
        return jax.nn.gelu(x, approximate=True)
    # Exact erf GELU (PyTorch nn.GELU() default) via a <=1.5e-7 approximation.
    return 0.5 * x * (1.0 + _erf_approx(x * _SQRT_HALF))


def _dot_acc_f32(a, b):
    # f32 accumulation always; HIGHEST precision only matters for f32 operands.
    prec = jax.lax.Precision.HIGHEST if a.dtype == jnp.float32 else None
    return jnp.dot(a, b, preferred_element_type=jnp.float32, precision=prec)


# ----------------------------------------------------------------------------
# Kernels
# ----------------------------------------------------------------------------
def _mlp_kernel_resident(x_ref, w1_ref, b1_ref, w2_ref, b2_ref, o_ref,
                         *, approximate_gelu):
    """Whole H resident: one (tm, D_in) row tile -> (tm, D_out) output tile."""
    h = _dot_acc_f32(x_ref[...], w1_ref[...]) + b1_ref[...]          # (tm, H) f32
    h = _gelu(h, approximate_gelu)
    o = _dot_acc_f32(h.astype(w2_ref.dtype), w2_ref[...]) + b2_ref[...]
    o_ref[...] = o.astype(o_ref.dtype)


def _mlp_kernel_htiled(x_ref, w1_ref, b1_ref, w2_ref, b2_ref, o_ref, acc_ref,
                       *, approximate_gelu):
    """H-tiled: accumulate partial fc2 products over the 'arbitrary' H axis."""
    hk = pl.program_id(1)

    @pl.when(hk == 0)
    def _init():
        acc_ref[...] = jnp.zeros_like(acc_ref)

    h = _dot_acc_f32(x_ref[...], w1_ref[...]) + b1_ref[...]          # (tm, th) f32
    h = _gelu(h, approximate_gelu)
    acc_ref[...] += _dot_acc_f32(h.astype(w2_ref.dtype), w2_ref[...])

    @pl.when(hk == pl.num_programs(1) - 1)
    def _finalize():
        o_ref[...] = (acc_ref[...] + b2_ref[...]).astype(o_ref.dtype)


# ----------------------------------------------------------------------------
# Wrapper
# ----------------------------------------------------------------------------
def mlp_forward(x, w1, b1, w2, b2, *, block_m=512, block_h=None,
                compute_dtype=jnp.bfloat16, approximate_gelu=False,
                single_buffer_weights=True):
    """Fused MLP forward: fc2(gelu(fc1(x))).   (Dropout with p=0 is identity.)

    x : (..., D_in);  w1: (D_in, H);  b1: (H,)|(1,H);  w2: (H, D_out);  b2: (D_out,)|(1,D_out)
    returns (..., D_out) in x.dtype.
    """
    D_in, H = w1.shape
    D_out = w2.shape[1]
    lead = x.shape[:-1]
    out_dtype = x.dtype

    # Biases stay f32 (added onto the f32 MXU accumulator).
    b1 = jnp.asarray(b1, jnp.float32).reshape(1, H)
    b2 = jnp.asarray(b2, jnp.float32).reshape(1, D_out)

    # bf16 MXU operands by default (native on v5e/v6e/v7x); accumulation is f32.
    xc = x.reshape(-1, D_in).astype(compute_dtype)
    w1c = jnp.asarray(w1).astype(compute_dtype)
    w2c = jnp.asarray(w2).astype(compute_dtype)

    # ---- M tiling: pad (never fall back to one giant block). ----------------
    M = xc.shape[0]
    if M <= block_m:
        tm = _round_up(max(M, 8), 8)          # tiny problem: one tile, grid=(1,)
    else:
        tm = _round_up(block_m, 256)          # full MXU M rows (also 128-mult for v5e)
    M_pad = _round_up(M, tm)
    if M_pad != M:
        xc = jnp.pad(xc, ((0, M_pad - M), (0, 0)))
    grid_m = M_pad // tm

    # ---- Lane-dense output: pad D_out to a multiple of 128. -----------------
    D_out_p = _round_up(D_out, 128)
    if D_out_p != D_out:
        w2c = jnp.pad(w2c, ((0, 0), (0, D_out_p - D_out)))
        b2 = jnp.pad(b2, ((0, 0), (0, D_out_p - D_out)))

    csize = jnp.dtype(compute_dtype).itemsize
    osize = jnp.dtype(out_dtype).itemsize
    vmem_cap = _physical_vmem_bytes()

    def _resident_footprint():
        w = (D_in * H + H * D_out_p) * csize + (H + D_out_p) * 4
        w *= 1 if single_buffer_weights else 2
        act = 2 * tm * D_in * csize + 2 * tm * D_out_p * osize + tm * H * 4
        return w + act

    # Auto H-tiling when resident weights + the (tm, H) f32 hidden would not
    # comfortably fit VMEM (ViT-L/H scale, especially v7x's 64 MiB).
    if block_h is None and _resident_footprint() > int(0.55 * vmem_cap):
        block_h = _pick_block_h(H)
    if block_h is not None and block_h >= H:
        block_h = None
    if block_h is not None and (H % block_h != 0 or block_h % 128 != 0):
        raise ValueError(f"block_h={block_h} must be a multiple of 128 dividing H={H}")

    if block_h is None:
        # -------- Resident-weight path (whole H in one MXU pass per layer). --
        grid = (grid_m,)
        dims = ("parallel",)
        kernel = functools.partial(_mlp_kernel_resident,
                                   approximate_gelu=approximate_gelu)

        def build(wspec_kwargs):
            in_specs = [
                pl.BlockSpec((tm, D_in), lambda i: (i, 0)),                 # x row tile
                pl.BlockSpec((D_in, H), lambda i: (0, 0), **wspec_kwargs),  # fc1 W (resident)
                pl.BlockSpec((1, H), lambda i: (0, 0), **wspec_kwargs),     # fc1 b
                pl.BlockSpec((H, D_out_p), lambda i: (0, 0), **wspec_kwargs),  # fc2 W (resident)
                pl.BlockSpec((1, D_out_p), lambda i: (0, 0), **wspec_kwargs),  # fc2 b
            ]
            out_specs = pl.BlockSpec((tm, D_out_p), lambda i: (i, 0))
            return in_specs, out_specs, []

        footprint = _resident_footprint()
    else:
        # -------- H-tiled accumulator path (bounded VMEM, streamed weights). -
        th = block_h
        grid = (grid_m, H // th)
        dims = ("parallel", "arbitrary")
        kernel = functools.partial(_mlp_kernel_htiled,
                                   approximate_gelu=approximate_gelu)

        def build(wspec_kwargs):
            del wspec_kwargs  # streamed weights want the default double-buffering
            in_specs = [
                pl.BlockSpec((tm, D_in), lambda i, h: (i, 0)),
                pl.BlockSpec((D_in, th), lambda i, h: (0, h)),
                pl.BlockSpec((1, th), lambda i, h: (0, h)),
                pl.BlockSpec((th, D_out_p), lambda i, h: (h, 0)),
                pl.BlockSpec((1, D_out_p), lambda i, h: (0, 0)),
            ]
            out_specs = pl.BlockSpec((tm, D_out_p), lambda i, h: (i, 0))
            scratch = [pltpu.VMEM((tm, D_out_p), jnp.float32)]
            return in_specs, out_specs, scratch

        footprint = (2 * ((D_in * th + th * D_out_p) * csize + (th + D_out_p) * 4)
                     + 2 * tm * D_in * csize + 2 * tm * D_out_p * osize
                     + tm * th * 4 + tm * D_out_p * 4)

    # Explicit VMEM budget sized from the actual footprint, clamped to physical.
    vmem_limit = int(min(max(footprint * 5 // 4 + (4 << 20), 32 << 20),
                         vmem_cap * 7 // 8))

    def run(wspec_kwargs):
        in_specs, out_specs, scratch = build(wspec_kwargs)
        return pl.pallas_call(
            kernel,
            out_shape=jax.ShapeDtypeStruct((M_pad, D_out_p), out_dtype),
            grid=grid,
            in_specs=in_specs,
            out_specs=out_specs,
            scratch_shapes=scratch,
            compiler_params=pltpu.CompilerParams(
                dimension_semantics=dims,
                vmem_limit_bytes=vmem_limit),
        )(xc, w1c, b1, w2c, b2)

    if block_h is None and single_buffer_weights:
        try:
            # Constant-index weight blocks: double-buffering them is pure VMEM waste.
            out = run(dict(pipeline_mode=pl.Buffered(1)))
        except Exception:
            # pipeline_mode=Buffered(1) not accepted on this jax/libtpu combo:
            # fall back to default (double-buffered) resident weights.
            out = run({})
    else:
        out = run({})

    out = out[:M, :D_out]
    return out.reshape(*lead, D_out)


# ----------------------------------------------------------------------------
# Pure-JAX reference (same math, full f32 precision)
# ----------------------------------------------------------------------------
def mlp_reference(x, w1, b1, w2, b2):
    hi = jax.lax.Precision.HIGHEST
    h = jax.nn.gelu(jnp.dot(x, w1, precision=hi) + b1.reshape(-1),
                    approximate=False)
    return jnp.dot(h, w2, precision=hi) + b2.reshape(-1)


# ----------------------------------------------------------------------------
if __name__ == "__main__":
    # ViT-style MLP at small shapes: in_dim=64, hidden=256, out_dim=64,
    # tokens=16 per image, batch=2  (M = 32 rows).
    B, N, D, HID = 2, 16, 64, 256

    key = jax.random.PRNGKey(0)
    kx, k1, k2, k3, k4 = jax.random.split(key, 5)
    x = jax.random.normal(kx, (B, N, D), jnp.float32)
    w1 = jax.random.normal(k1, (D, HID), jnp.float32) * 0.02
    b1 = jax.random.normal(k2, (HID,), jnp.float32) * 0.02
    w2 = jax.random.normal(k3, (HID, D), jnp.float32) * 0.02
    b2 = jax.random.normal(k4, (D,), jnp.float32) * 0.02

    ref = mlp_reference(x, w1, b1, w2, b2)

    # 1) f32 operands, resident-weight path: faithful to the PyTorch module.
    out_f32 = jax.block_until_ready(
        mlp_forward(x, w1, b1, w2, b2, compute_dtype=jnp.float32))
    assert out_f32.shape == (B, N, D)
    np.testing.assert_allclose(np.asarray(out_f32), np.asarray(ref),
                               rtol=1e-4, atol=1e-4)

    # 2) f32 operands, forced H-tiled accumulator path (the large-H / v7x path).
    out_ht = jax.block_until_ready(
        mlp_forward(x, w1, b1, w2, b2, compute_dtype=jnp.float32, block_h=128))
    np.testing.assert_allclose(np.asarray(out_ht), np.asarray(ref),
                               rtol=1e-4, atol=1e-4)

    # 3) Default bf16-operand path (MXU-native, f32 accumulation) — looser tol.
    out_bf16 = jax.block_until_ready(mlp_forward(x, w1, b1, w2, b2))
    np.testing.assert_allclose(np.asarray(out_bf16), np.asarray(ref),
                               rtol=2e-2, atol=2e-2)

    print("KERNEL_OK")
</pallas_src>

<mosaic_0001>
module attributes {stable_mosaic.version = 11 : i64} {
  func.func @_mlp_kernel_resident(%arg0: i32, %arg1: memref<32x64xf32, #tpu.memory_space<vmem>>, %arg2: memref<64x256xf32, #tpu.memory_space<vmem>>, %arg3: memref<1x256xf32, #tpu.memory_space<vmem>>, %arg4: memref<256x128xf32, #tpu.memory_space<vmem>>, %arg5: memref<1x128xf32, #tpu.memory_space<vmem>>, %arg6: memref<32x128xf32, #tpu.memory_space<vmem>>) attributes {dimension_semantics = [#tpu.dimension_semantics<parallel>], iteration_bounds = array<i64: 1>, scalar_prefetch = 0 : i64, scratch_operands = 0 : i64, tpu.core_type = #tpu.core_type<tc>, window_params = [{transform_indices = @transform_0, window_bounds = array<i64: 32, 64>}, {pipeline_mode = #tpu.pipeline_mode<synchronous>, transform_indices = @transform_1, window_bounds = array<i64: 64, 256>}, {pipeline_mode = #tpu.pipeline_mode<synchronous>, transform_indices = @transform_2, window_bounds = array<i64: 1, 256>}, {pipeline_mode = #tpu.pipeline_mode<synchronous>, transform_indices = @transform_3, window_bounds = array<i64: 256, 128>}, {pipeline_mode = #tpu.pipeline_mode<synchronous>, transform_indices = @transform_4, window_bounds = array<i64: 1, 128>}, {transform_indices = @transform_5, window_bounds = array<i64: 32, 128>}]} {
    %c0 = arith.constant 0 : index
    %c0_0 = arith.constant 0 : index
    %0 = vector.load %arg1[%c0, %c0_0] : memref<32x64xf32, #tpu.memory_space<vmem>>, vector<32x64xf32>
    %c0_1 = arith.constant 0 : index
    %c0_2 = arith.constant 0 : index
    %1 = vector.load %arg2[%c0_1, %c0_2] : memref<64x256xf32, #tpu.memory_space<vmem>>, vector<64x256xf32>
    %cst = arith.constant dense<0.000000e+00> : vector<32x256xf32>
    %2 = tpu.matmul %0, %1, %cst {dimension_numbers = #tpu.dot_dimension_numbers<[1], [0], [0], [1], [0, 0, 1, 1], [], []>, precision = #tpu.contract_precision<fp32>} : vector<32x64xf32>, vector<64x256xf32>, vector<32x256xf32> -> vector<32x256xf32>
    %c0_3 = arith.constant 0 : index
    %c0_4 = arith.constant 0 : index
    %3 = vector.load %arg3[%c0_3, %c0_4] : memref<1x256xf32, #tpu.memory_space<vmem>>, vector<1x256xf32>
    %4 = vector.broadcast %3 : vector<1x256xf32> to vector<32x256xf32>
    %5 = arith.addf %2, %4 : vector<32x256xf32>
    %cst_5 = arith.constant 5.000000e-01 : f32
    %6 = vector.broadcast %cst_5 : f32 to vector<32x256xf32>
    %7 = arith.mulf %6, %5 : vector<32x256xf32>
    %cst_6 = arith.constant 0.707106769 : f32
    %8 = vector.broadcast %cst_6 : f32 to vector<32x256xf32>
    %9 = arith.mulf %5, %8 : vector<32x256xf32>
    %10 = math.absf %9 : vector<32x256xf32>
    %cst_7 = arith.constant 0.327591091 : f32
    %11 = vector.broadcast %cst_7 : f32 to vector<32x256xf32>
    %12 = arith.mulf %11, %10 : vector<32x256xf32>
    %cst_8 = arith.constant 1.000000e+00 : f32
    %13 = vector.broadcast %cst_8 : f32 to vector<32x256xf32>
    %14 = arith.addf %13, %12 : vector<32x256xf32>
    %cst_9 = arith.constant 1.000000e+00 : f32
    %15 = vector.broadcast %cst_9 : f32 to vector<32x256xf32>
    %16 = arith.divf %15, %14 : vector<32x256xf32>
    %cst_10 = arith.constant 1.06140542 : f32
    %17 = vector.broadcast %cst_10 : f32 to vector<32x256xf32>
    %18 = arith.mulf %17, %16 : vector<32x256xf32>
    %cst_11 = arith.constant -1.45315206 : f32
    %19 = vector.broadcast %cst_11 : f32 to vector<32x256xf32>
    %20 = arith.addf %18, %19 : vector<32x256xf32>
    %21 = arith.mulf %20, %16 : vector<32x256xf32>
    %cst_12 = arith.constant 1.42141378 : f32
    %22 = vector.broadcast %cst_12 : f32 to vector<32x256xf32>
    %23 = arith.addf %21, %22 : vector<32x256xf32>
    %24 = arith.mulf %23, %16 : vector<32x256xf32>
    %cst_13 = arith.constant -0.284496725 : f32
    %25 = vector.broadcast %cst_13 : f32 to vector<32x256xf32>
    %26 = arith.addf %24, %25 : vector<32x256xf32>
    %27 = arith.mulf %26, %16 : vector<32x256xf32>
    %cst_14 = arith.constant 0.254829586 : f32
    %28 = vector.broadcast %cst_14 : f32 to vector<32x256xf32>
    %29 = arith.addf %27, %28 : vector<32x256xf32>
    %30 = arith.mulf %29, %16 : vector<32x256xf32>
    %31 = arith.mulf %10, %10 : vector<32x256xf32>
    %cst_15 = arith.constant 0.000000e+00 : f32
    %32 = vector.broadcast %cst_15 : f32 to vector<32x256xf32>
    %33 = arith.subf %32, %31 : vector<32x256xf32>
    %34 = math.exp %33 : vector<32x256xf32>
    %35 = arith.mulf %30, %34 : vector<32x256xf32>
    %cst_16 = arith.constant 1.000000e+00 : f32
    %36 = vector.broadcast %cst_16 : f32 to vector<32x256xf32>
    %37 = arith.subf %36, %35 : vector<32x256xf32>
    %cst_17 = arith.constant 0.000000e+00 : f32
    %38 = vector.broadcast %cst_17 : f32 to vector<32x256xf32>
    %39 = arith.cmpf olt, %9, %38 : vector<32x256xf32>
    %cst_18 = arith.constant 0.000000e+00 : f32
    %40 = vector.broadcast %cst_18 : f32 to vector<32x256xf32>
    %41 = arith.subf %40, %37 : vector<32x256xf32>
    %42 = arith.select %39, %41, %37 : vector<32x256xi1>, vector<32x256xf32>
    %cst_19 = arith.constant 1.000000e+00 : f32
    %43 = vector.broadcast %cst_19 : f32 to vector<32x256xf32>
    %44 = arith.addf %43, %42 : vector<32x256xf32>
    %45 = arith.mulf %7, %44 : vector<32x256xf32>
    %c0_20 = arith.constant 0 : index
    %c0_21 = arith.constant 0 : index
    %46 = vector.load %arg4[%c0_20, %c0_21] : memref<256x128xf32, #tpu.memory_space<vmem>>, vector<256x128xf32>
    %cst_22 = arith.constant dense<0.000000e+00> : vector<32x128xf32>
    %47 = tpu.matmul %45, %46, %cst_22 {dimension_numbers = #tpu.dot_dimension_numbers<[1], [0], [0], [1], [0, 0, 1, 1], [], []>, precision = #tpu.contract_precision<fp32>} : vector<32x256xf32>, vector<256x128xf32>, vector<32x128xf32> -> vector<32x128xf32>
    %c0_23 = arith.constant 0 : index
    %c0_24 = arith.constant 0 : index
    %48 = vector.load %arg5[%c0_23, %c0_24] : memref<1x128xf32, #tpu.memory_space<vmem>>, vector<1x128xf32>
    %49 = vector.broadcast %48 : vector<1x128xf32> to vector<32x128xf32>
    %50 = arith.addf %47, %49 : vector<32x128xf32>
    %c0_25 = arith.constant 0 : index
    %c0_26 = arith.constant 0 : index
    %51 = vector.load %arg6[%c0_25, %c0_26] : memref<32x128xf32, #tpu.memory_space<vmem>>, vector<32x128xf32>
    tpu.vector_store %arg6[%c0_25, %c0_26], %50 {strides = array<i32>} : memref<32x128xf32, #tpu.memory_space<vmem>>, vector<32x128xf32>,
    return
  }
  func.func @transform_0(%arg0: i32) -> (i32, i32) {
    %c0_i32 = arith.constant 0 : i32
    %c0_i32_0 = arith.constant 0 : i32
    return %arg0, %c0_i32 : i32, i32
  }
  func.func @transform_1(%arg0: i32) -> (i32, i32) {
    %c0_i32 = arith.constant 0 : i32
    %c0_i32_0 = arith.constant 0 : i32
    %c0_i32_1 = arith.constant 0 : i32
    return %c0_i32, %c0_i32_0 : i32, i32
  }
  func.func @transform_2(%arg0: i32) -> (i32, i32) {
    %c0_i32 = arith.constant 0 : i32
    %c0_i32_0 = arith.constant 0 : i32
    %c0_i32_1 = arith.constant 0 : i32
    return %c0_i32, %c0_i32_0 : i32, i32
  }
  func.func @transform_3(%arg0: i32) -> (i32, i32) {
    %c0_i32 = arith.constant 0 : i32
    %c0_i32_0 = arith.constant 0 : i32
    %c0_i32_1 = arith.constant 0 : i32
    return %c0_i32, %c0_i32_0 : i32, i32
  }
  func.func @transform_4(%arg0: i32) -> (i32, i32) {
    %c0_i32 = arith.constant 0 : i32
    %c0_i32_0 = arith.constant 0 : i32
    %c0_i32_1 = arith.constant 0 : i32
    return %c0_i32, %c0_i32_0 : i32, i32
  }
  func.func @transform_5(%arg0: i32) -> (i32, i32) {
    %c0_i32 = arith.constant 0 : i32
    %c0_i32_0 = arith.constant 0 : i32
    return %arg0, %c0_i32 : i32, i32
  }
}

module attributes {stable_mosaic.version = 11 : i64} {
  func.func @_mlp_kernel_resident(%arg0: i32, %arg1: memref<32x64xf32, #tpu.memory_space<vmem>>, %arg2: memref<64x256xf32, #tpu.memory_space<vmem>>, %arg3: memref<1x256xf32, #tpu.memory_space<vmem>>, %arg4: memref<256x128xf32, #tpu.memory_space<vmem>>, %arg5: memref<1x128xf32, #tpu.memory_space<vmem>>, %arg6: memref<32x128xf32, #tpu.memory_space<vmem>>) attributes {dimension_semantics = [#tpu.dimension_semantics<parallel>], iteration_bounds = array<i64: 1>, scalar_prefetch = 0 : i64, scratch_operands = 0 : i64, tpu.core_type = #tpu.core_type<tc>, window_params = [{transform_indices = @transform_0, window_bounds = array<i64: 32, 64>}, {pipeline_mode = #tpu.pipeline_mode<synchronous>, transform_indices = @transform_1, window_bounds = array<i64: 64, 256>}, {pipeline_mode = #tpu.pipeline_mode<synchronous>, transform_indices = @transform_2, window_bounds = array<i64: 1, 256>}, {pipeline_mode = #tpu.pipeline_mode<synchronous>, transform_indices = @transform_3, window_bounds = array<i64: 256, 128>}, {pipeline_mode = #tpu.pipeline_mode<synchronous>, transform_indices = @transform_4, window_bounds = array<i64: 1, 128>}, {transform_indices = @transform_5, window_bounds = array<i64: 32, 128>}]} {
    %c0 = arith.constant 0 : index
    %c0_0 = arith.constant 0 : index
    %0 = vector.load %arg1[%c0, %c0_0] : memref<32x64xf32, #tpu.memory_space<vmem>>, vector<32x64xf32>
    %c0_1 = arith.constant 0 : index
    %c0_2 = arith.constant 0 : index
    %1 = vector.load %arg2[%c0_1, %c0_2] : memref<64x256xf32, #tpu.memory_space<vmem>>, vector<64x256xf32>
    %cst = arith.constant dense<0.000000e+00> : vector<32x256xf32>
    %2 = tpu.matmul %0, %1, %cst {dimension_numbers = #tpu.dot_dimension_numbers<[1], [0], [0], [1], [0, 0, 1, 1], [], []>, precision = #tpu.contract_precision<fp32>} : vector<32x64xf32>, vector<64x256xf32>, vector<32x256xf32> -> vector<32x256xf32>
    %c0_3 = arith.constant 0 : index
    %c0_4 = arith.constant 0 : index
    %3 = vector.load %arg3[%c0_3, %c0_4] : memref<1x256xf32, #tpu.memory_space<vmem>>, vector<1x256xf32>
    %4 = vector.broadcast %3 : vector<1x256xf32> to vector<32x256xf32>
    %5 = arith.addf %2, %4 : vector<32x256xf32>
    %cst_5 = arith.constant 5.000000e-01 : f32
    %6 = vector.broadcast %cst_5 : f32 to vector<32x256xf32>
    %7 = arith.mulf %6, %5 : vector<32x256xf32>
    %cst_6 = arith.constant 0.707106769 : f32
    %8 = vector.broadcast %cst_6 : f32 to vector<32x256xf32>
    %9 = arith.mulf %5, %8 : vector<32x256xf32>
    %10 = math.absf %9 : vector<32x256xf32>
    %cst_7 = arith.constant 0.327591091 : f32
    %11 = vector.broadcast %cst_7 : f32 to vector<32x256xf32>
    %12 = arith.mulf %11, %10 : vector<32x256xf32>
    %cst_8 = arith.constant 1.000000e+00 : f32
    %13 = vector.broadcast %cst_8 : f32 to vector<32x256xf32>
    %14 = arith.addf %13, %12 : vector<32x256xf32>
    %cst_9 = arith.constant 1.000000e+00 : f32
    %15 = vector.broadcast %cst_9 : f32 to vector<32x256xf32>
    %16 = arith.divf %15, %14 : vector<32x256xf32>
    %cst_10 = arith.constant 1.06140542 : f32
    %17 = vector.broadcast %cst_10 : f32 to vector<32x256xf32>
    %18 = arith.mulf %17, %16 : vector<32x256xf32>
    %cst_11 = arith.constant -1.45315206 : f32
    %19 = vector.broadcast %cst_11 : f32 to vector<32x256xf32>
    %20 = arith.addf %18, %19 : vector<32x256xf32>
    %21 = arith.mulf %20, %16 : vector<32x256xf32>
    %cst_12 = arith.constant 1.42141378 : f32
    %22 = vector.broadcast %cst_12 : f32 to vector<32x256xf32>
    %23 = arith.addf %21, %22 : vector<32x256xf32>
    %24 = arith.mulf %23, %16 : vector<32x256xf32>
    %cst_13 = arith.constant -0.284496725 : f32
    %25 = vector.broadcast %cst_13 : f32 to vector<32x256xf32>
    %26 = arith.addf %24, %25 : vector<32x256xf32>
    %27 = arith.mulf %26, %16 : vector<32x256xf32>
    %cst_14 = arith.constant 0.254829586 : f32
    %28 = vector.broadcast %cst_14 : f32 to vector<32x256xf32>
    %29 = arith.addf %27, %28 : vector<32x256xf32>
    %30 = arith.mulf %29, %16 : vector<32x256xf32>
    %31 = arith.mulf %10, %10 : vector<32x256xf32>
    %cst_15 = arith.constant 0.000000e+00 : f32
    %32 = vector.broadcast %cst_15 : f32 to vector<32x256xf32>
    %33 = arith.subf %32, %31 : vector<32x256xf32>
    %34 = math.exp %33 : vector<32x256xf32>
    %35 = arith.mulf %30, %34 : vector<32x256xf32>
    %cst_16 = arith.constant 1.000000e+00 : f32
    %36 = vector.broadcast %cst_16 : f32 to vector<32x256xf32>
    %37 = arith.subf %36, %35 : vector<32x256xf32>
    %cst_17 = arith.constant 0.000000e+00 : f32
    %38 = vector.broadcast %cst_17 : f32 to vector<32x256xf32>
    %39 = arith.cmpf olt, %9, %38 : vector<32x256xf32>
    %cst_18 = arith.constant 0.000000e+00 : f32
    %40 = vector.broadcast %cst_18 : f32 to vector<32x256xf32>
    %41 = arith.subf %40, %37 : vector<32x256xf32>
    %42 = arith.select %39, %41, %37 : vector<32x256xi1>, vector<32x256xf32>
    %cst_19 = arith.constant 1.000000e+00 : f32
    %43 = vector.broadcast %cst_19 : f32 to vector<32x256xf32>
    %44 = arith.addf %43, %42 : vector<32x256xf32>
    %45 = arith.mulf %7, %44 : vector<32x256xf32>
    %c0_20 = arith.constant 0 : index
    %c0_21 = arith.constant 0 : index
    %46 = vector.load %arg4[%c0_20, %c0_21] : memref<256x128xf32, #tpu.memory_space<vmem>>, vector<256x128xf32>
    %cst_22 = arith.constant dense<0.000000e+00> : vector<32x128xf32>
    %47 = tpu.matmul %45, %46, %cst_22 {dimension_numbers = #tpu.dot_dimension_numbers<[1], [0], [0], [1], [0, 0, 1, 1], [], []>, precision = #tpu.contract_precision<fp32>} : vector<32x256xf32>, vector<256x128xf32>, vector<32x128xf32> -> vector<32x128xf32>
    %c0_23 = arith.constant 0 : index
    %c0_24 = arith.constant 0 : index
    %48 = vector.load %arg5[%c0_23, %c0_24] : memref<1x128xf32, #tpu.memory_space<vmem>>, vector<1x128xf32>
    %49 = vector.broadcast %48 : vector<1x128xf32> to vector<32x128xf32>
    %50 = arith.addf %47, %49 : vector<32x128xf32>
    %c0_25 = arith.constant 0 : index
    %c0_26 = arith.constant 0 : index
    %51 = vector.load %arg6[%c0_25, %c0_26] : memref<32x128xf32, #tpu.memory_space<vmem>>, vector<32x128xf32>
    tpu.vector_store %arg6[%c0_25, %c0_26], %50 {strides = array<i32>} : memref<32x128xf32, #tpu.memory_space<vmem>>, vector<32x128xf32>,
    return
  }
  func.func @transform_0(%arg0: i32) -> (i32, i32) {
    %c0_i32 = arith.constant 0 : i32
    %c0_i32_0 = arith.constant 0 : i32
    return %arg0, %c0_i32 : i32, i32
  }
  func.func @transform_1(%arg0: i32) -> (i32, i32) {
    %c0_i32 = arith.constant 0 : i32
    %c0_i32_0 = arith.constant 0 : i32
    %c0_i32_1 = arith.constant 0 : i32
    return %c0_i32, %c0_i32_0 : i32, i32
  }
  func.func @transform_2(%arg0: i32) -> (i32, i32) {
    %c0_i32 = arith.constant 0 : i32
    %c0_i32_0 = arith.constant 0 : i32
    %c0_i32_1 = arith.constant 0 : i32
    return %c0_i32, %c0_i32_0 : i32, i32
  }
  func.func @transform_3(%arg0: i32) -> (i32, i32) {
    %c0_i32 = arith.constant 0 : i32
    %c0_i32_0 = arith.constant 0 : i32
    %c0_i32_1 = arith.constant 0 : i32
    return %c0_i32, %c0_i32_0 : i32, i32
  }
  func.func @transform_4(%arg0: i32) -> (i32, i32) {
    %c0_i32 = arith.constant 0 : i32
    %c0_i32_0 = arith.constant 0 : i32
    %c0_i32_1 = arith.constant 0 : i32
    return %c0_i32, %c0_i32_0 : i32, i32
  }
  func.func @transform_5(%arg0: i32) -> (i32, i32) {
    %c0_i32 = arith.constant 0 : i32
    %c0_i32_0 = arith.constant 0 : i32
    return %arg0, %c0_i32 : i32, i32
  }
}

</mosaic_0001>

<llo_original>
// kernel: tpu_custom_call.1
$region0: #{tpu_custom_call.1}
  #allocation0 [shape = 'u32[]', space=smem, size = 0x4, offset = 0x4, fixed_abs, tag = 'smem constant byte address 0x4 - core index']
  #allocation1 [shape = 'u32[144,128]{1,0:T(1,128)}', space=vmem, size = 0x12000, scoped, tag = 'internal scratch']
  %s0 = inlined_call_operand.hbm [shape: f32[32,64], index: 0, kind: input, shape index: {}]
  %s1 = inlined_call_operand.hbm [shape: f32[64,256], index: 1, kind: input, shape index: {}]
  %s2 = inlined_call_operand.vmem [shape: f32[1,256], index: 2, kind: input, shape index: {}]
  %s3 = inlined_call_operand.hbm [shape: f32[256,128], index: 3, kind: input, shape index: {}]
  %s4 = inlined_call_operand.vmem [shape: f32[1,128], index: 4, kind: input, shape index: {}]
  %s5 = inlined_call_operand.hbm [shape: f32[32,128], index: 5, kind: output, shape index: {}]
  %s6 = sld [smem:[#allocation0]]
  $region42: #{tpu_custom_call.1} parent=0
    _
  %s8 = ssub.s32 1, %s6
  %s9 = scalar_select 0, %s8, %s6
  $region1: #{tpu_custom_call.1} parent=0
    #allocation2 [shape = 'u8[16384]{0}', space=vmem, size = 0x4000, scoped, tag = 'input window, operand 0, single buffered']
    #allocation3 [shape = 's32[1]{0}', space=sflag, size = 0x4, scoped, tag = 'scoped memory for tpu_custom_call.1']
    #allocation4 [shape = 's32[1]{0}', space=sflag, size = 0x4, scoped, tag = 'scoped memory for tpu_custom_call.1']
    #allocation5 [shape = 'u8[65536]{0}', space=vmem, size = 0x10000, scoped, tag = 'input window, operand 1, single buffered']
    #allocation6 [shape = 's32[1]{0}', space=sflag, size = 0x4, scoped, tag = 'scoped memory for tpu_custom_call.1']
    #allocation7 [shape = 'u8[131072]{0}', space=vmem, size = 0x20000, scoped, tag = 'input window, operand 3, single buffered']
    #allocation8 [shape = 'u8[16384]{0}', space=vmem, size = 0x4000, scoped, tag = 'output window, operand 0, single buffered']
    %10 = vsyncpa [#allocation3], 0
    %11 = vsyncpa [#allocation6], 0
    %12 = vsyncpa [#allocation4], 0
    // Predicated region
    $region2: #{tpu_custom_call.1} parent=1 // pred_check
      _
    $region3: #{tpu_custom_call.1} parent=1 // pred_check_branch
      %14 = sbr.rel (0) target = $region5
    $region4: #{tpu_custom_call.1} parent=1 // pred_region
      %s16 = ssub.s32 512, 512
      %17 = vsyncadd [#allocation3], %s16
      %s18 = sshll.u32 [#allocation2], 4
      %s19 = int_to_ptr.vmem [resolvable:$true] %s18
      %24 = dma.hbm_to_vmem [thread:$0]  %s0, 512, %s19, [#allocation3], 128, 128, 8
    $region5: #{tpu_custom_call.1} parent=1 // pred_fallthru
      _
    // Predicated region
    $region6: #{tpu_custom_call.1} parent=1 // pred_check
      _
    $region7: #{tpu_custom_call.1} parent=1 // pred_check_branch
      %26 = sbr.rel (0) target = $region9
    $region8: #{tpu_custom_call.1} parent=1 // pred_region
      %s28 = ssub.s32 2048, 2048
      %29 = vsyncadd [#allocation6], %s28
      %s30 = sshll.u32 [#allocation5], 4
      %s31 = int_to_ptr.vmem [resolvable:$true] %s30
      %36 = dma.hbm_to_vmem [thread:$0]  %s1, 2048, %s31, [#allocation6], 256, 256, 16
    $region9: #{tpu_custom_call.1} parent=1 // pred_fallthru
      _
    // Predicated region
    $region10: #{tpu_custom_call.1} parent=1 // pred_check
      _
    $region11: #{tpu_custom_call.1} parent=1 // pred_check_branch
      %38 = sbr.rel (0) target = $region13
    $region12: #{tpu_custom_call.1} parent=1 // pred_region
      _
    $region13: #{tpu_custom_call.1} parent=1 // pred_fallthru
      _
    // Predicated region
    $region14: #{tpu_custom_call.1} parent=1 // pred_check
      _
    $region15: #{tpu_custom_call.1} parent=1 // pred_check_branch
      %40 = sbr.rel (0) target = $region17
    $region16: #{tpu_custom_call.1} parent=1 // pred_region
      %s42 = ssub.s32 4096, 4096
      %43 = vsyncadd [#allocation6], %s42
      %s44 = sshll.u32 [#allocation7], 4
      %s45 = int_to_ptr.vmem [resolvable:$true] %s44
      %50 = dma.hbm_to_vmem [thread:$0]  %s3, 4096, %s45, [#allocation6], 128, 128, 8
    $region17: #{tpu_custom_call.1} parent=1 // pred_fallthru
      _
    // Predicated region
    $region18: #{tpu_custom_call.1} parent=1 // pred_check
      _
    $region19: #{tpu_custom_call.1} parent=1 // pred_check_branch
      %52 = sbr.rel (0) target = $region21
    $region20: #{tpu_custom_call.1} parent=1 // pred_region
      _
    $region21: #{tpu_custom_call.1} parent=1 // pred_fallthru
      _
    // Predicated region
    $region22: #{tpu_custom_call.1} parent=1 // pred_check
      _
    $region23: #{tpu_custom_call.1} parent=1 // pred_check_branch
      %54 = sbr.rel (0) target = $region25
    $region24: #{tpu_custom_call.1} parent=1 // pred_region
      %55 = dma.done [#allocation3], 512
    $region25: #{tpu_custom_call.1} parent=1 // pred_fallthru
      _
    // Predicated region
    $region26: #{tpu_custom_call.1} parent=1 // pred_check
      _
    $region27: #{tpu_custom_call.1} parent=1 // pred_check_branch
      %57 = sbr.rel (0) target = $region29
    $region28: #{tpu_custom_call.1} parent=1 // pred_region
      %58 = dma.done [#allocation6], 2048
    $region29: #{tpu_custom_call.1} parent=1 // pred_fallthru
      _
    // Predicated region
    $region30: #{tpu_custom_call.1} parent=1 // pred_check
      _
    $region31: #{tpu_custom_call.1} parent=1 // pred_check_branch
      %60 = sbr.rel (0) target = $region33
    $region32: #{tpu_custom_call.1} parent=1 // pred_region
      %61 = dma.done [#allocation6], 4096
    $region33: #{tpu_custom_call.1} parent=1 // pred_fallthru
      _
    %v62 = vld [vmem:[#allocation2] sm:$0xff]
    %v63 = vld [vmem:[#allocation2 + $0x8] sm:$0xff]
    %v64 = vld [vmem:[#allocation2 + $0x10] sm:$0xff]
    %v65 = vld [vmem:[#allocation2 + $0x18] sm:$0xff]
    %v66 = vld [vmem:[#allocation5] sm:$0xff]
    %v67 = vld [vmem:[#allocation5 + $0x8] sm:$0xff]
    %v68 = vld [vmem:[#allocation5 + $0x10] sm:$0xff]
    %v69 = vld [vmem:[#allocation5 + $0x18] sm:$0xff]
    %v70 = vld [vmem:[#allocation5 + $0x20] sm:$0xff]
    %v71 = vld [vmem:[#allocation5 + $0x28] sm:$0xff]
    %v72 = vld [vmem:[#allocation5 + $0x30] sm:$0xff]
    %v73 = vld [vmem:[#allocation5 + $0x38] sm:$0xff]
    %v74 = vld [vmem:[#allocation5 + $0x40] sm:$0xff]
    %v75 = vld [vmem:[#allocation5 + $0x48] sm:$0xff]
    %v76 = vld [vmem:[#allocation5 + $0x50] sm:$0xff]
    %v77 = vld [vmem:[#allocation5 + $0x58] sm:$0xff]
    %v78 = vld [vmem:[#allocation5 + $0x60] sm:$0xff]
    %v79 = vld [vmem:[#allocation5 + $0x68] sm:$0xff]
    %v80 = vld [vmem:[#allocation5 + $0x70] sm:$0xff]
    %v81 = vld [vmem:[#allocation5 + $0x78] sm:$0xff]
    %v82 = vld [vmem:[%s2] sm:$0x3]
    %v84 = vlaneseq
    %v85 = vshrl.u32 %v84, 7
    %v86 = vsub.s32 0, %v85
    %v87 = vrot.slane %v82, %v86
    %v88 = vlaneseq
    %v89 = vshrl.u32 %v88, 7
    %v90 = vsub.s32 1, %v89
    %v91 = vrot.slane %v82, %v90
    %vm94 = vcmask 523264
    %v96 = vsel %vm94, %v62, 0
    %v99 = vsel %vm94, %v63, 0
    %v102 = vsel %vm94, %v64, 0
    %v105 = vsel %vm94, %v65, 0
    %v107 = vand.u32 %v67, 4294901760
    %108 = vmatprep.subr.mxu0 %v107
    %v109 = vand.u32 %v66, 4294901760
    %110 = vmatpush1.msra.mxu0 %v109
    %v111 = vand.u32 %v69, 4294901760
    %112 = vmatprep.subr.mxu0 %v111
    %v113 = vand.u32 %v68, 4294901760
    %114 = vmatpush1.msra.mxu0 %v113
    %v115 = vand.u32 %v71, 4294901760
    %116 = vmatprep.subr.mxu0 %v115
    %v117 = vand.u32 %v70, 4294901760
    %118 = vmatpush1.msra.mxu0 %v117
    %v119 = vand.u32 %v73, 4294901760
    %120 = vmatprep.subr.mxu0 %v119
    %v121 = vand.u32 %v72, 4294901760
    %122 = vmatpush1.msra.mxu0 %v121
    %v123 = vand.u32 %v75, 4294901760
    %124 = vmatprep.subr.mxu0 %v123
    %v125 = vand.u32 %v74, 4294901760
    %126 = vmatpush1.msra.mxu0 %v125
    %v127 = vand.u32 %v77, 4294901760
    %128 = vmatprep.subr.mxu0 %v127
    %v129 = vand.u32 %v76, 4294901760
    %130 = vmatpush1.msra.mxu0 %v129
    %v131 = vand.u32 %v79, 4294901760
    %132 = vmatprep.subr.mxu0 %v131
    %v133 = vand.u32 %v78, 4294901760
    %134 = vmatpush1.msra.mxu0 %v133
    %v135 = vand.u32 %v81, 4294901760
    %136 = vmatprep.subr.mxu0 %v135
    %v137 = vand.u32 %v80, 4294901760
    %138 = vmatpush1.msra.mxu0 %v137
    %139 = vmatprep.subr.mxu0 0.0
    %140 = vmatpush1.msra.mxu0 0.0
    %141 = vmatprep.subr.mxu0 0.0
    %142 = vmatpush1.msra.mxu0 0.0
    %143 = vmatprep.subr.mxu0 0.0
    %144 = vmatpush1.msra.mxu0 0.0
    %145 = vmatprep.subr.mxu0 0.0
    %146 = vmatpush1.msra.mxu0 0.0
    %147 = vmatprep.subr.mxu0 0.0
    %148 = vmatpush1.msra.mxu0 0.0
    %149 = vmatprep.subr.mxu0 0.0
    %150 = vmatpush1.msra.mxu0 0.0
    %151 = vmatprep.subr.mxu0 0.0
    %152 = vmatpush1.msra.mxu0 0.0
    %153 = vmatprep.subr.mxu0 0.0
    %154 = vmatpush1.msra.mxu0 0.0
    %155 = vmatprep.subr.mxu0 0.0
    %156 = vmatpush1.msra.mxu0 0.0
    %157 = vmatprep.subr.mxu0 0.0
    %158 = vmatpush1.msra.mxu0 0.0
    %159 = vmatprep.subr.mxu0 0.0
    %160 = vmatpush1.msra.mxu0 0.0
    %161 = vmatprep.subr.mxu0 0.0
    %162 = vmatpush1.msra.mxu0 0.0
    %163 = vmatprep.subr.mxu0 0.0
    %164 = vmatpush1.msra.mxu0 0.0
    %165 = vmatprep.subr.mxu0 0.0
    %166 = vmatpush1.msra.mxu0 0.0
    %167 = vmatprep.subr.mxu0 0.0
    %168 = vmatpush1.msra.mxu0 0.0
    %169 = vmatprep.subr.mxu0 0.0
    %170 = vmatpush1.msra.mxu0 0.0
    %171 = vmatprep.subr.mxu0 0.0
    %172 = vmatpush1.msra.mxu0 0.0
    %173 = vmatprep.subr.mxu0 0.0
    %174 = vmatpush1.msra.mxu0 0.0
    %175 = vmatprep.subr.mxu0 0.0
    %176 = vmatpush1.msra.mxu0 0.0
    %177 = vmatprep.subr.mxu0 0.0
    %178 = vmatpush1.msra.mxu0 0.0
    %179 = vmatprep.subr.mxu0 0.0
    %180 = vmatpush1.msra.mxu0 0.0
    %181 = vmatprep.subr.mxu0 0.0
    %182 = vmatpush1.msra.mxu0 0.0
    %183 = vmatprep.subr.mxu0 0.0
    %184 = vmatpush1.msra.mxu0 0.0
    %185 = vmatprep.subr.mxu0 0.0
    %186 = vmatpush1.msra.mxu0 0.0
    %187 = vmatprep.mubr.f32.mxu0 0.0
    %v188 = vand.u32 %v96, 4294901760
    %v189 = vsub.f32 %v96, %v188
    %v190 = vand.u32 %v189, 4294901760
    %v191 = vsub.f32 %v189, %v190
    %v192 = vand.u32 %v191, 4294901760
    %193 = vmatmul.mubr.f32.gmra.mrb[0].mxu0 %v192
    %v194 = vpop.f32.mrb[0].mxu0
    %v195 = vadd.f32 %v87, %v194
    %v196 = vpop.f32.mrb[0].mxu0
    %v197 = vadd.f32 %v91, %v196
    %198 = vmatprep.mubr.f32.mxu0 0.0
    %v199 = vand.u32 %v99, 4294901760
    %v200 = vsub.f32 %v99, %v199
    %v201 = vand.u32 %v200, 4294901760
    %v202 = vsub.f32 %v200, %v201
    %v203 = vand.u32 %v202, 4294901760
    %204 = vmatmul.mubr.f32.gmra.mrb[0].mxu0 %v203
    %v205 = vpop.f32.mrb[0].mxu0
    %v206 = vadd.f32 %v87, %v205
    %v207 = vpop.f32.mrb[0].mxu0
    %v208 = vadd.f32 %v91, %v207
    %209 = vmatprep.mubr.f32.mxu0 0.0
    %v210 = vand.u32 %v102, 4294901760
    %v211 = vsub.f32 %v102, %v210
    %v212 = vand.u32 %v211, 4294901760
    %v213 = vsub.f32 %v211, %v212
    %v214 = vand.u32 %v213, 4294901760
    %215 = vmatmul.mubr.f32.gmra.mrb[0].mxu0 %v214
    %v216 = vpop.f32.mrb[0].mxu0
    %v217 = vadd.f32 %v87, %v216
    %v218 = vpop.f32.mrb[0].mxu0
    %v219 = vadd.f32 %v91, %v218
    %220 = vmatprep.mubr.f32.mxu0 0.0
    %v221 = vand.u32 %v105, 4294901760
    %v222 = vsub.f32 %v105, %v221
    %v223 = vand.u32 %v222, 4294901760
    %v224 = vsub.f32 %v222, %v223
    %v225 = vand.u32 %v224, 4294901760
    %226 = vmatmul.mubr.f32.gmra.mrb[0].mxu0 %v225
    %v227 = vpop.f32.mrb[0].mxu0
    %v228 = vadd.f32 %v87, %v227
    %v229 = vpop.f32.mrb[0].mxu0
    %v230 = vadd.f32 %v91, %v229
    %231 = vdwg.mxu0
    %v232 = vand.u32 %v67, 4294901760
    %v233 = vsub.f32 %v67, %v232
    %v234 = vand.u32 %v233, 4294901760
    %v235 = vsub.f32 %v233, %v234
    %v236 = vand.u32 %v235, 4294901760
    %237 = vmatprep.subr.mxu0 %v236
    %v238 = vand.u32 %v66, 4294901760
    %v239 = vsub.f32 %v66, %v238
    %v240 = vand.u32 %v239, 4294901760
    %v241 = vsub.f32 %v239, %v240
    %v242 = vand.u32 %v241, 4294901760
    %243 = vmatpush1.msra.mxu0 %v242
    %v244 = vand.u32 %v69, 4294901760
    %v245 = vsub.f32 %v69, %v244
    %v246 = vand.u32 %v245, 4294901760
    %v247 = vsub.f32 %v245, %v246
    %v248 = vand.u32 %v247, 4294901760
    %249 = vmatprep.subr.mxu0 %v248
    %v250 = vand.u32 %v68, 4294901760
    %v251 = vsub.f32 %v68, %v250
    %v252 = vand.u32 %v251, 4294901760
    %v253 = vsub.f32 %v251, %v252
    %v254 = vand.u32 %v253, 4294901760
    %255 = vmatpush1.msra.mxu0 %v254
    %v256 = vand.u32 %v71, 4294901760
    %v257 = vsub.f32 %v71, %v256
    %v258 = vand.u32 %v257, 4294901760
    %v259 = vsub.f32 %v257, %v258
    %v260 = vand.u32 %v259, 4294901760
    %261 = vmatprep.subr.mxu0 %v260
    %v262 = vand.u32 %v70, 4294901760
    %v263 = vsub.f32 %v70, %v262
    %v264 = vand.u32 %v263, 4294901760
    %v265 = vsub.f32 %v263, %v264
    %v266 = vand.u32 %v265, 4294901760
    %267 = vmatpush1.msra.mxu0 %v266
    %v268 = vand.u32 %v73, 4294901760
    %v269 = vsub.f32 %v73, %v268
    %v270 = vand.u32 %v269, 4294901760
    %v271 = vsub.f32 %v269, %v270
    %v272 = vand.u32 %v271, 4294901760
    %273 = vmatprep.subr.mxu0 %v272
    %v274 = vand.u32 %v72, 4294901760
    %v275 = vsub.f32 %v72, %v274
    %v276 = vand.u32 %v275, 4294901760
    %v277 = vsub.f32 %v275, %v276
    %v278 = vand.u32 %v277, 4294901760
    %279 = vmatpush1.msra.mxu0 %v278
    %v280 = vand.u32 %v75, 4294901760
    %v281 = vsub.f32 %v75, %v280
    %v282 = vand.u32 %v281, 4294901760
    %v283 = vsub.f32 %v281, %v282
    %v284 = vand.u32 %v283, 4294901760
    %285 = vmatprep.subr.mxu0 %v284
    %v286 = vand.u32 %v74, 4294901760
    %v287 = vsub.f32 %v74, %v286
    %v288 = vand.u32 %v287, 4294901760
    %v289 = vsub.f32 %v287, %v288
    %v290 = vand.u32 %v289, 4294901760
    %291 = vmatpush1.msra.mxu0 %v290
    %v292 = vand.u32 %v77, 4294901760
    %v293 = vsub.f32 %v77, %v292
    %v294 = vand.u32 %v293, 4294901760
    %v295 = vsub.f32 %v293, %v294
    %v296 = vand.u32 %v295, 4294901760
    %297 = vmatprep.subr.mxu0 %v296
    %v298 = vand.u32 %v76, 4294901760
    %v299 = vsub.f32 %v76, %v298
    %v300 = vand.u32 %v299, 4294901760
    %v301 = vsub.f32 %v299, %v300
    %v302 = vand.u32 %v301, 4294901760
    %303 = vmatpush1.msra.mxu0 %v302
    %v304 = vand.u32 %v79, 4294901760
    %v305 = vsub.f32 %v79, %v304
    %v306 = vand.u32 %v305, 4294901760
    %v307 = vsub.f32 %v305, %v306
    %v308 = vand.u32 %v307, 4294901760
    %309 = vmatprep.subr.mxu0 %v308
    %v310 = vand.u32 %v78, 4294901760
    %v311 = vsub.f32 %v78, %v310
    %v312 = vand.u32 %v311, 4294901760
    %v313 = vsub.f32 %v311, %v312
    %v314 = vand.u32 %v313, 4294901760
    %315 = vmatpush1.msra.mxu0 %v314
    %v316 = vand.u32 %v81, 4294901760
    %v317 = vsub.f32 %v81, %v316
    %v318 = vand.u32 %v317, 4294901760
    %v319 = vsub.f32 %v317, %v318
    %v320 = vand.u32 %v319, 4294901760
    %321 = vmatprep.subr.mxu0 %v320
    %v322 = vand.u32 %v80, 4294901760
    %v323 = vsub.f32 %v80, %v322
    %v324 = vand.u32 %v323, 4294901760
    %v325 = vsub.f32 %v323, %v324
    %v326 = vand.u32 %v325, 4294901760
    %327 = vmatpush1.msra.mxu0 %v326
    %328 = vmatprep.subr.mxu0 0.0
    %329 = vmatpush1.msra.mxu0 0.0
    %330 = vmatprep.subr.mxu0 0.0
    %331 = vmatpush1.msra.mxu0 0.0
    %332 = vmatprep.subr.mxu0 0.0
    %333 = vmatpush1.msra.mxu0 0.0
    %334 = vmatprep.subr.mxu0 0.0
    %335 = vmatpush1.msra.mxu0 0.0
    %336 = vmatprep.subr.mxu0 0.0
    %337 = vmatpush1.msra.mxu0 0.0
    %338 = vmatprep.subr.mxu0 0.0
    %339 = vmatpush1.msra.mxu0 0.0
    %340 = vmatprep.subr.mxu0 0.0
    %341 = vmatpush1.msra.mxu0 0.0
    %342 = vmatprep.subr.mxu0 0.0
    %343 = vmatpush1.msra.mxu0 0.0
    %344 = vmatprep.subr.mxu0 0.0
    %345 = vmatpush1.msra.mxu0 0.0
    %346 = vmatprep.subr.mxu0 0.0
    %347 = vmatpush1.msra.mxu0 0.0
    %348 = vmatprep.subr.mxu0 0.0
    %349 = vmatpush1.msra.mxu0 0.0
    %350 = vmatprep.subr.mxu0 0.0
    %351 = vmatpush1.msra.mxu0 0.0
    %352 = vmatprep.subr.mxu0 0.0
    %353 = vmatpush1.msra.mxu0 0.0
    %354 = vmatprep.subr.mxu0 0.0
    %355 = vmatpush1.msra.mxu0 0.0
    %356 = vmatprep.subr.mxu0 0.0
    %357 = vmatpush1.msra.mxu0 0.0
    %358 = vmatprep.subr.mxu0 0.0
    %359 = vmatpush1.msra.mxu0 0.0
    %360 = vmatprep.subr.mxu0 0.0
    %361 = vmatpush1.msra.mxu0 0.0
    %362 = vmatprep.subr.mxu0 0.0
    %363 = vmatpush1.msra.mxu0 0.0
    %364 = vmatprep.subr.mxu0 0.0
    %365 = vmatpush1.msra.mxu0 0.0
    %366 = vmatprep.subr.mxu0 0.0
    %367 = vmatpush1.msra.mxu0 0.0
    %368 = vmatprep.subr.mxu0 0.0
    %369 = vmatpush1.msra.mxu0 0.0
    %370 = vmatprep.subr.mxu0 0.0
    %371 = vmatpush1.msra.mxu0 0.0
    %372 = vmatprep.subr.mxu0 0.0
    %373 = vmatpush1.msra.mxu0 0.0
    %374 = vmatprep.subr.mxu0 0.0
    %375 = vmatpush1.msra.mxu0 0.0
    %376 = vmatprep.mubr.f32.mxu0 0.0
    %v377 = vand.u32 %v96, 4294901760
    %378 = vmatmul.mubr.f32.gmra.mrb[0].mxu0 %v377
    %v379 = vpop.f32.mrb[0].mxu0
    %v380 = vadd.f32 %v195, %v379
    %v381 = vpop.f32.mrb[0].mxu0
    %v382 = vadd.f32 %v197, %v381
    %383 = vmatprep.mubr.f32.mxu0 0.0
    %v384 = vand.u32 %v99, 4294901760
    %385 = vmatmul.mubr.f32.gmra.mrb[0].mxu0 %v384
    %v386 = vpop.f32.mrb[0].mxu0
    %v387 = vadd.f32 %v206, %v386
    %v388 = vpop.f32.mrb[0].mxu0
    %v389 = vadd.f32 %v208, %v388
    %390 = vmatprep.mubr.f32.mxu0 0.0
    %v391 = vand.u32 %v102, 4294901760
    %392 = vmatmul.mubr.f32.gmra.mrb[0].mxu0 %v391
    %v393 = vpop.f32.mrb[0].mxu0
    %v394 = vadd.f32 %v217, %v393
    %v395 = vpop.f32.mrb[0].mxu0
    %v396 = vadd.f32 %v219, %v395
    %397 = vmatprep.mubr.f32.mxu0 0.0
    %v398 = vand.u32 %v105, 4294901760
    %399 = vmatmul.mubr.f32.gmra.mrb[0].mxu0 %v398
    %v400 = vpop.f32.mrb[0].mxu0
    %v401 = vadd.f32 %v228, %v400
    %v402 = vpop.f32.mrb[0].mxu0
    %v403 = vadd.f32 %v230, %v402
    %404 = vdwg.mxu0
    %v405 = vand.u32 %v67, 4294901760
    %v406 = vsub.f32 %v67, %v405
    %407 = vmatprep.subr.mxu0 %v406
    %v408 = vand.u32 %v66, 4294901760
    %v409 = vsub.f32 %v66, %v408
    %410 = vmatpush1.msra.mxu0 %v409
    %v411 = vand.u32 %v69, 4294901760
    %v412 = vsub.f32 %v69, %v411
    %413 = vmatprep.subr.mxu0 %v412
    %v414 = vand.u32 %v68, 4294901760
    %v415 = vsub.f32 %v68, %v414
    %416 = vmatpush1.msra.mxu0 %v415
    %v417 = vand.u32 %v71, 4294901760
    %v418 = vsub.f32 %v71, %v417
    %419 = vmatprep.subr.mxu0 %v418
    %v420 = vand.u32 %v70, 4294901760
    %v421 = vsub.f32 %v70, %v420
    %422 = vmatpush1.msra.mxu0 %v421
    %v423 = vand.u32 %v73, 4294901760
    %v424 = vsub.f32 %v73, %v423
    %425 = vmatprep.subr.mxu0 %v424
    %v426 = vand.u32 %v72, 4294901760
    %v427 = vsub.f32 %v72, %v426
    %428 = vmatpush1.msra.mxu0 %v427
    %v429 = vand.u32 %v75, 4294901760
    %v430 = vsub.f32 %v75, %v429
    %431 = vmatprep.subr.mxu0 %v430
    %v432 = vand.u32 %v74, 4294901760
    %v433 = vsub.f32 %v74, %v432
    %434 = vmatpush1.msra.mxu0 %v433
    %v435 = vand.u32 %v77, 4294901760
    %v436 = vsub.f32 %v77, %v435
    %437 = vmatprep.subr.mxu0 %v436
    %v438 = vand.u32 %v76, 4294901760
    %v439 = vsub.f32 %v76, %v438
    %440 = vmatpush1.msra.mxu0 %v439
    %v441 = vand.u32 %v79, 4294901760
    %v442 = vsub.f32 %v79, %v441
    %443 = vmatprep.subr.mxu0 %v442
    %v444 = vand.u32 %v78, 4294901760
    %v445 = vsub.f32 %v78, %v444
    %446 = vmatpush1.msra.mxu0 %v445
    %v447 = vand.u32 %v81, 4294901760
    %v448 = vsub.f32 %v81, %v447
    %449 = vmatprep.subr.mxu0 %v448
    %v450 = vand.u32 %v80, 4294901760
    %v451 = vsub.f32 %v80, %v450
    %452 = vmatpush1.msra.mxu0 %v451
    %453 = vmatprep.subr.mxu0 0.0
    %454 = vmatpush1.msra.mxu0 0.0
    %455 = vmatprep.subr.mxu0 0.0
    %456 = vmatpush1.msra.mxu0 0.0
    %457 = vmatprep.subr.mxu0 0.0
    %458 = vmatpush1.msra.mxu0 0.0
    %459 = vmatprep.subr.mxu0 0.0
    %460 = vmatpush1.msra.mxu0 0.0
    %461 = vmatprep.subr.mxu0 0.0
    %462 = vmatpush1.msra.mxu0 0.0
    %463 = vmatprep.subr.mxu0 0.0
    %464 = vmatpush1.msra.mxu0 0.0
    %465 = vmatprep.subr.mxu0 0.0
    %466 = vmatpush1.msra.mxu0 0.0
    %467 = vmatprep.subr.mxu0 0.0
    %468 = vmatpush1.msra.mxu0 0.0
    %469 = vmatprep.subr.mxu0 0.0
    %470 = vmatpush1.msra.mxu0 0.0
    %471 = vmatprep.subr.mxu0 0.0
    %472 = vmatpush1.msra.mxu0 0.0
    %473 = vmatprep.subr.mxu0 0.0
    %474 = vmatpush1.msra.mxu0 0.0
    %475 = vmatprep.subr.mxu0 0.0
    %476 = vmatpush1.msra.mxu0 0.0
    %477 = vmatprep.subr.mxu0 0.0
    %478 = vmatpush1.msra.mxu0 0.0
    %479 = vmatprep.subr.mxu0 0.0
    %480 = vmatpush1.msra.mxu0 0.0
    %481 = vmatprep.subr.mxu0 0.0
    %482 = vmatpush1.msra.mxu0 0.0
    %483 = vmatprep.subr.mxu0 0.0
    %484 = vmatpush1.msra.mxu0 0.0
    %485 = vmatprep.subr.mxu0 0.0
    %486 = vmatpush1.msra.mxu0 0.0
    %487 = vmatprep.subr.mxu0 0.0
    %488 = vmatpush1.msra.mxu0 0.0
    %489 = vmatprep.subr.mxu0 0.0
    %490 = vmatpush1.msra.mxu0 0.0
    %491 = vmatprep.subr.mxu0 0.0
    %492 = vmatpush1.msra.mxu0 0.0
    %493 = vmatprep.subr.mxu0 0.0
    %494 = vmatpush1.msra.mxu0 0.0
    %495 = vmatprep.subr.mxu0 0.0
    %496 = vmatpush1.msra.mxu0 0.0
    %497 = vmatprep.subr.mxu0 0.0
    %498 = vmatpush1.msra.mxu0 0.0
    %499 = vmatprep.subr.mxu0 0.0
    %500 = vmatpush1.msra.mxu0 0.0
    %501 = vmatprep.mubr.f32.mxu0 0.0
    %v502 = vand.u32 %v96, 4294901760
    %v503 = vsub.f32 %v96, %v502
    %504 = vmatmul.mubr.f32.gmra.mrb[0].mxu0 %v503
    %v505 = vpop.f32.mrb[0].mxu0
    %v506 = vadd.f32 %v380, %v505
    %v507 = vpop.f32.mrb[0].mxu0
    %v508 = vadd.f32 %v382, %v507
    %509 = vmatprep.mubr.f32.mxu0 0.0
    %v510 = vand.u32 %v99, 4294901760
    %v511 = vsub.f32 %v99, %v510
    %512 = vmatmul.mubr.f32.gmra.mrb[0].mxu0 %v511
    %v513 = vpop.f32.mrb[0].mxu0
    %v514 = vadd.f32 %v387, %v513
    %v515 = vpop.f32.mrb[0].mxu0
    %v516 = vadd.f32 %v389, %v515
    %517 = vmatprep.mubr.f32.mxu0 0.0
    %v518 = vand.u32 %v102, 4294901760
    %v519 = vsub.f32 %v102, %v518
    %520 = vmatmul.mubr.f32.gmra.mrb[0].mxu0 %v519
    %v521 = vpop.f32.mrb[0].mxu0
    %v522 = vadd.f32 %v394, %v521
    %v523 = vpop.f32.mrb[0].mxu0
    %v524 = vadd.f32 %v396, %v523
    %525 = vmatprep.mubr.f32.mxu0 0.0
    %v526 = vand.u32 %v105, 4294901760
    %v527 = vsub.f32 %v105, %v526
    %528 = vmatmul.mubr.f32.gmra.mrb[0].mxu0 %v527
    %v529 = vpop.f32.mrb[0].mxu0
    %v530 = vadd.f32 %v401, %v529
    %v531 = vpop.f32.mrb[0].mxu0
    %v532 = vadd.f32 %v403, %v531
    %533 = vdwg.mxu0
    %v534 = vand.u32 %v67, 4294901760
    %535 = vmatprep.subr.mxu0 %v534
    %v536 = vand.u32 %v66, 4294901760
    %537 = vmatpush1.msra.mxu0 %v536
    %v538 = vand.u32 %v69, 4294901760
    %539 = vmatprep.subr.mxu0 %v538
    %v540 = vand.u32 %v68, 4294901760
    %541 = vmatpush1.msra.mxu0 %v540
    %v542 = vand.u32 %v71, 4294901760
    %543 = vmatprep.subr.mxu0 %v542
    %v544 = vand.u32 %v70, 4294901760
    %545 = vmatpush1.msra.mxu0 %v544
    %v546 = vand.u32 %v73, 4294901760
    %547 = vmatprep.subr.mxu0 %v546
    %v548 = vand.u32 %v72, 4294901760
    %549 = vmatpush1.msra.mxu0 %v548
    %v550 = vand.u32 %v75, 4294901760
    %551 = vmatprep.subr.mxu0 %v550
    %v552 = vand.u32 %v74, 4294901760
    %553 = vmatpush1.msra.mxu0 %v552
    %v554 = vand.u32 %v77, 4294901760
    %555 = vmatprep.subr.mxu0 %v554
    %v556 = vand.u32 %v76, 4294901760
    %557 = vmatpush1.msra.mxu0 %v556
    %v558 = vand.u32 %v79, 4294901760
    %559 = vmatprep.subr.mxu0 %v558
    %v560 = vand.u32 %v78, 4294901760
    %561 = vmatpush1.msra.mxu0 %v560
    %v562 = vand.u32 %v81, 4294901760
    %563 = vmatprep.subr.mxu0 %v562
    %v564 = vand.u32 %v80, 4294901760
    %565 = vmatpush1.msra.mxu0 %v564
    %566 = vmatprep.subr.mxu0 0.0
    %567 = vmatpush1.msra.mxu0 0.0
    %568 = vmatprep.subr.mxu0 0.0
    %569 = vmatpush1.msra.mxu0 0.0
    %570 = vmatprep.subr.mxu0 0.0
    %571 = vmatpush1.msra.mxu0 0.0
    %572 = vmatprep.subr.mxu0 0.0
    %573 = vmatpush1.msra.mxu0 0.0
    %574 = vmatprep.subr.mxu0 0.0
    %575 = vmatpush1.msra.mxu0 0.0
    %576 = vmatprep.subr.mxu0 0.0
    %577 = vmatpush1.msra.mxu0 0.0
    %578 = vmatprep.subr.mxu0 0.0
    %579 = vmatpush1.msra.mxu0 0.0
    %580 = vmatprep.subr.mxu0 0.0
    %581 = vmatpush1.msra.mxu0 0.0
    %582 = vmatprep.subr.mxu0 0.0
    %583 = vmatpush1.msra.mxu0 0.0
    %584 = vmatprep.subr.mxu0 0.0
    %585 = vmatpush1.msra.mxu0 0.0
    %586 = vmatprep.subr.mxu0 0.0
    %587 = vmatpush1.msra.mxu0 0.0
    %588 = vmatprep.subr.mxu0 0.0
    %589 = vmatpush1.msra.mxu0 0.0
    %590 = vmatprep.subr.mxu0 0.0
    %591 = vmatpush1.msra.mxu0 0.0
    %592 = vmatprep.subr.mxu0 0.0
    %593 = vmatpush1.msra.mxu0 0.0
    %594 = vmatprep.subr.mxu0 0.0
    %595 = vmatpush1.msra.mxu0 0.0
    %596 = vmatprep.subr.mxu0 0.0
    %597 = vmatpush1.msra.mxu0 0.0
    %598 = vmatprep.subr.mxu0 0.0
    %599 = vmatpush1.msra.mxu0 0.0
    %600 = vmatprep.subr.mxu0 0.0
    %601 = vmatpush1.msra.mxu0 0.0
    %602 = vmatprep.subr.mxu0 0.0
    %603 = vmatpush1.msra.mxu0 0.0
    %604 = vmatprep.subr.mxu0 0.0
    %605 = vmatpush1.msra.mxu0 0.0
    %606 = vmatprep.subr.mxu0 0.0
    %607 = vmatpush1.msra.mxu0 0.0
    %608 = vmatprep.subr.mxu0 0.0
    %609 = vmatpush1.msra.mxu0 0.0
    %610 = vmatprep.subr.mxu0 0.0
    %611 = vmatpush1.msra.mxu0 0.0
    %612 = vmatprep.subr.mxu0 0.0
    %613 = vmatpush1.msra.mxu0 0.0
    %614 = vmatprep.mubr.f32.mxu0 0.0
    %v615 = vand.u32 %v96, 4294901760
    %v616 = vsub.f32 %v96, %v615
    %v617 = vand.u32 %v616, 4294901760
    %618 = vmatmul.mubr.f32.gmra.mrb[0].mxu0 %v617
    %v619 = vpop.f32.mrb[0].mxu0
    %v620 = vadd.f32 %v506, %v619
    %v621 = vpop.f32.mrb[0].mxu0
    %v622 = vadd.f32 %v508, %v621
    %623 = vmatprep.mubr.f32.mxu0 0.0
    %v624 = vand.u32 %v99, 4294901760
    %v625 = vsub.f32 %v99, %v624
    %v626 = vand.u32 %v625, 4294901760
    %627 = vmatmul.mubr.f32.gmra.mrb[0].mxu0 %v626
    %v628 = vpop.f32.mrb[0].mxu0
    %v629 = vadd.f32 %v514, %v628
    %v630 = vpop.f32.mrb[0].mxu0
    %v631 = vadd.f32 %v516, %v630
    %632 = vmatprep.mubr.f32.mxu0 0.0
    %v633 = vand.u32 %v102, 4294901760
    %v634 = vsub.f32 %v102, %v633
    %v635 = vand.u32 %v634, 4294901760
    %636 = vmatmul.mubr.f32.gmra.mrb[0].mxu0 %v635
    %v637 = vpop.f32.mrb[0].mxu0
    %v638 = vadd.f32 %v522, %v637
    %v639 = vpop.f32.mrb[0].mxu0
    %v640 = vadd.f32 %v524, %v639
    %641 = vmatprep.mubr.f32.mxu0 0.0
    %v642 = vand.u32 %v105, 4294901760
    %v643 = vsub.f32 %v105, %v642
    %v644 = vand.u32 %v643, 4294901760
    %645 = vmatmul.mubr.f32.gmra.mrb[0].mxu0 %v644
    %v646 = vpop.f32.mrb[0].mxu0
    %v647 = vadd.f32 %v530, %v646
    %v648 = vpop.f32.mrb[0].mxu0
    %v649 = vadd.f32 %v532, %v648
    %650 = vdwg.mxu0
    %v651 = vand.u32 %v67, 4294901760
    %v652 = vsub.f32 %v67, %v651
    %v653 = vand.u32 %v652, 4294901760
    %654 = vmatprep.subr.mxu0 %v653
    %v655 = vand.u32 %v66, 4294901760
    %v656 = vsub.f32 %v66, %v655
    %v657 = vand.u32 %v656, 4294901760
    %658 = vmatpush1.msra.mxu0 %v657
    %v659 = vand.u32 %v69, 4294901760
    %v660 = vsub.f32 %v69, %v659
    %v661 = vand.u32 %v660, 4294901760
    %662 = vmatprep.subr.mxu0 %v661
    %v663 = vand.u32 %v68, 4294901760
    %v664 = vsub.f32 %v68, %v663
    %v665 = vand.u32 %v664, 4294901760
    %666 = vmatpush1.msra.mxu0 %v665
    %v667 = vand.u32 %v71, 4294901760
    %v668 = vsub.f32 %v71, %v667
    %v669 = vand.u32 %v668, 4294901760
    %670 = vmatprep.subr.mxu0 %v669
    %v671 = vand.u32 %v70, 4294901760
    %v672 = vsub.f32 %v70, %v671
    %v673 = vand.u32 %v672, 4294901760
    %674 = vmatpush1.msra.mxu0 %v673
    %v675 = vand.u32 %v73, 4294901760
    %v676 = vsub.f32 %v73, %v675
    %v677 = vand.u32 %v676, 4294901760
    %678 = vmatprep.subr.mxu0 %v677
    %v679 = vand.u32 %v72, 4294901760
    %v680 = vsub.f32 %v72, %v679
    %v681 = vand.u32 %v680, 4294901760
    %682 = vmatpush1.msra.mxu0 %v681
    %v683 = vand.u32 %v75, 4294901760
    %v684 = vsub.f32 %v75, %v683
    %v685 = vand.u32 %v684, 4294901760
    %686 = vmatprep.subr.mxu0 %v685
    %v687 = vand.u32 %v74, 4294901760
    %v688 = vsub.f32 %v74, %v687
    %v689 = vand.u32 %v688, 4294901760
    %690 = vmatpush1.msra.mxu0 %v689
    %v691 = vand.u32 %v77, 4294901760
    %v692 = vsub.f32 %v77, %v691
    %v693 = vand.u32 %v692, 4294901760
    %694 = vmatprep.subr.mxu0 %v693
    %v695 = vand.u32 %v76, 4294901760
    %v696 = vsub.f32 %v76, %v695
    %v697 = vand.u32 %v696, 4294901760
    %698 = vmatpush1.msra.mxu0 %v697
    %v699 = vand.u32 %v79, 4294901760
    %v700 = vsub.f32 %v79, %v699
    %v701 = vand.u32 %v700, 4294901760
    %702 = vmatprep.subr.mxu0 %v701
    %v703 = vand.u32 %v78, 4294901760
    %v704 = vsub.f32 %v78, %v703
    %v705 = vand.u32 %v704, 4294901760
    %706 = vmatpush1.msra.mxu0 %v705
    %v707 = vand.u32 %v81, 4294901760
    %v708 = vsub.f32 %v81, %v707
    %v709 = vand.u32 %v708, 4294901760
    %710 = vmatprep.subr.mxu0 %v709
    %v711 = vand.u32 %v80, 4294901760
    %v712 = vsub.f32 %v80, %v711
    %v713 = vand.u32 %v712, 4294901760
    %714 = vmatpush1.msra.mxu0 %v713
    %715 = vmatprep.subr.mxu0 0.0
    %716 = vmatpush1.msra.mxu0 0.0
    %717 = vmatprep.subr.mxu0 0.0
    %718 = vmatpush1.msra.mxu0 0.0
    %719 = vmatprep.subr.mxu0 0.0
    %720 = vmatpush1.msra.mxu0 0.0
    %721 = vmatprep.subr.mxu0 0.0
    %722 = vmatpush1.msra.mxu0 0.0
    %723 = vmatprep.subr.mxu0 0.0
    %724 = vmatpush1.msra.mxu0 0.0
    %725 = vmatprep.subr.mxu0 0.0
    %726 = vmatpush1.msra.mxu0 0.0
    %727 = vmatprep.subr.mxu0 0.0
    %728 = vmatpush1.msra.mxu0 0.0
    %729 = vmatprep.subr.mxu0 0.0
    %730 = vmatpush1.msra.mxu0 0.0
    %731 = vmatprep.subr.mxu0 0.0
    %732 = vmatpush1.msra.mxu0 0.0
    %733 = vmatprep.subr.mxu0 0.0
    %734 = vmatpush1.msra.mxu0 0.0
    %735 = vmatprep.subr.mxu0 0.0
    %736 = vmatpush1.msra.mxu0 0.0
    %737 = vmatprep.subr.mxu0 0.0
    %738 = vmatpush1.msra.mxu0 0.0
    %739 = vmatprep.subr.mxu0 0.0
    %740 = vmatpush1.msra.mxu0 0.0
    %741 = vmatprep.subr.mxu0 0.0
    %742 = vmatpush1.msra.mxu0 0.0
    %743 = vmatprep.subr.mxu0 0.0
    %744 = vmatpush1.msra.mxu0 0.0
    %745 = vmatprep.subr.mxu0 0.0
    %746 = vmatpush1.msra.mxu0 0.0
    %747 = vmatprep.subr.mxu0 0.0
    %748 = vmatpush1.msra.mxu0 0.0
    %749 = vmatprep.subr.mxu0 0.0
    %750 = vmatpush1.msra.mxu0 0.0
    %751 = vmatprep.subr.mxu0 0.0
    %752 = vmatpush1.msra.mxu0 0.0
    %753 = vmatprep.subr.mxu0 0.0
    %754 = vmatpush1.msra.mxu0 0.0
    %755 = vmatprep.subr.mxu0 0.0
    %756 = vmatpush1.msra.mxu0 0.0
    %757 = vmatprep.subr.mxu0 0.0
    %758 = vmatpush1.msra.mxu0 0.0
    %759 = vmatprep.subr.mxu0 0.0
    %760 = vmatpush1.msra.mxu0 0.0
    %761 = vmatprep.subr.mxu0 0.0
    %762 = vmatpush1.msra.mxu0 0.0
    %763 = vmatprep.mubr.f32.mxu0 0.0
    %v764 = vand.u32 %v96, 4294901760
    %765 = vmatmul.mubr.f32.gmra.mrb[0].mxu0 %v764
    %v766 = vpop.f32.mrb[0].mxu0
    %v767 = vadd.f32 %v620, %v766
    %v768 = vpop.f32.mrb[0].mxu0
    %v769 = vadd.f32 %v622, %v768
    %770 = vmatprep.mubr.f32.mxu0 0.0
    %v771 = vand.u32 %v99, 4294901760
    %772 = vmatmul.mubr.f32.gmra.mrb[0].mxu0 %v771
    %v773 = vpop.f32.mrb[0].mxu0
    %v774 = vadd.f32 %v629, %v773
    %v775 = vpop.f32.mrb[0].mxu0
    %v776 = vadd.f32 %v631, %v775
    %777 = vmatprep.mubr.f32.mxu0 0.0
    %v778 = vand.u32 %v102, 4294901760
    %779 = vmatmul.mubr.f32.gmra.mrb[0].mxu0 %v778
    %v780 = vpop.f32.mrb[0].mxu0
    %v781 = vadd.f32 %v638, %v780
    %v782 = vpop.f32.mrb[0].mxu0
    %v783 = vadd.f32 %v640, %v782
    %784 = vmatprep.mubr.f32.mxu0 0.0
    %v785 = vand.u32 %v105, 4294901760
    %786 = vmatmul.mubr.f32.gmra.mrb[0].mxu0 %v785
    %v787 = vpop.f32.mrb[0].mxu0
    %v788 = vadd.f32 %v647, %v787
    %v789 = vpop.f32.mrb[0].mxu0
    %v790 = vadd.f32 %v649, %v789
    %791 = vdwg.mxu0
    %v792 = vand.u32 %v67, 4294901760
    %793 = vmatprep.subr.mxu0 %v792
    %v794 = vand.u32 %v66, 4294901760
    %795 = vmatpush1.msra.mxu0 %v794
    %v796 = vand.u32 %v69, 4294901760
    %797 = vmatprep.subr.mxu0 %v796
    %v798 = vand.u32 %v68, 4294901760
    %799 = vmatpush1.msra.mxu0 %v798
    %v800 = vand.u32 %v71, 4294901760
    %801 = vmatprep.subr.mxu0 %v800
    %v802 = vand.u32 %v70, 4294901760
    %803 = vmatpush1.msra.mxu0 %v802
    %v804 = vand.u32 %v73, 4294901760
    %805 = vmatprep.subr.mxu0 %v804
    %v806 = vand.u32 %v72, 4294901760
    %807 = vmatpush1.msra.mxu0 %v806
    %v808 = vand.u32 %v75, 4294901760
    %809 = vmatprep.subr.mxu0 %v808
    %v810 = vand.u32 %v74, 4294901760
    %811 = vmatpush1.msra.mxu0 %v810
    %v812 = vand.u32 %v77, 4294901760
    %813 = vmatprep.subr.mxu0 %v812
    %v814 = vand.u32 %v76, 4294901760
    %815 = vmatpush1.msra.mxu0 %v814
    %v816 = vand.u32 %v79, 4294901760
    %817 = vmatprep.subr.mxu0 %v816
    %v818 = vand.u32 %v78, 4294901760
    %819 = vmatpush1.msra.mxu0 %v818
    %v820 = vand.u32 %v81, 4294901760
    %821 = vmatprep.subr.mxu0 %v820
    %v822 = vand.u32 %v80, 4294901760
    %823 = vmatpush1.msra.mxu0 %v822
    %824 = vmatprep.subr.mxu0 0.0
    %825 = vmatpush1.msra.mxu0 0.0
    %826 = vmatprep.subr.mxu0 0.0
    %827 = vmatpush1.msra.mxu0 0.0
    %828 = vmatprep.subr.mxu0 0.0
    %829 = vmatpush1.msra.mxu0 0.0
    %830 = vmatprep.subr.mxu0 0.0
    %831 = vmatpush1.msra.mxu0 0.0
    %832 = vmatprep.subr.mxu0 0.0
    %833 = vmatpush1.msra.mxu0 0.0
    %834 = vmatprep.subr.mxu0 0.0
    %835 = vmatpush1.msra.mxu0 0.0
    %836 = vmatprep.subr.mxu0 0.0
    %837 = vmatpush1.msra.mxu0 0.0
    %838 = vmatprep.subr.mxu0 0.0
    %839 = vmatpush1.msra.mxu0 0.0
    %840 = vmatprep.subr.mxu0 0.0
    %841 = vmatpush1.msra.mxu0 0.0
    %842 = vmatprep.subr.mxu0 0.0
    %843 = vmatpush1.msra.mxu0 0.0
    %844 = vmatprep.subr.mxu0 0.0
    %845 = vmatpush1.msra.mxu0 0.0
    %846 = vmatprep.subr.mxu0 0.0
    %847 = vmatpush1.msra.mxu0 0.0
    %848 = vmatprep.subr.mxu0 0.0
    %849 = vmatpush1.msra.mxu0 0.0
    %850 = vmatprep.subr.mxu0 0.0
    %851 = vmatpush1.msra.mxu0 0.0
    %852 = vmatprep.subr.mxu0 0.0
    %853 = vmatpush1.msra.mxu0 0.0
    %854 = vmatprep.subr.mxu0 0.0
    %855 = vmatpush1.msra.mxu0 0.0
    %856 = vmatprep.subr.mxu0 0.0
    %857 = vmatpush1.msra.mxu0 0.0
    %858 = vmatprep.subr.mxu0 0.0
    %859 = vmatpush1.msra.mxu0 0.0
    %860 = vmatprep.subr.mxu0 0.0
    %861 = vmatpush1.msra.mxu0 0.0
    %862 = vmatprep.subr.mxu0 0.0
    %863 = vmatpush1.msra.mxu0 0.0
    %864 = vmatprep.subr.mxu0 0.0
    %865 = vmatpush1.msra.mxu0 0.0
    %866 = vmatprep.subr.mxu0 0.0
    %867 = vmatpush1.msra.mxu0 0.0
    %868 = vmatprep.subr.mxu0 0.0
    %869 = vmatpush1.msra.mxu0 0.0
    %870 = vmatprep.subr.mxu0 0.0
    %871 = vmatpush1.msra.mxu0 0.0
    %872 = vmatprep.mubr.f32.mxu0 0.0
    %v873 = vand.u32 %v96, 4294901760
    %874 = vmatmul.mubr.f32.gmra.mrb[0].mxu0 %v873
    %v875 = vpop.f32.mrb[0].mxu0
    %v876 = vadd.f32 %v767, %v875
    %v877 = vpop.f32.mrb[0].mxu0
    %v878 = vadd.f32 %v769, %v877
    %879 = vmatprep.mubr.f32.mxu0 0.0
    %v880 = vand.u32 %v99, 4294901760
    %881 = vmatmul.mubr.f32.gmra.mrb[0].mxu0 %v880
    %v882 = vpop.f32.mrb[0].mxu0
    %v883 = vadd.f32 %v774, %v882
    %v884 = vpop.f32.mrb[0].mxu0
    %v885 = vadd.f32 %v776, %v884
    %886 = vmatprep.mubr.f32.mxu0 0.0
    %v887 = vand.u32 %v102, 4294901760
    %888 = vmatmul.mubr.f32.gmra.mrb[0].mxu0 %v887
    %v889 = vpop.f32.mrb[0].mxu0
    %v890 = vadd.f32 %v781, %v889
    %v891 = vpop.f32.mrb[0].mxu0
    %v892 = vadd.f32 %v783, %v891
    %893 = vmatprep.mubr.f32.mxu0 0.0
    %v894 = vand.u32 %v105, 4294901760
    %895 = vmatmul.mubr.f32.gmra.mrb[0].mxu0 %v894
    %v896 = vpop.f32.mrb[0].mxu0
    %v897 = vadd.f32 %v788, %v896
    %v898 = vpop.f32.mrb[0].mxu0
    %v899 = vadd.f32 %v790, %v898
    %900 = vdwg.mxu0
    %v901 = vmul.f32 %v876, 0.5
    %v902 = vmul.f32 %v878, 0.5
    %v903 = vmul.f32 %v883, 0.5
    %v904 = vmul.f32 %v885, 0.5
    %v905 = vmul.f32 %v890, 0.5
    %v906 = vmul.f32 %v892, 0.5
    %v907 = vmul.f32 %v897, 0.5
    %v908 = vmul.f32 %v899, 0.5
    %v909 = vmul.f32 %v876, 0.70710677
    %v910 = vmul.f32 %v878, 0.70710677
    %v911 = vmul.f32 %v883, 0.70710677
    %v912 = vmul.f32 %v885, 0.70710677
    %v913 = vmul.f32 %v890, 0.70710677
    %v914 = vmul.f32 %v892, 0.70710677
    %v915 = vmul.f32 %v897, 0.70710677
    %v916 = vmul.f32 %v899, 0.70710677
    %v917 = vand.u32 2147483647, %v909
    %v918 = vand.u32 2147483647, %v910
    %v919 = vand.u32 2147483647, %v911
    %v920 = vand.u32 2147483647, %v912
    %v921 = vand.u32 2147483647, %v913
    %v922 = vand.u32 2147483647, %v914
    %v923 = vand.u32 2147483647, %v915
    %v924 = vand.u32 2147483647, %v916
    %v925 = vmul.f32 %v917, 0.3275911
    %v926 = vmul.f32 %v918, 0.3275911
    %v927 = vmul.f32 %v919, 0.3275911
    %v928 = vmul.f32 %v920, 0.3275911
    %v929 = vmul.f32 %v921, 0.3275911
    %v930 = vmul.f32 %v922, 0.3275911
    %v931 = vmul.f32 %v923, 0.3275911
    %v932 = vmul.f32 %v924, 0.3275911
    %v933 = vadd.f32 %v925, 1.0
    %v934 = vadd.f32 %v926, 1.0
    %v935 = vadd.f32 %v927, 1.0
    %v936 = vadd.f32 %v928, 1.0
    %v937 = vadd.f32 %v929, 1.0
    %v938 = vadd.f32 %v930, 1.0
    %v939 = vadd.f32 %v931, 1.0
    %v940 = vadd.f32 %v932, 1.0
    %v941 = vrcp.pop %v933
    %v942 = vmul.f32 1.0, %v941
    %v943 = vrcp.pop %v934
    %v944 = vmul.f32 1.0, %v943
    %v945 = vrcp.pop %v935
    %v946 = vmul.f32 1.0, %v945
    %v947 = vrcp.pop %v936
    %v948 = vmul.f32 1.0, %v947
    %v949 = vrcp.pop %v937
    %v950 = vmul.f32 1.0, %v949
    %v951 = vrcp.pop %v938
    %v952 = vmul.f32 1.0, %v951
    %v953 = vrcp.pop %v939
    %v954 = vmul.f32 1.0, %v953
    %v955 = vrcp.pop %v940
    %v956 = vmul.f32 1.0, %v955
    %v957 = vmul.f32 %v942, 1.0614054
    %v958 = vmul.f32 %v944, 1.0614054
    %v959 = vmul.f32 %v946, 1.0614054
    %v960 = vmul.f32 %v948, 1.0614054
    %v961 = vmul.f32 %v950, 1.0614054
    %v962 = vmul.f32 %v952, 1.0614054
    %v963 = vmul.f32 %v954, 1.0614054
    %v964 = vmul.f32 %v956, 1.0614054
    %v965 = vadd.f32 %v957, -1.4531521
    %v966 = vadd.f32 %v958, -1.4531521
    %v967 = vadd.f32 %v959, -1.4531521
    %v968 = vadd.f32 %v960, -1.4531521
    %v969 = vadd.f32 %v961, -1.4531521
    %v970 = vadd.f32 %v962, -1.4531521
    %v971 = vadd.f32 %v963, -1.4531521
    %v972 = vadd.f32 %v964, -1.4531521
    %v973 = vmul.f32 %v965, %v942
    %v974 = vmul.f32 %v966, %v944
    %v975 = vmul.f32 %v967, %v946
    %v976 = vmul.f32 %v968, %v948
    %v977 = vmul.f32 %v969, %v950
    %v978 = vmul.f32 %v970, %v952
    %v979 = vmul.f32 %v971, %v954
    %v980 = vmul.f32 %v972, %v956
    %v981 = vadd.f32 %v973, 1.4214138
    %v982 = vadd.f32 %v974, 1.4214138
    %v983 = vadd.f32 %v975, 1.4214138
    %v984 = vadd.f32 %v976, 1.4214138
    %v985 = vadd.f32 %v977, 1.4214138
    %v986 = vadd.f32 %v978, 1.4214138
    %v987 = vadd.f32 %v979, 1.4214138
    %v988 = vadd.f32 %v980, 1.4214138
    %v989 = vmul.f32 %v981, %v942
    %v990 = vmul.f32 %v982, %v944
    %v991 = vmul.f32 %v983, %v946
    %v992 = vmul.f32 %v984, %v948
    %v993 = vmul.f32 %v985, %v950
    %v994 = vmul.f32 %v986, %v952
    %v995 = vmul.f32 %v987, %v954
    %v996 = vmul.f32 %v988, %v956
    %v997 = vadd.f32 %v989, -0.28449672
    %v998 = vadd.f32 %v990, -0.28449672
    %v999 = vadd.f32 %v991, -0.28449672
    %v1000 = vadd.f32 %v992, -0.28449672
    %v1001 = vadd.f32 %v993, -0.28449672
    %v1002 = vadd.f32 %v994, -0.28449672
    %v1003 = vadd.f32 %v995, -0.28449672
    %v1004 = vadd.f32 %v996, -0.28449672
    %v1005 = vmul.f32 %v997, %v942
    %v1006 = vmul.f32 %v998, %v944
    %v1007 = vmul.f32 %v999, %v946
    %v1008 = vmul.f32 %v1000, %v948
    %v1009 = vmul.f32 %v1001, %v950
    %v1010 = vmul.f32 %v1002, %v952
    %v1011 = vmul.f32 %v1003, %v954
    %v1012 = vmul.f32 %v1004, %v956
    %v1013 = vadd.f32 %v1005, 0.2548296
    %v1014 = vadd.f32 %v1006, 0.2548296
    %v1015 = vadd.f32 %v1007, 0.2548296
    %v1016 = vadd.f32 %v1008, 0.2548296
    %v1017 = vadd.f32 %v1009, 0.2548296
    %v1018 = vadd.f32 %v1010, 0.2548296
    %v1019 = vadd.f32 %v1011, 0.2548296
    %v1020 = vadd.f32 %v1012, 0.2548296
    %v1021 = vmul.f32 %v1013, %v942
    %v1022 = vmul.f32 %v1014, %v944
    %v1023 = vmul.f32 %v1015, %v946
    %v1024 = vmul.f32 %v1016, %v948
    %v1025 = vmul.f32 %v1017, %v950
    %v1026 = vmul.f32 %v1018, %v952
    %v1027 = vmul.f32 %v1019, %v954
    %v1028 = vmul.f32 %v1020, %v956
    %v1029 = vmul.f32 %v917, %v917
    %v1030 = vmul.f32 %v918, %v918
    %v1031 = vmul.f32 %v919, %v919
    %v1032 = vmul.f32 %v920, %v920
    %v1033 = vmul.f32 %v921, %v921
    %v1034 = vmul.f32 %v922, %v922
    %v1035 = vmul.f32 %v923, %v923
    %v1036 = vmul.f32 %v924, %v924
    %v1037 = vsub.f32 0.0, %v1029
    %v1038 = vsub.f32 0.0, %v1030
    %v1039 = vsub.f32 0.0, %v1031
    %v1040 = vsub.f32 0.0, %v1032
    %v1041 = vsub.f32 0.0, %v1033
    %v1042 = vsub.f32 0.0, %v1034
    %v1043 = vsub.f32 0.0, %v1035
    %v1044 = vsub.f32 0.0, %v1036
    %v1045 = vmul.f32 %v1037, 1.442695
    %v1046 = vpow.pop %v1045
    %v1047 = vmul.f32 %v1038, 1.442695
    %v1048 = vpow.pop %v1047
    %v1049 = vmul.f32 %v1039, 1.442695
    %v1050 = vpow.pop %v1049
    %v1051 = vmul.f32 %v1040, 1.442695
    %v1052 = vpow.pop %v1051
    %v1053 = vmul.f32 %v1041, 1.442695
    %v1054 = vpow.pop %v1053
    %v1055 = vmul.f32 %v1042, 1.442695
    %v1056 = vpow.pop %v1055
    %v1057 = vmul.f32 %v1043, 1.442695
    %v1058 = vpow.pop %v1057
    %v1059 = vmul.f32 %v1044, 1.442695
    %v1060 = vpow.pop %v1059
    %v1061 = vmul.f32 %v1021, %v1046
    %v1062 = vmul.f32 %v1022, %v1048
    %v1063 = vmul.f32 %v1023, %v1050
    %v1064 = vmul.f32 %v1024, %v1052
    %v1065 = vmul.f32 %v1025, %v1054
    %v1066 = vmul.f32 %v1026, %v1056
    %v1067 = vmul.f32 %v1027, %v1058
    %v1068 = vmul.f32 %v1028, %v1060
    %v1069 = vsub.f32 1.0, %v1061
    %v1070 = vsub.f32 1.0, %v1062
    %v1071 = vsub.f32 1.0, %v1063
    %v1072 = vsub.f32 1.0, %v1064
    %v1073 = vsub.f32 1.0, %v1065
    %v1074 = vsub.f32 1.0, %v1066
    %v1075 = vsub.f32 1.0, %v1067
    %v1076 = vsub.f32 1.0, %v1068
    %vm1077 = vcmp.lt.f32.partialorder %v909, 0.0
    %vm1078 = vcmp.lt.f32.partialorder %v910, 0.0
    %vm1079 = vcmp.lt.f32.partialorder %v911, 0.0
    %vm1080 = vcmp.lt.f32.partialorder %v912, 0.0
    %vm1081 = vcmp.lt.f32.partialorder %v913, 0.0
    %vm1082 = vcmp.lt.f32.partialorder %v914, 0.0
    %vm1083 = vcmp.lt.f32.partialorder %v915, 0.0
    %vm1084 = vcmp.lt.f32.partialorder %v916, 0.0
    %v1085 = vsub.f32 0.0, %v1069
    %v1086 = vsub.f32 0.0, %v1070
    %v1087 = vsub.f32 0.0, %v1071
    %v1088 = vsub.f32 0.0, %v1072
    %v1089 = vsub.f32 0.0, %v1073
    %v1090 = vsub.f32 0.0, %v1074
    %v1091 = vsub.f32 0.0, %v1075
    %v1092 = vsub.f32 0.0, %v1076
    %v1093 = vsel %vm1077, %v1085, %v1069
    %v1094 = vsel %vm1078, %v1086, %v1070
    %v1095 = vsel %vm1079, %v1087, %v1071
    %v1096 = vsel %vm1080, %v1088, %v1072
    %v1097 = vsel %vm1081, %v1089, %v1073
    %v1098 = vsel %vm1082, %v1090, %v1074
    %v1099 = vsel %vm1083, %v1091, %v1075
    %v1100 = vsel %vm1084, %v1092, %v1076
    %v1101 = vadd.f32 %v1093, 1.0
    %v1102 = vadd.f32 %v1094, 1.0
    %v1103 = vadd.f32 %v1095, 1.0
    %v1104 = vadd.f32 %v1096, 1.0
    %v1105 = vadd.f32 %v1097, 1.0
    %v1106 = vadd.f32 %v1098, 1.0
    %v1107 = vadd.f32 %v1099, 1.0
    %v1108 = vadd.f32 %v1100, 1.0
    %v1109 = vmul.f32 %v901, %v1101
    %v1110 = vmul.f32 %v902, %v1102
    %v1111 = vmul.f32 %v903, %v1103
    %v1112 = vmul.f32 %v904, %v1104
    %v1113 = vmul.f32 %v905, %v1105
    %v1114 = vmul.f32 %v906, %v1106
    %v1115 = vmul.f32 %v907, %v1107
    %v1116 = vmul.f32 %v908, %v1108
    %v1117 = vld [vmem:[#allocation7] sm:$0xff]
    %v1118 = vld [vmem:[#allocation7 + $0x8] sm:$0xff]
    %v1119 = vld [vmem:[#allocation7 + $0x10] sm:$0xff]
    %v1120 = vld [vmem:[#allocation7 + $0x18] sm:$0xff]
    %v1121 = vld [vmem:[#allocation7 + $0x20] sm:$0xff]
    %v1122 = vld [vmem:[#allocation7 + $0x28] sm:$0xff]
    %v1123 = vld [vmem:[#allocation7 + $0x30] sm:$0xff]
    %v1124 = vld [vmem:[#allocation7 + $0x38] sm:$0xff]
    %v1125 = vld [vmem:[#allocation7 + $0x40] sm:$0xff]
    %v1126 = vld [vmem:[#allocation7 + $0x48] sm:$0xff]
    %v1127 = vld [vmem:[#allocation7 + $0x50] sm:$0xff]
    %v1128 = vld [vmem:[#allocation7 + $0x58] sm:$0xff]
    %v1129 = vld [vmem:[#allocation7 + $0x60] sm:$0xff]
    %v1130 = vld [vmem:[#allocation7 + $0x68] sm:$0xff]
    %v1131 = vld [vmem:[#allocation7 + $0x70] sm:$0xff]
    %v1132 = vld [vmem:[#allocation7 + $0x78] sm:$0xff]
    %v1133 = vld [vmem:[#allocation7 + $0x80] sm:$0xff]
    %v1134 = vld [vmem:[#allocation7 + $0x88] sm:$0xff]
    %v1135 = vld [vmem:[#allocation7 + $0x90] sm:$0xff]
    %v1136 = vld [vmem:[#allocation7 + $0x98] sm:$0xff]
    %v1137 = vld [vmem:[#allocation7 + $0xa0] sm:$0xff]
    %v1138 = vld [vmem:[#allocation7 + $0xa8] sm:$0xff]
    %v1139 = vld [vmem:[#allocation7 + $0xb0] sm:$0xff]
    %v1140 = vld [vmem:[#allocation7 + $0xb8] sm:$0xff]
    %v1141 = vld [vmem:[#allocation7 + $0xc0] sm:$0xff]
    %v1142 = vld [vmem:[#allocation7 + $0xc8] sm:$0xff]
    %v1143 = vld [vmem:[#allocation7 + $0xd0] sm:$0xff]
    %v1144 = vld [vmem:[#allocation7 + $0xd8] sm:$0xff]
    %v1145 = vld [vmem:[#allocation7 + $0xe0] sm:$0xff]
    %v1146 = vld [vmem:[#allocation7 + $0xe8] sm:$0xff]
    %v1147 = vld [vmem:[#allocation7 + $0xf0] sm:$0xff]
    %v1148 = vld [vmem:[#allocation7 + $0xf8] sm:$0xff]
    %v1149 = vld [vmem:[%s4] sm:$0x1]
    %v1151 = vlaneseq
    %v1152 = vshrl.u32 %v1151, 7
    %v1153 = vsub.s32 0, %v1152
    %v1154 = vrot.slane %v1149, %v1153
    %1156 = vmatprep.subr.mxu0 0.0
    %v1157 = vand.u32 %v1117, 4294901760
    %1158 = vmatpush1.msra.mxu0 %v1157
    %1159 = vmatprep.subr.mxu0 0.0
    %v1160 = vand.u32 %v1118, 4294901760
    %1161 = vmatpush1.msra.mxu0 %v1160
    %1162 = vmatprep.subr.mxu0 0.0
    %v1163 = vand.u32 %v1119, 4294901760
    %1164 = vmatpush1.msra.mxu0 %v1163
    %1165 = vmatprep.subr.mxu0 0.0
    %v1166 = vand.u32 %v1120, 4294901760
    %1167 = vmatpush1.msra.mxu0 %v1166
    %1168 = vmatprep.subr.mxu0 0.0
    %v1169 = vand.u32 %v1121, 4294901760
    %1170 = vmatpush1.msra.mxu0 %v1169
    %1171 = vmatprep.subr.mxu0 0.0
    %v1172 = vand.u32 %v1122, 4294901760
    %1173 = vmatpush1.msra.mxu0 %v1172
    %1174 = vmatprep.subr.mxu0 0.0
    %v1175 = vand.u32 %v1123, 4294901760
    %1176 = vmatpush1.msra.mxu0 %v1175
    %1177 = vmatprep.subr.mxu0 0.0
    %v1178 = vand.u32 %v1124, 4294901760
    %1179 = vmatpush1.msra.mxu0 %v1178
    %1180 = vmatprep.subr.mxu0 0.0
    %v1181 = vand.u32 %v1125, 4294901760
    %1182 = vmatpush1.msra.mxu0 %v1181
    %1183 = vmatprep.subr.mxu0 0.0
    %v1184 = vand.u32 %v1126, 4294901760
    %1185 = vmatpush1.msra.mxu0 %v1184
    %1186 = vmatprep.subr.mxu0 0.0
    %v1187 = vand.u32 %v1127, 4294901760
    %1188 = vmatpush1.msra.mxu0 %v1187
    %1189 = vmatprep.subr.mxu0 0.0
    %v1190 = vand.u32 %v1128, 4294901760
    %1191 = vmatpush1.msra.mxu0 %v1190
    %1192 = vmatprep.subr.mxu0 0.0
    %v1193 = vand.u32 %v1129, 4294901760
    %1194 = vmatpush1.msra.mxu0 %v1193
    %1195 = vmatprep.subr.mxu0 0.0
    %v1196 = vand.u32 %v1130, 4294901760
    %1197 = vmatpush1.msra.mxu0 %v1196
    %1198 = vmatprep.subr.mxu0 0.0
    %v1199 = vand.u32 %v1131, 4294901760
    %1200 = vmatpush1.msra.mxu0 %v1199
    %1201 = vmatprep.subr.mxu0 0.0
    %v1202 = vand.u32 %v1132, 4294901760
    %1203 = vmatpush1.msra.mxu0 %v1202
    %1204 = vmatprep.subr.mxu0 0.0
    %v1205 = vand.u32 %v1133, 4294901760
    %1206 = vmatpush1.msra.mxu0 %v1205
    %1207 = vmatprep.subr.mxu0 0.0
    %v1208 = vand.u32 %v1134, 4294901760
    %1209 = vmatpush1.msra.mxu0 %v1208
    %1210 = vmatprep.subr.mxu0 0.0
    %v1211 = vand.u32 %v1135, 4294901760
    %1212 = vmatpush1.msra.mxu0 %v1211
    %1213 = vmatprep.subr.mxu0 0.0
    %v1214 = vand.u32 %v1136, 4294901760
    %1215 = vmatpush1.msra.mxu0 %v1214
    %1216 = vmatprep.subr.mxu0 0.0
    %v1217 = vand.u32 %v1137, 4294901760
    %1218 = vmatpush1.msra.mxu0 %v1217
    %1219 = vmatprep.subr.mxu0 0.0
    %v1220 = vand.u32 %v1138, 4294901760
    %1221 = vmatpush1.msra.mxu0 %v1220
    %1222 = vmatprep.subr.mxu0 0.0
    %v1223 = vand.u32 %v1139, 4294901760
    %1224 = vmatpush1.msra.mxu0 %v1223
    %1225 = vmatprep.subr.mxu0 0.0
    %v1226 = vand.u32 %v1140, 4294901760
    %1227 = vmatpush1.msra.mxu0 %v1226
    %1228 = vmatprep.subr.mxu0 0.0
    %v1229 = vand.u32 %v1141, 4294901760
    %1230 = vmatpush1.msra.mxu0 %v1229
    %1231 = vmatprep.subr.mxu0 0.0
    %v1232 = vand.u32 %v1142, 4294901760
    %1233 = vmatpush1.msra.mxu0 %v1232
    %1234 = vmatprep.subr.mxu0 0.0
    %v1235 = vand.u32 %v1143, 4294901760
    %1236 = vmatpush1.msra.mxu0 %v1235
    %1237 = vmatprep.subr.mxu0 0.0
    %v1238 = vand.u32 %v1144, 4294901760
    %1239 = vmatpush1.msra.mxu0 %v1238
    %1240 = vmatprep.subr.mxu0 0.0
    %v1241 = vand.u32 %v1145, 4294901760
    %1242 = vmatpush1.msra.mxu0 %v1241
    %1243 = vmatprep.subr.mxu0 0.0
    %v1244 = vand.u32 %v1146, 4294901760
    %1245 = vmatpush1.msra.mxu0 %v1244
    %1246 = vmatprep.subr.mxu0 0.0
    %v1247 = vand.u32 %v1147, 4294901760
    %1248 = vmatpush1.msra.mxu0 %v1247
    %1249 = vmatprep.subr.mxu0 0.0
    %v1250 = vand.u32 %v1148, 4294901760
    %1251 = vmatpush1.msra.mxu0 %v1250
    %v1252 = vand.u32 %v1110, 4294901760
    %v1253 = vsub.f32 %v1110, %v1252
    %v1254 = vand.u32 %v1253, 4294901760
    %v1255 = vsub.f32 %v1253, %v1254
    %v1256 = vand.u32 %v1255, 4294901760
    %1257 = vmatprep.mubr.f32.mxu0 %v1256
    %v1258 = vand.u32 %v1109, 4294901760
    %v1259 = vsub.f32 %v1109, %v1258
    %v1260 = vand.u32 %v1259, 4294901760
    %v1261 = vsub.f32 %v1259, %v1260
    %v1262 = vand.u32 %v1261, 4294901760
    %1263 = vmatmul.mubr.f32.gmra.mrb[0].mxu0 %v1262
    %v1264 = vpop.f32.mrb[0].mxu0
    %v1265 = vadd.f32 %v1154, %v1264
    %v1266 = vpop.f32.mrb[0].mxu0
    %v1267 = vand.u32 %v1112, 4294901760
    %v1268 = vsub.f32 %v1112, %v1267
    %v1269 = vand.u32 %v1268, 4294901760
    %v1270 = vsub.f32 %v1268, %v1269
    %v1271 = vand.u32 %v1270, 4294901760
    %1272 = vmatprep.mubr.f32.mxu0 %v1271
    %v1273 = vand.u32 %v1111, 4294901760
    %v1274 = vsub.f32 %v1111, %v1273
    %v1275 = vand.u32 %v1274, 4294901760
    %v1276 = vsub.f32 %v1274, %v1275
    %v1277 = vand.u32 %v1276, 4294901760
    %1278 = vmatmul.mubr.f32.gmra.mrb[0].mxu0 %v1277
    %v1279 = vpop.f32.mrb[0].mxu0
    %v1280 = vadd.f32 %v1154, %v1279
    %v1281 = vpop.f32.mrb[0].mxu0
    %v1282 = vand.u32 %v1114, 4294901760
    %v1283 = vsub.f32 %v1114, %v1282
    %v1284 = vand.u32 %v1283, 4294901760
    %v1285 = vsub.f32 %v1283, %v1284
    %v1286 = vand.u32 %v1285, 4294901760
    %1287 = vmatprep.mubr.f32.mxu0 %v1286
    %v1288 = vand.u32 %v1113, 4294901760
    %v1289 = vsub.f32 %v1113, %v1288
    %v1290 = vand.u32 %v1289, 4294901760
    %v1291 = vsub.f32 %v1289, %v1290
    %v1292 = vand.u32 %v1291, 4294901760
    %1293 = vmatmul.mubr.f32.gmra.mrb[0].mxu0 %v1292
    %v1294 = vpop.f32.mrb[0].mxu0
    %v1295 = vadd.f32 %v1154, %v1294
    %v1296 = vpop.f32.mrb[0].mxu0
    %v1297 = vand.u32 %v1116, 4294901760
    %v1298 = vsub.f32 %v1116, %v1297
    %v1299 = vand.u32 %v1298, 4294901760
    %v1300 = vsub.f32 %v1298, %v1299
    %v1301 = vand.u32 %v1300, 4294901760
    %1302 = vmatprep.mubr.f32.mxu0 %v1301
    %v1303 = vand.u32 %v1115, 4294901760
    %v1304 = vsub.f32 %v1115, %v1303
    %v1305 = vand.u32 %v1304, 4294901760
    %v1306 = vsub.f32 %v1304, %v1305
    %v1307 = vand.u32 %v1306, 4294901760
    %1308 = vmatmul.mubr.f32.gmra.mrb[0].mxu0 %v1307
    %v1309 = vpop.f32.mrb[0].mxu0
    %v1310 = vadd.f32 %v1154, %v1309
    %v1311 = vpop.f32.mrb[0].mxu0
    %1312 = vdwg.mxu0
    %1313 = vmatprep.subr.mxu0 0.0
    %v1314 = vand.u32 %v1117, 4294901760
    %v1315 = vsub.f32 %v1117, %v1314
    %v1316 = vand.u32 %v1315, 4294901760
    %v1317 = vsub.f32 %v1315, %v1316
    %v1318 = vand.u32 %v1317, 4294901760
    %1319 = vmatpush1.msra.mxu0 %v1318
    %1320 = vmatprep.subr.mxu0 0.0
    %v1321 = vand.u32 %v1118, 4294901760
    %v1322 = vsub.f32 %v1118, %v1321
    %v1323 = vand.u32 %v1322, 4294901760
    %v1324 = vsub.f32 %v1322, %v1323
    %v1325 = vand.u32 %v1324, 4294901760
    %1326 = vmatpush1.msra.mxu0 %v1325
    %1327 = vmatprep.subr.mxu0 0.0
    %v1328 = vand.u32 %v1119, 4294901760
    %v1329 = vsub.f32 %v1119, %v1328
    %v1330 = vand.u32 %v1329, 4294901760
    %v1331 = vsub.f32 %v1329, %v1330
    %v1332 = vand.u32 %v1331, 4294901760
    %1333 = vmatpush1.msra.mxu0 %v1332
    %1334 = vmatprep.subr.mxu0 0.0
    %v1335 = vand.u32 %v1120, 4294901760
    %v1336 = vsub.f32 %v1120, %v1335
    %v1337 = vand.u32 %v1336, 4294901760
    %v1338 = vsub.f32 %v1336, %v1337
    %v1339 = vand.u32 %v1338, 4294901760
    %1340 = vmatpush1.msra.mxu0 %v1339
    %1341 = vmatprep.subr.mxu0 0.0
    %v1342 = vand.u32 %v1121, 4294901760
    %v1343 = vsub.f32 %v1121, %v1342
    %v1344 = vand.u32 %v1343, 4294901760
    %v1345 = vsub.f32 %v1343, %v1344
    %v1346 = vand.u32 %v1345, 4294901760
    %1347 = vmatpush1.msra.mxu0 %v1346
    %1348 = vmatprep.subr.mxu0 0.0
    %v1349 = vand.u32 %v1122, 4294901760
    %v1350 = vsub.f32 %v1122, %v1349
    %v1351 = vand.u32 %v1350, 4294901760
    %v1352 = vsub.f32 %v1350, %v1351
    %v1353 = vand.u32 %v1352, 4294901760
    %1354 = vmatpush1.msra.mxu0 %v1353
    %1355 = vmatprep.subr.mxu0 0.0
    %v1356 = vand.u32 %v1123, 4294901760
    %v1357 = vsub.f32 %v1123, %v1356
    %v1358 = vand.u32 %v1357, 4294901760
    %v1359 = vsub.f32 %v1357, %v1358
    %v1360 = vand.u32 %v1359, 4294901760
    %1361 = vmatpush1.msra.mxu0 %v1360
    %1362 = vmatprep.subr.mxu0 0.0
    %v1363 = vand.u32 %v1124, 4294901760
    %v1364 = vsub.f32 %v1124, %v1363
    %v1365 = vand.u32 %v1364, 4294901760
    %v1366 = vsub.f32 %v1364, %v1365
    %v1367 = vand.u32 %v1366, 4294901760
    %1368 = vmatpush1.msra.mxu0 %v1367
    %1369 = vmatprep.subr.mxu0 0.0
    %v1370 = vand.u32 %v1125, 4294901760
    %v1371 = vsub.f32 %v1125, %v1370
    %v1372 = vand.u32 %v1371, 4294901760
    %v1373 = vsub.f32 %v1371, %v1372
    %v1374 = vand.u32 %v1373, 4294901760
    %1375 = vmatpush1.msra.mxu0 %v1374
    %1376 = vmatprep.subr.mxu0 0.0
    %v1377 = vand.u32 %v1126, 4294901760
    %v1378 = vsub.f32 %v1126, %v1377
    %v1379 = vand.u32 %v1378, 4294901760
    %v1380 = vsub.f32 %v1378, %v1379
    %v1381 = vand.u32 %v1380, 4294901760
    %1382 = vmatpush1.msra.mxu0 %v1381
    %1383 = vmatprep.subr.mxu0 0.0
    %v1384 = vand.u32 %v1127, 4294901760
    %v1385 = vsub.f32 %v1127, %v1384
    %v1386 = vand.u32 %v1385, 4294901760
    %v1387 = vsub.f32 %v1385, %v1386
    %v1388 = vand.u32 %v1387, 4294901760
    %1389 = vmatpush1.msra.mxu0 %v1388
    %1390 = vmatprep.subr.mxu0 0.0
    %v1391 = vand.u32 %v1128, 4294901760
    %v1392 = vsub.f32 %v1128, %v1391
    %v1393 = vand.u32 %v1392, 4294901760
    %v1394 = vsub.f32 %v1392, %v1393
    %v1395 = vand.u32 %v1394, 4294901760
    %1396 = vmatpush1.msra.mxu0 %v1395
    %1397 = vmatprep.subr.mxu0 0.0
    %v1398 = vand.u32 %v1129, 4294901760
    %v1399 = vsub.f32 %v1129, %v1398
    %v1400 = vand.u32 %v1399, 4294901760
    %v1401 = vsub.f32 %v1399, %v1400
    %v1402 = vand.u32 %v1401, 4294901760
    %1403 = vmatpush1.msra.mxu0 %v1402
    %1404 = vmatprep.subr.mxu0 0.0
    %v1405 = vand.u32 %v1130, 4294901760
    %v1406 = vsub.f32 %v1130, %v1405
    %v1407 = vand.u32 %v1406, 4294901760
    %v1408 = vsub.f32 %v1406, %v1407
    %v1409 = vand.u32 %v1408, 4294901760
    %1410 = vmatpush1.msra.mxu0 %v1409
    %1411 = vmatprep.subr.mxu0 0.0
    %v1412 = vand.u32 %v1131, 4294901760
    %v1413 = vsub.f32 %v1131, %v1412
    %v1414 = vand.u32 %v1413, 4294901760
    %v1415 = vsub.f32 %v1413, %v1414
    %v1416 = vand.u32 %v1415, 4294901760
    %1417 = vmatpush1.msra.mxu0 %v1416
    %1418 = vmatprep.subr.mxu0 0.0
    %v1419 = vand.u32 %v1132, 4294901760
    %v1420 = vsub.f32 %v1132, %v1419
    %v1421 = vand.u32 %v1420, 4294901760
    %v1422 = vsub.f32 %v1420, %v1421
    %v1423 = vand.u32 %v1422, 4294901760
    %1424 = vmatpush1.msra.mxu0 %v1423
    %1425 = vmatprep.subr.mxu0 0.0
    %v1426 = vand.u32 %v1133, 4294901760
    %v1427 = vsub.f32 %v1133, %v1426
    %v1428 = vand.u32 %v1427, 4294901760
    %v1429 = vsub.f32 %v1427, %v1428
    %v1430 = vand.u32 %v1429, 4294901760
    %1431 = vmatpush1.msra.mxu0 %v1430
    %1432 = vmatprep.subr.mxu0 0.0
    %v1433 = vand.u32 %v1134, 4294901760
    %v1434 = vsub.f32 %v1134, %v1433
    %v1435 = vand.u32 %v1434, 4294901760
    %v1436 = vsub.f32 %v1434, %v1435
    %v1437 = vand.u32 %v1436, 4294901760
    %1438 = vmatpush1.msra.mxu0 %v1437
    %1439 = vmatprep.subr.mxu0 0.0
    %v1440 = vand.u32 %v1135, 4294901760
    %v1441 = vsub.f32 %v1135, %v1440
    %v1442 = vand.u32 %v1441, 4294901760
    %v1443 = vsub.f32 %v1441, %v1442
    %v1444 = vand.u32 %v1443, 4294901760
    %1445 = vmatpush1.msra.mxu0 %v1444
    %1446 = vmatprep.subr.mxu0 0.0
    %v1447 = vand.u32 %v1136, 4294901760
    %v1448 = vsub.f32 %v1136, %v1447
    %v1449 = vand.u32 %v1448, 4294901760
    %v1450 = vsub.f32 %v1448, %v1449
    %v1451 = vand.u32 %v1450, 4294901760
    %1452 = vmatpush1.msra.mxu0 %v1451
    %1453 = vmatprep.subr.mxu0 0.0
    %v1454 = vand.u32 %v1137, 4294901760
    %v1455 = vsub.f32 %v1137, %v1454
    %v1456 = vand.u32 %v1455, 4294901760
    %v1457 = vsub.f32 %v1455, %v1456
    %v1458 = vand.u32 %v1457, 4294901760
    %1459 = vmatpush1.msra.mxu0 %v1458
    %1460 = vmatprep.subr.mxu0 0.0
    %v1461 = vand.u32 %v1138, 4294901760
    %v1462 = vsub.f32 %v1138, %v1461
    %v1463 = vand.u32 %v1462, 4294901760
    %v1464 = vsub.f32 %v1462, %v1463
    %v1465 = vand.u32 %v1464, 4294901760
    %1466 = vmatpush1.msra.mxu0 %v1465
    %1467 = vmatprep.subr.mxu0 0.0
    %v1468 = vand.u32 %v1139, 4294901760
    %v1469 = vsub.f32 %v1139, %v1468
    %v1470 = vand.u32 %v1469, 4294901760
    %v1471 = vsub.f32 %v1469, %v1470
    %v1472 = vand.u32 %v1471, 4294901760
    %1473 = vmatpush1.msra.mxu0 %v1472
    %1474 = vmatprep.subr.mxu0 0.0
    %v1475 = vand.u32 %v1140, 4294901760
    %v1476 = vsub.f32 %v1140, %v1475
    %v1477 = vand.u32 %v1476, 4294901760
    %v1478 = vsub.f32 %v1476, %v1477
    %v1479 = vand.u32 %v1478, 4294901760
    %1480 = vmatpush1.msra.mxu0 %v1479
    %1481 = vmatprep.subr.mxu0 0.0
    %v1482 = vand.u32 %v1141, 4294901760
    %v1483 = vsub.f32 %v1141, %v1482
    %v1484 = vand.u32 %v1483, 4294901760
    %v1485 = vsub.f32 %v1483, %v1484
    %v1486 = vand.u32 %v1485, 4294901760
    %1487 = vmatpush1.msra.mxu0 %v1486
    %1488 = vmatprep.subr.mxu0 0.0
    %v1489 = vand.u32 %v1142, 4294901760
    %v1490 = vsub.f32 %v1142, %v1489
    %v1491 = vand.u32 %v1490, 4294901760
    %v1492 = vsub.f32 %v1490, %v1491
    %v1493 = vand.u32 %v1492, 4294901760
    %1494 = vmatpush1.msra.mxu0 %v1493
    %1495 = vmatprep.subr.mxu0 0.0
    %v1496 = vand.u32 %v1143, 4294901760
    %v1497 = vsub.f32 %v1143, %v1496
    %v1498 = vand.u32 %v1497, 4294901760
    %v1499 = vsub.f32 %v1497, %v1498
    %v1500 = vand.u32 %v1499, 4294901760
    %1501 = vmatpush1.msra.mxu0 %v1500
    %1502 = vmatprep.subr.mxu0 0.0
    %v1503 = vand.u32 %v1144, 4294901760
    %v1504 = vsub.f32 %v1144, %v1503
    %v1505 = vand.u32 %v1504, 4294901760
    %v1506 = vsub.f32 %v1504, %v1505
    %v1507 = vand.u32 %v1506, 4294901760
    %1508 = vmatpush1.msra.mxu0 %v1507
    %1509 = vmatprep.subr.mxu0 0.0
    %v1510 = vand.u32 %v1145, 4294901760
    %v1511 = vsub.f32 %v1145, %v1510
    %v1512 = vand.u32 %v1511, 4294901760
    %v1513 = vsub.f32 %v1511, %v1512
    %v1514 = vand.u32 %v1513, 4294901760
    %1515 = vmatpush1.msra.mxu0 %v1514
    %1516 = vmatprep.subr.mxu0 0.0
    %v1517 = vand.u32 %v1146, 4294901760
    %v1518 = vsub.f32 %v1146, %v1517
    %v1519 = vand.u32 %v1518, 4294901760
    %v1520 = vsub.f32 %v1518, %v1519
    %v1521 = vand.u32 %v1520, 4294901760
    %1522 = vmatpush1.msra.mxu0 %v1521
    %1523 = vmatprep.subr.mxu0 0.0
    %v1524 = vand.u32 %v1147, 4294901760
    %v1525 = vsub.f32 %v1147, %v1524
    %v1526 = vand.u32 %v1525, 4294901760
    %v1527 = vsub.f32 %v1525, %v1526
    %v1528 = vand.u32 %v1527, 4294901760
    %1529 = vmatpush1.msra.mxu0 %v1528
    %1530 = vmatprep.subr.mxu0 0.0
    %v1531 = vand.u32 %v1148, 4294901760
    %v1532 = vsub.f32 %v1148, %v1531
    %v1533 = vand.u32 %v1532, 4294901760
    %v1534 = vsub.f32 %v1532, %v1533
    %v1535 = vand.u32 %v1534, 4294901760
    %1536 = vmatpush1.msra.mxu0 %v1535
    %v1537 = vand.u32 %v1110, 4294901760
    %1538 = vmatprep.mubr.f32.mxu0 %v1537
    %v1539 = vand.u32 %v1109, 4294901760
    %1540 = vmatmul.mubr.f32.gmra.mrb[0].mxu0 %v1539
    %v1541 = vpop.f32.mrb[0].mxu0
    %v1542 = vadd.f32 %v1265, %v1541
    %v1543 = vpop.f32.mrb[0].mxu0
    %v1544 = vand.u32 %v1112, 4294901760
    %1545 = vmatprep.mubr.f32.mxu0 %v1544
    %v1546 = vand.u32 %v1111, 4294901760
    %1547 = vmatmul.mubr.f32.gmra.mrb[0].mxu0 %v1546
    %v1548 = vpop.f32.mrb[0].mxu0
    %v1549 = vadd.f32 %v1280, %v1548
    %v1550 = vpop.f32.mrb[0].mxu0
    %v1551 = vand.u32 %v1114, 4294901760
    %1552 = vmatprep.mubr.f32.mxu0 %v1551
    %v1553 = vand.u32 %v1113, 4294901760
    %1554 = vmatmul.mubr.f32.gmra.mrb[0].mxu0 %v1553
    %v1555 = vpop.f32.mrb[0].mxu0
    %v1556 = vadd.f32 %v1295, %v1555
    %v1557 = vpop.f32.mrb[0].mxu0
    %v1558 = vand.u32 %v1116, 4294901760
    %1559 = vmatprep.mubr.f32.mxu0 %v1558
    %v1560 = vand.u32 %v1115, 4294901760
    %1561 = vmatmul.mubr.f32.gmra.mrb[0].mxu0 %v1560
    %v1562 = vpop.f32.mrb[0].mxu0
    %v1563 = vadd.f32 %v1310, %v1562
    %v1564 = vpop.f32.mrb[0].mxu0
    %1565 = vdwg.mxu0
    %1566 = vmatprep.subr.mxu0 0.0
    %v1567 = vand.u32 %v1117, 4294901760
    %v1568 = vsub.f32 %v1117, %v1567
    %1569 = vmatpush1.msra.mxu0 %v1568
    %1570 = vmatprep.subr.mxu0 0.0
    %v1571 = vand.u32 %v1118, 4294901760
    %v1572 = vsub.f32 %v1118, %v1571
    %1573 = vmatpush1.msra.mxu0 %v1572
    %1574 = vmatprep.subr.mxu0 0.0
    %v1575 = vand.u32 %v1119, 4294901760
    %v1576 = vsub.f32 %v1119, %v1575
    %1577 = vmatpush1.msra.mxu0 %v1576
    %1578 = vmatprep.subr.mxu0 0.0
    %v1579 = vand.u32 %v1120, 4294901760
    %v1580 = vsub.f32 %v1120, %v1579
    %1581 = vmatpush1.msra.mxu0 %v1580
    %1582 = vmatprep.subr.mxu0 0.0
    %v1583 = vand.u32 %v1121, 4294901760
    %v1584 = vsub.f32 %v1121, %v1583
    %1585 = vmatpush1.msra.mxu0 %v1584
    %1586 = vmatprep.subr.mxu0 0.0
    %v1587 = vand.u32 %v1122, 4294901760
    %v1588 = vsub.f32 %v1122, %v1587
    %1589 = vmatpush1.msra.mxu0 %v1588
    %1590 = vmatprep.subr.mxu0 0.0
    %v1591 = vand.u32 %v1123, 4294901760
    %v1592 = vsub.f32 %v1123, %v1591
    %1593 = vmatpush1.msra.mxu0 %v1592
    %1594 = vmatprep.subr.mxu0 0.0
    %v1595 = vand.u32 %v1124, 4294901760
    %v1596 = vsub.f32 %v1124, %v1595
    %1597 = vmatpush1.msra.mxu0 %v1596
    %1598 = vmatprep.subr.mxu0 0.0
    %v1599 = vand.u32 %v1125, 4294901760
    %v1600 = vsub.f32 %v1125, %v1599
    %1601 = vmatpush1.msra.mxu0 %v1600
    %1602 = vmatprep.subr.mxu0 0.0
    %v1603 = vand.u32 %v1126, 4294901760
    %v1604 = vsub.f32 %v1126, %v1603
    %1605 = vmatpush1.msra.mxu0 %v1604
    %1606 = vmatprep.subr.mxu0 0.0
    %v1607 = vand.u32 %v1127, 4294901760
    %v1608 = vsub.f32 %v1127, %v1607
    %1609 = vmatpush1.msra.mxu0 %v1608
    %1610 = vmatprep.subr.mxu0 0.0
    %v1611 = vand.u32 %v1128, 4294901760
    %v1612 = vsub.f32 %v1128, %v1611
    %1613 = vmatpush1.msra.mxu0 %v1612
    %1614 = vmatprep.subr.mxu0 0.0
    %v1615 = vand.u32 %v1129, 4294901760
    %v1616 = vsub.f32 %v1129, %v1615
    %1617 = vmatpush1.msra.mxu0 %v1616
    %1618 = vmatprep.subr.mxu0 0.0
    %v1619 = vand.u32 %v1130, 4294901760
    %v1620 = vsub.f32 %v1130, %v1619
    %1621 = vmatpush1.msra.mxu0 %v1620
    %1622 = vmatprep.subr.mxu0 0.0
    %v1623 = vand.u32 %v1131, 4294901760
    %v1624 = vsub.f32 %v1131, %v1623
    %1625 = vmatpush1.msra.mxu0 %v1624
    %1626 = vmatprep.subr.mxu0 0.0
    %v1627 = vand.u32 %v1132, 4294901760
    %v1628 = vsub.f32 %v1132, %v1627
    %1629 = vmatpush1.msra.mxu0 %v1628
    %1630 = vmatprep.subr.mxu0 0.0
    %v1631 = vand.u32 %v1133, 4294901760
    %v1632 = vsub.f32 %v1133, %v1631
    %1633 = vmatpush1.msra.mxu0 %v1632
    %1634 = vmatprep.subr.mxu0 0.0
    %v1635 = vand.u32 %v1134, 4294901760
    %v1636 = vsub.f32 %v1134, %v1635
    %1637 = vmatpush1.msra.mxu0 %v1636
    %1638 = vmatprep.subr.mxu0 0.0
    %v1639 = vand.u32 %v1135, 4294901760
    %v1640 = vsub.f32 %v1135, %v1639
    %1641 = vmatpush1.msra.mxu0 %v1640
    %1642 = vmatprep.subr.mxu0 0.0
    %v1643 = vand.u32 %v1136, 4294901760
    %v1644 = vsub.f32 %v1136, %v1643
    %1645 = vmatpush1.msra.mxu0 %v1644
    %1646 = vmatprep.subr.mxu0 0.0
    %v1647 = vand.u32 %v1137, 4294901760
    %v1648 = vsub.f32 %v1137, %v1647
    %1649 = vmatpush1.msra.mxu0 %v1648
    %1650 = vmatprep.subr.mxu0 0.0
    %v1651 = vand.u32 %v1138, 4294901760
    %v1652 = vsub.f32 %v1138, %v1651
    %1653 = vmatpush1.msra.mxu0 %v1652
    %1654 = vmatprep.subr.mxu0 0.0
    %v1655 = vand.u32 %v1139, 4294901760
    %v1656 = vsub.f32 %v1139, %v1655
    %1657 = vmatpush1.msra.mxu0 %v1656
    %1658 = vmatprep.subr.mxu0 0.0
    %v1659 = vand.u32 %v1140, 4294901760
    %v1660 = vsub.f32 %v1140, %v1659
    %1661 = vmatpush1.msra.mxu0 %v1660
    %1662 = vmatprep.subr.mxu0 0.0
    %v1663 = vand.u32 %v1141, 4294901760
    %v1664 = vsub.f32 %v1141, %v1663
    %1665 = vmatpush1.msra.mxu0 %v1664
    %1666 = vmatprep.subr.mxu0 0.0
    %v1667 = vand.u32 %v1142, 4294901760
    %v1668 = vsub.f32 %v1142, %v1667
    %1669 = vmatpush1.msra.mxu0 %v1668
    %1670 = vmatprep.subr.mxu0 0.0
    %v1671 = vand.u32 %v1143, 4294901760
    %v1672 = vsub.f32 %v1143, %v1671
    %1673 = vmatpush1.msra.mxu0 %v1672
    %1674 = vmatprep.subr.mxu0 0.0
    %v1675 = vand.u32 %v1144, 4294901760
    %v1676 = vsub.f32 %v1144, %v1675
    %1677 = vmatpush1.msra.mxu0 %v1676
    %1678 = vmatprep.subr.mxu0 0.0
    %v1679 = vand.u32 %v1145, 4294901760
    %v1680 = vsub.f32 %v1145, %v1679
    %1681 = vmatpush1.msra.mxu0 %v1680
    %1682 = vmatprep.subr.mxu0 0.0
    %v1683 = vand.u32 %v1146, 4294901760
    %v1684 = vsub.f32 %v1146, %v1683
    %1685 = vmatpush1.msra.mxu0 %v1684
    %1686 = vmatprep.subr.mxu0 0.0
    %v1687 = vand.u32 %v1147, 4294901760
    %v1688 = vsub.f32 %v1147, %v1687
    %1689 = vmatpush1.msra.mxu0 %v1688
    %1690 = vmatprep.subr.mxu0 0.0
    %v1691 = vand.u32 %v1148, 4294901760
    %v1692 = vsub.f32 %v1148, %v1691
    %1693 = vmatpush1.msra.mxu0 %v1692
    %v1694 = vand.u32 %v1110, 4294901760
    %v1695 = vsub.f32 %v1110, %v1694
    %1696 = vmatprep.mubr.f32.mxu0 %v1695
    %v1697 = vand.u32 %v1109, 4294901760
    %v1698 = vsub.f32 %v1109, %v1697
    %1699 = vmatmul.mubr.f32.gmra.mrb[0].mxu0 %v1698
    %v1700 = vpop.f32.mrb[0].mxu0
    %v1701 = vadd.f32 %v1542, %v1700
    %v1702 = vpop.f32.mrb[0].mxu0
    %v1703 = vand.u32 %v1112, 4294901760
    %v1704 = vsub.f32 %v1112, %v1703
    %1705 = vmatprep.mubr.f32.mxu0 %v1704
    %v1706 = vand.u32 %v1111, 4294901760
    %v1707 = vsub.f32 %v1111, %v1706
    %1708 = vmatmul.mubr.f32.gmra.mrb[0].mxu0 %v1707
    %v1709 = vpop.f32.mrb[0].mxu0
    %v1710 = vadd.f32 %v1549, %v1709
    %v1711 = vpop.f32.mrb[0].mxu0
    %v1712 = vand.u32 %v1114, 4294901760
    %v1713 = vsub.f32 %v1114, %v1712
    %1714 = vmatprep.mubr.f32.mxu0 %v1713
    %v1715 = vand.u32 %v1113, 4294901760
    %v1716 = vsub.f32 %v1113, %v1715
    %1717 = vmatmul.mubr.f32.gmra.mrb[0].mxu0 %v1716
    %v1718 = vpop.f32.mrb[0].mxu0
    %v1719 = vadd.f32 %v1556, %v1718
    %v1720 = vpop.f32.mrb[0].mxu0
    %v1721 = vand.u32 %v1116, 4294901760
    %v1722 = vsub.f32 %v1116, %v1721
    %1723 = vmatprep.mubr.f32.mxu0 %v1722
    %v1724 = vand.u32 %v1115, 4294901760
    %v1725 = vsub.f32 %v1115, %v1724
    %1726 = vmatmul.mubr.f32.gmra.mrb[0].mxu0 %v1725
    %v1727 = vpop.f32.mrb[0].mxu0
    %v1728 = vadd.f32 %v1563, %v1727
    %v1729 = vpop.f32.mrb[0].mxu0
    %1730 = vdwg.mxu0
    %1731 = vmatprep.subr.mxu0 0.0
    %v1732 = vand.u32 %v1117, 4294901760
    %1733 = vmatpush1.msra.mxu0 %v1732
    %1734 = vmatprep.subr.mxu0 0.0
    %v1735 = vand.u32 %v1118, 4294901760
    %1736 = vmatpush1.msra.mxu0 %v1735
    %1737 = vmatprep.subr.mxu0 0.0
    %v1738 = vand.u32 %v1119, 4294901760
    %1739 = vmatpush1.msra.mxu0 %v1738
    %1740 = vmatprep.subr.mxu0 0.0
    %v1741 = vand.u32 %v1120, 4294901760
    %1742 = vmatpush1.msra.mxu0 %v1741
    %1743 = vmatprep.subr.mxu0 0.0
    %v1744 = vand.u32 %v1121, 4294901760
    %1745 = vmatpush1.msra.mxu0 %v1744
    %1746 = vmatprep.subr.mxu0 0.0
    %v1747 = vand.u32 %v1122, 4294901760
    %1748 = vmatpush1.msra.mxu0 %v1747
    %1749 = vmatprep.subr.mxu0 0.0
    %v1750 = vand.u32 %v1123, 4294901760
    %1751 = vmatpush1.msra.mxu0 %v1750
    %1752 = vmatprep.subr.mxu0 0.0
    %v1753 = vand.u32 %v1124, 4294901760
    %1754 = vmatpush1.msra.mxu0 %v1753
    %1755 = vmatprep.subr.mxu0 0.0
    %v1756 = vand.u32 %v1125, 4294901760
    %1757 = vmatpush1.msra.mxu0 %v1756
    %1758 = vmatprep.subr.mxu0 0.0
    %v1759 = vand.u32 %v1126, 4294901760
    %1760 = vmatpush1.msra.mxu0 %v1759
    %1761 = vmatprep.subr.mxu0 0.0
    %v1762 = vand.u32 %v1127, 4294901760
    %1763 = vmatpush1.msra.mxu0 %v1762
    %1764 = vmatprep.subr.mxu0 0.0
    %v1765 = vand.u32 %v1128, 4294901760
    %1766 = vmatpush1.msra.mxu0 %v1765
    %1767 = vmatprep.subr.mxu0 0.0
    %v1768 = vand.u32 %v1129, 4294901760
    %1769 = vmatpush1.msra.mxu0 %v1768
    %1770 = vmatprep.subr.mxu0 0.0
    %v1771 = vand.u32 %v1130, 4294901760
    %1772 = vmatpush1.msra.mxu0 %v1771
    %1773 = vmatprep.subr.mxu0 0.0
    %v1774 = vand.u32 %v1131, 4294901760
    %1775 = vmatpush1.msra.mxu0 %v1774
    %1776 = vmatprep.subr.mxu0 0.0
    %v1777 = vand.u32 %v1132, 4294901760
    %1778 = vmatpush1.msra.mxu0 %v1777
    %1779 = vmatprep.subr.mxu0 0.0
    %v1780 = vand.u32 %v1133, 4294901760
    %1781 = vmatpush1.msra.mxu0 %v1780
    %1782 = vmatprep.subr.mxu0 0.0
    %v1783 = vand.u32 %v1134, 4294901760
    %1784 = vmatpush1.msra.mxu0 %v1783
    %1785 = vmatprep.subr.mxu0 0.0
    %v1786 = vand.u32 %v1135, 4294901760
    %1787 = vmatpush1.msra.mxu0 %v1786
    %1788 = vmatprep.subr.mxu0 0.0
    %v1789 = vand.u32 %v1136, 4294901760
    %1790 = vmatpush1.msra.mxu0 %v1789
    %1791 = vmatprep.subr.mxu0 0.0
    %v1792 = vand.u32 %v1137, 4294901760
    %1793 = vmatpush1.msra.mxu0 %v1792
    %1794 = vmatprep.subr.mxu0 0.0
    %v1795 = vand.u32 %v1138, 4294901760
    %1796 = vmatpush1.msra.mxu0 %v1795
    %1797 = vmatprep.subr.mxu0 0.0
    %v1798 = vand.u32 %v1139, 4294901760
    %1799 = vmatpush1.msra.mxu0 %v1798
    %1800 = vmatprep.subr.mxu0 0.0
    %v1801 = vand.u32 %v1140, 4294901760
    %1802 = vmatpush1.msra.mxu0 %v1801
    %1803 = vmatprep.subr.mxu0 0.0
    %v1804 = vand.u32 %v1141, 4294901760
    %1805 = vmatpush1.msra.mxu0 %v1804
    %1806 = vmatprep.subr.mxu0 0.0
    %v1807 = vand.u32 %v1142, 4294901760
    %1808 = vmatpush1.msra.mxu0 %v1807
    %1809 = vmatprep.subr.mxu0 0.0
    %v1810 = vand.u32 %v1143, 4294901760
    %1811 = vmatpush1.msra.mxu0 %v1810
    %1812 = vmatprep.subr.mxu0 0.0
    %v1813 = vand.u32 %v1144, 4294901760
    %1814 = vmatpush1.msra.mxu0 %v1813
    %1815 = vmatprep.subr.mxu0 0.0
    %v1816 = vand.u32 %v1145, 4294901760
    %1817 = vmatpush1.msra.mxu0 %v1816
    %1818 = vmatprep.subr.mxu0 0.0
    %v1819 = vand.u32 %v1146, 4294901760
    %1820 = vmatpush1.msra.mxu0 %v1819
    %1821 = vmatprep.subr.mxu0 0.0
    %v1822 = vand.u32 %v1147, 4294901760
    %1823 = vmatpush1.msra.mxu0 %v1822
    %1824 = vmatprep.subr.mxu0 0.0
    %v1825 = vand.u32 %v1148, 4294901760
    %1826 = vmatpush1.msra.mxu0 %v1825
    %v1827 = vand.u32 %v1110, 4294901760
    %v1828 = vsub.f32 %v1110, %v1827
    %v1829 = vand.u32 %v1828, 4294901760
    %1830 = vmatprep.mubr.f32.mxu0 %v1829
    %v1831 = vand.u32 %v1109, 4294901760
    %v1832 = vsub.f32 %v1109, %v1831
    %v1833 = vand.u32 %v1832, 4294901760
    %1834 = vmatmul.mubr.f32.gmra.mrb[0].mxu0 %v1833
    %v1835 = vpop.f32.mrb[0].mxu0
    %v1836 = vadd.f32 %v1701, %v1835
    %v1837 = vpop.f32.mrb[0].mxu0
    %v1838 = vand.u32 %v1112, 4294901760
    %v1839 = vsub.f32 %v1112, %v1838
    %v1840 = vand.u32 %v1839, 4294901760
    %1841 = vmatprep.mubr.f32.mxu0 %v1840
    %v1842 = vand.u32 %v1111, 4294901760
    %v1843 = vsub.f32 %v1111, %v1842
    %v1844 = vand.u32 %v1843, 4294901760
    %1845 = vmatmul.mubr.f32.gmra.mrb[0].mxu0 %v1844
    %v1846 = vpop.f32.mrb[0].mxu0
    %v1847 = vadd.f32 %v1710, %v1846
    %v1848 = vpop.f32.mrb[0].mxu0
    %v1849 = vand.u32 %v1114, 4294901760
    %v1850 = vsub.f32 %v1114, %v1849
    %v1851 = vand.u32 %v1850, 4294901760
    %1852 = vmatprep.mubr.f32.mxu0 %v1851
    %v1853 = vand.u32 %v1113, 4294901760
    %v1854 = vsub.f32 %v1113, %v1853
    %v1855 = vand.u32 %v1854, 4294901760
    %1856 = vmatmul.mubr.f32.gmra.mrb[0].mxu0 %v1855
    %v1857 = vpop.f32.mrb[0].mxu0
    %v1858 = vadd.f32 %v1719, %v1857
    %v1859 = vpop.f32.mrb[0].mxu0
    %v1860 = vand.u32 %v1116, 4294901760
    %v1861 = vsub.f32 %v1116, %v1860
    %v1862 = vand.u32 %v1861, 4294901760
    %1863 = vmatprep.mubr.f32.mxu0 %v1862
    %v1864 = vand.u32 %v1115, 4294901760
    %v1865 = vsub.f32 %v1115, %v1864
    %v1866 = vand.u32 %v1865, 4294901760
    %1867 = vmatmul.mubr.f32.gmra.mrb[0].mxu0 %v1866
    %v1868 = vpop.f32.mrb[0].mxu0
    %v1869 = vadd.f32 %v1728, %v1868
    %v1870 = vpop.f32.mrb[0].mxu0
    %1871 = vdwg.mxu0
    %1872 = vmatprep.subr.mxu0 0.0
    %v1873 = vand.u32 %v1117, 4294901760
    %v1874 = vsub.f32 %v1117, %v1873
    %v1875 = vand.u32 %v1874, 4294901760
    %1876 = vmatpush1.msra.mxu0 %v1875
    %1877 = vmatprep.subr.mxu0 0.0
    %v1878 = vand.u32 %v1118, 4294901760
    %v1879 = vsub.f32 %v1118, %v1878
    %v1880 = vand.u32 %v1879, 4294901760
    %1881 = vmatpush1.msra.mxu0 %v1880
    %1882 = vmatprep.subr.mxu0 0.0
    %v1883 = vand.u32 %v1119, 4294901760
    %v1884 = vsub.f32 %v1119, %v1883
    %v1885 = vand.u32 %v1884, 4294901760
    %1886 = vmatpush1.msra.mxu0 %v1885
    %1887 = vmatprep.subr.mxu0 0.0
    %v1888 = vand.u32 %v1120, 4294901760
    %v1889 = vsub.f32 %v1120, %v1888
    %v1890 = vand.u32 %v1889, 4294901760
    %1891 = vmatpush1.msra.mxu0 %v1890
    %1892 = vmatprep.subr.mxu0 0.0
    %v1893 = vand.u32 %v1121, 4294901760
    %v1894 = vsub.f32 %v1121, %v1893
    %v1895 = vand.u32 %v1894, 4294901760
    %1896 = vmatpush1.msra.mxu0 %v1895
    %1897 = vmatprep.subr.mxu0 0.0
    %v1898 = vand.u32 %v1122, 4294901760
    %v1899 = vsub.f32 %v1122, %v1898
    %v1900 = vand.u32 %v1899, 4294901760
    %1901 = vmatpush1.msra.mxu0 %v1900
    %1902 = vmatprep.subr.mxu0 0.0
    %v1903 = vand.u32 %v1123, 4294901760
    %v1904 = vsub.f32 %v1123, %v1903
    %v1905 = vand.u32 %v1904, 4294901760
    %1906 = vmatpush1.msra.mxu0 %v1905
    %1907 = vmatprep.subr.mxu0 0.0
    %v1908 = vand.u32 %v1124, 4294901760
    %v1909 = vsub.f32 %v1124, %v1908
    %v1910 = vand.u32 %v1909, 4294901760
    %1911 = vmatpush1.msra.mxu0 %v1910
    %1912 = vmatprep.subr.mxu0 0.0
    %v1913 = vand.u32 %v1125, 4294901760
    %v1914 = vsub.f32 %v1125, %v1913
    %v1915 = vand.u32 %v1914, 4294901760
    %1916 = vmatpush1.msra.mxu0 %v1915
    %1917 = vmatprep.subr.mxu0 0.0
    %v1918 = vand.u32 %v1126, 4294901760
    %v1919 = vsub.f32 %v1126, %v1918
    %v1920 = vand.u32 %v1919, 4294901760
    %1921 = vmatpush1.msra.mxu0 %v1920
    %1922 = vmatprep.subr.mxu0 0.0
    %v1923 = vand.u32 %v1127, 4294901760
    %v1924 = vsub.f32 %v1127, %v1923
    %v1925 = vand.u32 %v1924, 4294901760
    %1926 = vmatpush1.msra.mxu0 %v1925
    %1927 = vmatprep.subr.mxu0 0.0
    %v1928 = vand.u32 %v1128, 4294901760
    %v1929 = vsub.f32 %v1128, %v1928
    %v1930 = vand.u32 %v1929, 4294901760
    %1931 = vmatpush1.msra.mxu0 %v1930
    %1932 = vmatprep.subr.mxu0 0.0
    %v1933 = vand.u32 %v1129, 4294901760
    %v1934 = vsub.f32 %v1129, %v1933
    %v1935 = vand.u32 %v1934, 4294901760
    %1936 = vmatpush1.msra.mxu0 %v1935
    %1937 = vmatprep.subr.mxu0 0.0
    %v1938 = vand.u32 %v1130, 4294901760
    %v1939 = vsub.f32 %v1130, %v1938
    %v1940 = vand.u32 %v1939, 4294901760
    %1941 = vmatpush1.msra.mxu0 %v1940
    %1942 = vmatprep.subr.mxu0 0.0
    %v1943 = vand.u32 %v1131, 4294901760
    %v1944 = vsub.f32 %v1131, %v1943
    %v1945 = vand.u32 %v1944, 4294901760
    %1946 = vmatpush1.msra.mxu0 %v1945
    %1947 = vmatprep.subr.mxu0 0.0
    %v1948 = vand.u32 %v1132, 4294901760
    %v1949 = vsub.f32 %v1132, %v1948
    %v1950 = vand.u32 %v1949, 4294901760
    %1951 = vmatpush1.msra.mxu0 %v1950
    %1952 = vmatprep.subr.mxu0 0.0
    %v1953 = vand.u32 %v1133, 4294901760
    %v1954 = vsub.f32 %v1133, %v1953
    %v1955 = vand.u32 %v1954, 4294901760
    %1956 = vmatpush1.msra.mxu0 %v1955
    %1957 = vmatprep.subr.mxu0 0.0
    %v1958 = vand.u32 %v1134, 4294901760
    %v1959 = vsub.f32 %v1134, %v1958
    %v1960 = vand.u32 %v1959, 4294901760
    %1961 = vmatpush1.msra.mxu0 %v1960
    %1962 = vmatprep.subr.mxu0 0.0
    %v1963 = vand.u32 %v1135, 4294901760
    %v1964 = vsub.f32 %v1135, %v1963
    %v1965 = vand.u32 %v1964, 4294901760
    %1966 = vmatpush1.msra.mxu0 %v1965
    %1967 = vmatprep.subr.mxu0 0.0
    %v1968 = vand.u32 %v1136, 4294901760
    %v1969 = vsub.f32 %v1136, %v1968
    %v1970 = vand.u32 %v1969, 4294901760
    %1971 = vmatpush1.msra.mxu0 %v1970
    %1972 = vmatprep.subr.mxu0 0.0
    %v1973 = vand.u32 %v1137, 4294901760
    %v1974 = vsub.f32 %v1137, %v1973
    %v1975 = vand.u32 %v1974, 4294901760
    %1976 = vmatpush1.msra.mxu0 %v1975
    %1977 = vmatprep.subr.mxu0 0.0
    %v1978 = vand.u32 %v1138, 4294901760
    %v1979 = vsub.f32 %v1138, %v1978
    %v1980 = vand.u32 %v1979, 4294901760
    %1981 = vmatpush1.msra.mxu0 %v1980
    %1982 = vmatprep.subr.mxu0 0.0
    %v1983 = vand.u32 %v1139, 4294901760
    %v1984 = vsub.f32 %v1139, %v1983
    %v1985 = vand.u32 %v1984, 4294901760
    %1986 = vmatpush1.msra.mxu0 %v1985
    %1987 = vmatprep.subr.mxu0 0.0
    %v1988 = vand.u32 %v1140, 4294901760
    %v1989 = vsub.f32 %v1140, %v1988
    %v1990 = vand.u32 %v1989, 4294901760
    %1991 = vmatpush1.msra.mxu0 %v1990
    %1992 = vmatprep.subr.mxu0 0.0
    %v1993 = vand.u32 %v1141, 4294901760
    %v1994 = vsub.f32 %v1141, %v1993
    %v1995 = vand.u32 %v1994, 4294901760
    %1996 = vmatpush1.msra.mxu0 %v1995
    %1997 = vmatprep.subr.mxu0 0.0
    %v1998 = vand.u32 %v1142, 4294901760
    %v1999 = vsub.f32 %v1142, %v1998
    %v2000 = vand.u32 %v1999, 4294901760
    %2001 = vmatpush1.msra.mxu0 %v2000
    %2002 = vmatprep.subr.mxu0 0.0
    %v2003 = vand.u32 %v1143, 4294901760
    %v2004 = vsub.f32 %v1143, %v2003
    %v2005 = vand.u32 %v2004, 4294901760
    %2006 = vmatpush1.msra.mxu0 %v2005
    %2007 = vmatprep.subr.mxu0 0.0
    %v2008 = vand.u32 %v1144, 4294901760
    %v2009 = vsub.f32 %v1144, %v2008
    %v2010 = vand.u32 %v2009, 4294901760
    %2011 = vmatpush1.msra.mxu0 %v2010
    %2012 = vmatprep.subr.mxu0 0.0
    %v2013 = vand.u32 %v1145, 4294901760
    %v2014 = vsub.f32 %v1145, %v2013
    %v2015 = vand.u32 %v2014, 4294901760
    %2016 = vmatpush1.msra.mxu0 %v2015
    %2017 = vmatprep.subr.mxu0 0.0
    %v2018 = vand.u32 %v1146, 4294901760
    %v2019 = vsub.f32 %v1146, %v2018
    %v2020 = vand.u32 %v2019, 4294901760
    %2021 = vmatpush1.msra.mxu0 %v2020
    %2022 = vmatprep.subr.mxu0 0.0
    %v2023 = vand.u32 %v1147, 4294901760
    %v2024 = vsub.f32 %v1147, %v2023
    %v2025 = vand.u32 %v2024, 4294901760
    %2026 = vmatpush1.msra.mxu0 %v2025
    %2027 = vmatprep.subr.mxu0 0.0
    %v2028 = vand.u32 %v1148, 4294901760
    %v2029 = vsub.f32 %v1148, %v2028
    %v2030 = vand.u32 %v2029, 4294901760
    %2031 = vmatpush1.msra.mxu0 %v2030
    %v2032 = vand.u32 %v1110, 4294901760
    %2033 = vmatprep.mubr.f32.mxu0 %v2032
    %v2034 = vand.u32 %v1109, 4294901760
    %2035 = vmatmul.mubr.f32.gmra.mrb[0].mxu0 %v2034
    %v2036 = vpop.f32.mrb[0].mxu0
    %v2037 = vadd.f32 %v1836, %v2036
    %v2038 = vpop.f32.mrb[0].mxu0
    %v2039 = vand.u32 %v1112, 4294901760
    %2040 = vmatprep.mubr.f32.mxu0 %v2039
    %v2041 = vand.u32 %v1111, 4294901760
    %2042 = vmatmul.mubr.f32.gmra.mrb[0].mxu0 %v2041
    %v2043 = vpop.f32.mrb[0].mxu0
    %v2044 = vadd.f32 %v1847, %v2043
    %v2045 = vpop.f32.mrb[0].mxu0
    %v2046 = vand.u32 %v1114, 4294901760
    %2047 = vmatprep.mubr.f32.mxu0 %v2046
    %v2048 = vand.u32 %v1113, 4294901760
    %2049 = vmatmul.mubr.f32.gmra.mrb[0].mxu0 %v2048
    %v2050 = vpop.f32.mrb[0].mxu0
    %v2051 = vadd.f32 %v1858, %v2050
    %v2052 = vpop.f32.mrb[0].mxu0
    %v2053 = vand.u32 %v1116, 4294901760
    %2054 = vmatprep.mubr.f32.mxu0 %v2053
    %v2055 = vand.u32 %v1115, 4294901760
    %2056 = vmatmul.mubr.f32.gmra.mrb[0].mxu0 %v2055
    %v2057 = vpop.f32.mrb[0].mxu0
    %v2058 = vadd.f32 %v1869, %v2057
    %v2059 = vpop.f32.mrb[0].mxu0
    %2060 = vdwg.mxu0
    %2061 = vmatprep.subr.mxu0 0.0
    %v2062 = vand.u32 %v1117, 4294901760
    %2063 = vmatpush1.msra.mxu0 %v2062
    %2064 = vmatprep.subr.mxu0 0.0
    %v2065 = vand.u32 %v1118, 4294901760
    %2066 = vmatpush1.msra.mxu0 %v2065
    %2067 = vmatprep.subr.mxu0 0.0
    %v2068 = vand.u32 %v1119, 4294901760
    %2069 = vmatpush1.msra.mxu0 %v2068
    %2070 = vmatprep.subr.mxu0 0.0
    %v2071 = vand.u32 %v1120, 4294901760
    %2072 = vmatpush1.msra.mxu0 %v2071
    %2073 = vmatprep.subr.mxu0 0.0
    %v2074 = vand.u32 %v1121, 4294901760
    %2075 = vmatpush1.msra.mxu0 %v2074
    %2076 = vmatprep.subr.mxu0 0.0
    %v2077 = vand.u32 %v1122, 4294901760
    %2078 = vmatpush1.msra.mxu0 %v2077
    %2079 = vmatprep.subr.mxu0 0.0
    %v2080 = vand.u32 %v1123, 4294901760
    %2081 = vmatpush1.msra.mxu0 %v2080
    %2082 = vmatprep.subr.mxu0 0.0
    %v2083 = vand.u32 %v1124, 4294901760
    %2084 = vmatpush1.msra.mxu0 %v2083
    %2085 = vmatprep.subr.mxu0 0.0
    %v2086 = vand.u32 %v1125, 4294901760
    %2087 = vmatpush1.msra.mxu0 %v2086
    %2088 = vmatprep.subr.mxu0 0.0
    %v2089 = vand.u32 %v1126, 4294901760
    %2090 = vmatpush1.msra.mxu0 %v2089
    %2091 = vmatprep.subr.mxu0 0.0
    %v2092 = vand.u32 %v1127, 4294901760
    %2093 = vmatpush1.msra.mxu0 %v2092
    %2094 = vmatprep.subr.mxu0 0.0
    %v2095 = vand.u32 %v1128, 4294901760
    %2096 = vmatpush1.msra.mxu0 %v2095
    %2097 = vmatprep.subr.mxu0 0.0
    %v2098 = vand.u32 %v1129, 4294901760
    %2099 = vmatpush1.msra.mxu0 %v2098
    %2100 = vmatprep.subr.mxu0 0.0
    %v2101 = vand.u32 %v1130, 4294901760
    %2102 = vmatpush1.msra.mxu0 %v2101
    %2103 = vmatprep.subr.mxu0 0.0
    %v2104 = vand.u32 %v1131, 4294901760
    %2105 = vmatpush1.msra.mxu0 %v2104
    %2106 = vmatprep.subr.mxu0 0.0
    %v2107 = vand.u32 %v1132, 4294901760
    %2108 = vmatpush1.msra.mxu0 %v2107
    %2109 = vmatprep.subr.mxu0 0.0
    %v2110 = vand.u32 %v1133, 4294901760
    %2111 = vmatpush1.msra.mxu0 %v2110
    %2112 = vmatprep.subr.mxu0 0.0
    %v2113 = vand.u32 %v1134, 4294901760
    %2114 = vmatpush1.msra.mxu0 %v2113
    %2115 = vmatprep.subr.mxu0 0.0
    %v2116 = vand.u32 %v1135, 4294901760
    %2117 = vmatpush1.msra.mxu0 %v2116
    %2118 = vmatprep.subr.mxu0 0.0
    %v2119 = vand.u32 %v1136, 4294901760
    %2120 = vmatpush1.msra.mxu0 %v2119
    %2121 = vmatprep.subr.mxu0 0.0
    %v2122 = vand.u32 %v1137, 4294901760
    %2123 = vmatpush1.msra.mxu0 %v2122
    %2124 = vmatprep.subr.mxu0 0.0
    %v2125 = vand.u32 %v1138, 4294901760
    %2126 = vmatpush1.msra.mxu0 %v2125
    %2127 = vmatprep.subr.mxu0 0.0
    %v2128 = vand.u32 %v1139, 4294901760
    %2129 = vmatpush1.msra.mxu0 %v2128
    %2130 = vmatprep.subr.mxu0 0.0
    %v2131 = vand.u32 %v1140, 4294901760
    %2132 = vmatpush1.msra.mxu0 %v2131
    %2133 = vmatprep.subr.mxu0 0.0
    %v2134 = vand.u32 %v1141, 4294901760
    %2135 = vmatpush1.msra.mxu0 %v2134
    %2136 = vmatprep.subr.mxu0 0.0
    %v2137 = vand.u32 %v1142, 4294901760
    %2138 = vmatpush1.msra.mxu0 %v2137
    %2139 = vmatprep.subr.mxu0 0.0
    %v2140 = vand.u32 %v1143, 4294901760
    %2141 = vmatpush1.msra.mxu0 %v2140
    %2142 = vmatprep.subr.mxu0 0.0
    %v2143 = vand.u32 %v1144, 4294901760
    %2144 = vmatpush1.msra.mxu0 %v2143
    %2145 = vmatprep.subr.mxu0 0.0
    %v2146 = vand.u32 %v1145, 4294901760
    %2147 = vmatpush1.msra.mxu0 %v2146
    %2148 = vmatprep.subr.mxu0 0.0
    %v2149 = vand.u32 %v1146, 4294901760
    %2150 = vmatpush1.msra.mxu0 %v2149
    %2151 = vmatprep.subr.mxu0 0.0
    %v2152 = vand.u32 %v1147, 4294901760
    %2153 = vmatpush1.msra.mxu0 %v2152
    %2154 = vmatprep.subr.mxu0 0.0
    %v2155 = vand.u32 %v1148, 4294901760
    %2156 = vmatpush1.msra.mxu0 %v2155
    %v2157 = vand.u32 %v1110, 4294901760
    %2158 = vmatprep.mubr.f32.mxu0 %v2157
    %v2159 = vand.u32 %v1109, 4294901760
    %2160 = vmatmul.mubr.f32.gmra.mrb[0].mxu0 %v2159
    %v2161 = vpop.f32.mrb[0].mxu0
    %v2162 = vadd.f32 %v2037, %v2161
    %v2163 = vpop.f32.mrb[0].mxu0
    %v2164 = vand.u32 %v1112, 4294901760
    %2165 = vmatprep.mubr.f32.mxu0 %v2164
    %v2166 = vand.u32 %v1111, 4294901760
    %2167 = vmatmul.mubr.f32.gmra.mrb[0].mxu0 %v2166
    %v2168 = vpop.f32.mrb[0].mxu0
    %v2169 = vadd.f32 %v2044, %v2168
    %v2170 = vpop.f32.mrb[0].mxu0
    %v2171 = vand.u32 %v1114, 4294901760
    %2172 = vmatprep.mubr.f32.mxu0 %v2171
    %v2173 = vand.u32 %v1113, 4294901760
    %2174 = vmatmul.mubr.f32.gmra.mrb[0].mxu0 %v2173
    %v2175 = vpop.f32.mrb[0].mxu0
    %v2176 = vadd.f32 %v2051, %v2175
    %v2177 = vpop.f32.mrb[0].mxu0
    %v2178 = vand.u32 %v1116, 4294901760
    %2179 = vmatprep.mubr.f32.mxu0 %v2178
    %v2180 = vand.u32 %v1115, 4294901760
    %2181 = vmatmul.mubr.f32.gmra.mrb[0].mxu0 %v2180
    %v2182 = vpop.f32.mrb[0].mxu0
    %v2183 = vadd.f32 %v2058, %v2182
    %v2184 = vpop.f32.mrb[0].mxu0
    %2185 = vdwg.mxu0
    %2186 = vst [vmem:[#allocation8] sm:$0xff] %v2162
    %2187 = vst [vmem:[#allocation8 + $0x8] sm:$0xff] %v2169
    %2188 = vst [vmem:[#allocation8 + $0x10] sm:$0xff] %v2176
    %2189 = vst [vmem:[#allocation8 + $0x18] sm:$0xff] %v2183
    // Predicated region
    $region34: #{tpu_custom_call.1} parent=1 // pred_check
      _
    $region35: #{tpu_custom_call.1} parent=1 // pred_check_branch
      %2191 = sbr.rel (0) target = $region37
    $region36: #{tpu_custom_call.1} parent=1 // pred_region
      %s2193 = ssub.s32 512, 512
      %2194 = vsyncadd [#allocation4], %s2193
      %s2195 = sshll.u32 [#allocation8], 4
      %s2196 = int_to_ptr.vmem [resolvable:$true] %s2195
      %2201 = dma.vmem_to_hbm [thread:$0]  %s2196, 512, %s5, [#allocation4], 128, 128, 8
    $region37: #{tpu_custom_call.1} parent=1 // pred_fallthru
      _
    // Predicated region
    $region38: #{tpu_custom_call.1} parent=1 // pred_check
      _
    $region39: #{tpu_custom_call.1} parent=1 // pred_check_branch
      %2203 = sbr.rel (0) target = $region41
    $region40: #{tpu_custom_call.1} parent=1 // pred_region
      %2204 = dma.done [#allocation4], 512
    $region41: #{tpu_custom_call.1} parent=1 // pred_fallthru
      _
    %2205 = vsyncpa [#allocation3], 1
    %2206 = vsyncpa [#allocation6], 1
    %2207 = vsyncpa [#allocation4], 1

// kernel: tpu_custom_call.1
$region0: #{tpu_custom_call.1}
  #allocation0 [shape = 'u32[]', space=smem, size = 0x4, offset = 0x4, fixed_abs, tag = 'smem constant byte address 0x4 - core index']
  #allocation1 [shape = 'u32[144,128]{1,0:T(1,128)}', space=vmem, size = 0x12000, scoped, tag = 'internal scratch']
  %s0 = inlined_call_operand.hbm [shape: f32[32,64], index: 0, kind: input, shape index: {}]
  %s1 = inlined_call_operand.hbm [shape: f32[64,256], index: 1, kind: input, shape index: {}]
  %s2 = inlined_call_operand.vmem [shape: f32[1,256], index: 2, kind: input, shape index: {}]
  %s3 = inlined_call_operand.hbm [shape: f32[256,128], index: 3, kind: input, shape index: {}]
  %s4 = inlined_call_operand.vmem [shape: f32[1,128], index: 4, kind: input, shape index: {}]
  %s5 = inlined_call_operand.hbm [shape: f32[32,128], index: 5, kind: output, shape index: {}]
  %s6 = sld [smem:[#allocation0]]
  $region42: #{tpu_custom_call.1} parent=0
    _
  %s8 = ssub.s32 1, %s6
  %s9 = scalar_select 0, %s8, %s6
  $region1: #{tpu_custom_call.1} parent=0
    #allocation2 [shape = 'u8[16384]{0}', space=vmem, size = 0x4000, scoped, tag = 'input window, operand 0, single buffered']
    #allocation3 [shape = 's32[1]{0}', space=sflag, size = 0x4, scoped, tag = 'scoped memory for tpu_custom_call.1']
    #allocation4 [shape = 's32[1]{0}', space=sflag, size = 0x4, scoped, tag = 'scoped memory for tpu_custom_call.1']
    #allocation5 [shape = 'u8[65536]{0}', space=vmem, size = 0x10000, scoped, tag = 'input window, operand 1, single buffered']
    #allocation6 [shape = 's32[1]{0}', space=sflag, size = 0x4, scoped, tag = 'scoped memory for tpu_custom_call.1']
    #allocation7 [shape = 'u8[131072]{0}', space=vmem, size = 0x20000, scoped, tag = 'input window, operand 3, single buffered']
    #allocation8 [shape = 'u8[16384]{0}', space=vmem, size = 0x4000, scoped, tag = 'output window, operand 0, single buffered']
    %10 = vsyncpa [#allocation3], 0
    %11 = vsyncpa [#allocation6], 0
    %12 = vsyncpa [#allocation4], 0
    // Predicated region
    $region2: #{tpu_custom_call.1} parent=1 // pred_check
      _
    $region3: #{tpu_custom_call.1} parent=1 // pred_check_branch
      %14 = sbr.rel (0) target = $region5
    $region4: #{tpu_custom_call.1} parent=1 // pred_region
      %s16 = ssub.s32 512, 512
      %17 = vsyncadd [#allocation3], %s16
      %s18 = sshll.u32 [#allocation2], 4
      %s19 = int_to_ptr.vmem [resolvable:$true] %s18
      %24 = dma.hbm_to_vmem [thread:$0]  %s0, 512, %s19, [#allocation3], 128, 128, 8
    $region5: #{tpu_custom_call.1} parent=1 // pred_fallthru
      _
    // Predicated region
    $region6: #{tpu_custom_call.1} parent=1 // pred_check
      _
    $region7: #{tpu_custom_call.1} parent=1 // pred_check_branch
      %26 = sbr.rel (0) target = $region9
    $region8: #{tpu_custom_call.1} parent=1 // pred_region
      %s28 = ssub.s32 2048, 2048
      %29 = vsyncadd [#allocation6], %s28
      %s30 = sshll.u32 [#allocation5], 4
      %s31 = int_to_ptr.vmem [resolvable:$true] %s30
      %36 = dma.hbm_to_vmem [thread:$0]  %s1, 2048, %s31, [#allocation6], 256, 256, 16
    $region9: #{tpu_custom_call.1} parent=1 // pred_fallthru
      _
    // Predicated region
    $region10: #{tpu_custom_call.1} parent=1 // pred_check
      _
    $region11: #{tpu_custom_call.1} parent=1 // pred_check_branch
      %38 = sbr.rel (0) target = $region13
    $region12: #{tpu_custom_call.1} parent=1 // pred_region
      _
    $region13: #{tpu_custom_call.1} parent=1 // pred_fallthru
      _
    // Predicated region
    $region14: #{tpu_custom_call.1} parent=1 // pred_check
      _
    $region15: #{tpu_custom_call.1} parent=1 // pred_check_branch
      %40 = sbr.rel (0) target = $region17
    $region16: #{tpu_custom_call.1} parent=1 // pred_region
      %s42 = ssub.s32 4096, 4096
      %43 = vsyncadd [#allocation6], %s42
      %s44 = sshll.u32 [#allocation7], 4
      %s45 = int_to_ptr.vmem [resolvable:$true] %s44
      %50 = dma.hbm_to_vmem [thread:$0]  %s3, 4096, %s45, [#allocation6], 128, 128, 8
    $region17: #{tpu_custom_call.1} parent=1 // pred_fallthru
      _
    // Predicated region
    $region18: #{tpu_custom_call.1} parent=1 // pred_check
      _
    $region19: #{tpu_custom_call.1} parent=1 // pred_check_branch
      %52 = sbr.rel (0) target = $region21
    $region20: #{tpu_custom_call.1} parent=1 // pred_region
      _
    $region21: #{tpu_custom_call.1} parent=1 // pred_fallthru
      _
    // Predicated region
    $region22: #{tpu_custom_call.1} parent=1 // pred_check
      _
    $region23: #{tpu_custom_call.1} parent=1 // pred_check_branch
      %54 = sbr.rel (0) target = $region25
    $region24: #{tpu_custom_call.1} parent=1 // pred_region
      %55 = dma.done [#allocation3], 512
    $region25: #{tpu_custom_call.1} parent=1 // pred_fallthru
      _
    // Predicated region
    $region26: #{tpu_custom_call.1} parent=1 // pred_check
      _
    $region27: #{tpu_custom_call.1} parent=1 // pred_check_branch
      %57 = sbr.rel (0) target = $region29
    $region28: #{tpu_custom_call.1} parent=1 // pred_region
      %58 = dma.done [#allocation6], 2048
    $region29: #{tpu_custom_call.1} parent=1 // pred_fallthru
      _
    // Predicated region
    $region30: #{tpu_custom_call.1} parent=1 // pred_check
      _
    $region31: #{tpu_custom_call.1} parent=1 // pred_check_branch
      %60 = sbr.rel (0) target = $region33
    $region32: #{tpu_custom_call.1} parent=1 // pred_region
      %61 = dma.done [#allocation6], 4096
    $region33: #{tpu_custom_call.1} parent=1 // pred_fallthru
      _
    %v62 = vld [vmem:[#allocation2] sm:$0xff]
    %v63 = vld [vmem:[#allocation2 + $0x8] sm:$0xff]
    %v64 = vld [vmem:[#allocation2 + $0x10] sm:$0xff]
    %v65 = vld [vmem:[#allocation2 + $0x18] sm:$0xff]
    %v66 = vld [vmem:[#allocation5] sm:$0xff]
    %v67 = vld [vmem:[#allocation5 + $0x8] sm:$0xff]
    %v68 = vld [vmem:[#allocation5 + $0x10] sm:$0xff]
    %v69 = vld [vmem:[#allocation5 + $0x18] sm:$0xff]
    %v70 = vld [vmem:[#allocation5 + $0x20] sm:$0xff]
    %v71 = vld [vmem:[#allocation5 + $0x28] sm:$0xff]
    %v72 = vld [vmem:[#allocation5 + $0x30] sm:$0xff]
    %v73 = vld [vmem:[#allocation5 + $0x38] sm:$0xff]
    %v74 = vld [vmem:[#allocation5 + $0x40] sm:$0xff]
    %v75 = vld [vmem:[#allocation5 + $0x48] sm:$0xff]
    %v76 = vld [vmem:[#allocation5 + $0x50] sm:$0xff]
    %v77 = vld [vmem:[#allocation5 + $0x58] sm:$0xff]
    %v78 = vld [vmem:[#allocation5 + $0x60] sm:$0xff]
    %v79 = vld [vmem:[#allocation5 + $0x68] sm:$0xff]
    %v80 = vld [vmem:[#allocation5 + $0x70] sm:$0xff]
    %v81 = vld [vmem:[#allocation5 + $0x78] sm:$0xff]
    %v82 = vld [vmem:[%s2] sm:$0x3]
    %v84 = vlaneseq
    %v85 = vshrl.u32 %v84, 7
    %v86 = vsub.s32 0, %v85
    %v87 = vrot.slane %v82, %v86
    %v88 = vlaneseq
    %v89 = vshrl.u32 %v88, 7
    %v90 = vsub.s32 1, %v89
    %v91 = vrot.slane %v82, %v90
    %vm94 = vcmask 523264
    %v96 = vsel %vm94, %v62, 0
    %v99 = vsel %vm94, %v63, 0
    %v102 = vsel %vm94, %v64, 0
    %v105 = vsel %vm94, %v65, 0
    %v107 = vand.u32 %v67, 4294901760
    %108 = vmatprep.subr.mxu0 %v107
    %v109 = vand.u32 %v66, 4294901760
    %110 = vmatpush1.msra.mxu0 %v109
    %v111 = vand.u32 %v69, 4294901760
    %112 = vmatprep.subr.mxu0 %v111
    %v113 = vand.u32 %v68, 4294901760
    %114 = vmatpush1.msra.mxu0 %v113
    %v115 = vand.u32 %v71, 4294901760
    %116 = vmatprep.subr.mxu0 %v115
    %v117 = vand.u32 %v70, 4294901760
    %118 = vmatpush1.msra.mxu0 %v117
    %v119 = vand.u32 %v73, 4294901760
    %120 = vmatprep.subr.mxu0 %v119
    %v121 = vand.u32 %v72, 4294901760
    %122 = vmatpush1.msra.mxu0 %v121
    %v123 = vand.u32 %v75, 4294901760
    %124 = vmatprep.subr.mxu0 %v123
    %v125 = vand.u32 %v74, 4294901760
    %126 = vmatpush1.msra.mxu0 %v125
    %v127 = vand.u32 %v77, 4294901760
    %128 = vmatprep.subr.mxu0 %v127
    %v129 = vand.u32 %v76, 4294901760
    %130 = vmatpush1.msra.mxu0 %v129
    %v131 = vand.u32 %v79, 4294901760
    %132 = vmatprep.subr.mxu0 %v131
    %v133 = vand.u32 %v78, 4294901760
    %134 = vmatpush1.msra.mxu0 %v133
    %v135 = vand.u32 %v81, 4294901760
    %136 = vmatprep.subr.mxu0 %v135
    %v137 = vand.u32 %v80, 4294901760
    %138 = vmatpush1.msra.mxu0 %v137
    %139 = vmatprep.subr.mxu0 0.0
    %140 = vmatpush1.msra.mxu0 0.0
    %141 = vmatprep.subr.mxu0 0.0
    %142 = vmatpush1.msra.mxu0 0.0
    %143 = vmatprep.subr.mxu0 0.0
    %144 = vmatpush1.msra.mxu0 0.0
    %145 = vmatprep.subr.mxu0 0.0
    %146 = vmatpush1.msra.mxu0 0.0
    %147 = vmatprep.subr.mxu0 0.0
    %148 = vmatpush1.msra.mxu0 0.0
    %149 = vmatprep.subr.mxu0 0.0
    %150 = vmatpush1.msra.mxu0 0.0
    %151 = vmatprep.subr.mxu0 0.0
    %152 = vmatpush1.msra.mxu0 0.0
    %153 = vmatprep.subr.mxu0 0.0
    %154 = vmatpush1.msra.mxu0 0.0
    %155 = vmatprep.subr.mxu0 0.0
    %156 = vmatpush1.msra.mxu0 0.0
    %157 = vmatprep.subr.mxu0 0.0
    %158 = vmatpush1.msra.mxu0 0.0
    %159 = vmatprep.subr.mxu0 0.0
    %160 = vmatpush1.msra.mxu0 0.0
    %161 = vmatprep.subr.mxu0 0.0
    %162 = vmatpush1.msra.mxu0 0.0
    %163 = vmatprep.subr.mxu0 0.0
    %164 = vmatpush1.msra.mxu0 0.0
    %165 = vmatprep.subr.mxu0 0.0
    %166 = vmatpush1.msra.mxu0 0.0
    %167 = vmatprep.subr.mxu0 0.0
    %168 = vmatpush1.msra.mxu0 0.0
    %169 = vmatprep.subr.mxu0 0.0
    %170 = vmatpush1.msra.mxu0 0.0
    %171 = vmatprep.subr.mxu0 0.0
    %172 = vmatpush1.msra.mxu0 0.0
    %173 = vmatprep.subr.mxu0 0.0
    %174 = vmatpush1.msra.mxu0 0.0
    %175 = vmatprep.subr.mxu0 0.0
    %176 = vmatpush1.msra.mxu0 0.0
    %177 = vmatprep.subr.mxu0 0.0
    %178 = vmatpush1.msra.mxu0 0.0
    %179 = vmatprep.subr.mxu0 0.0
    %180 = vmatpush1.msra.mxu0 0.0
    %181 = vmatprep.subr.mxu0 0.0
    %182 = vmatpush1.msra.mxu0 0.0
    %183 = vmatprep.subr.mxu0 0.0
    %184 = vmatpush1.msra.mxu0 0.0
    %185 = vmatprep.subr.mxu0 0.0
    %186 = vmatpush1.msra.mxu0 0.0
    %187 = vmatprep.mubr.f32.mxu0 0.0
    %v188 = vand.u32 %v96, 4294901760
    %v189 = vsub.f32 %v96, %v188
    %v190 = vand.u32 %v189, 4294901760
    %v191 = vsub.f32 %v189, %v190
    %v192 = vand.u32 %v191, 4294901760
    %193 = vmatmul.mubr.f32.gmra.mrb[0].mxu0 %v192
    %v194 = vpop.f32.mrb[0].mxu0
    %v195 = vadd.f32 %v87, %v194
    %v196 = vpop.f32.mrb[0].mxu0
    %v197 = vadd.f32 %v91, %v196
    %198 = vmatprep.mubr.f32.mxu0 0.0
    %v199 = vand.u32 %v99, 4294901760
    %v200 = vsub.f32 %v99, %v199
    %v201 = vand.u32 %v200, 4294901760
    %v202 = vsub.f32 %v200, %v201
    %v203 = vand.u32 %v202, 4294901760
    %204 = vmatmul.mubr.f32.gmra.mrb[0].mxu0 %v203
    %v205 = vpop.f32.mrb[0].mxu0
    %v206 = vadd.f32 %v87, %v205
    %v207 = vpop.f32.mrb[0].mxu0
    %v208 = vadd.f32 %v91, %v207
    %209 = vmatprep.mubr.f32.mxu0 0.0
    %v210 = vand.u32 %v102, 4294901760
    %v211 = vsub.f32 %v102, %v210
    %v212 = vand.u32 %v211, 4294901760
    %v213 = vsub.f32 %v211, %v212
    %v214 = vand.u32 %v213, 4294901760
    %215 = vmatmul.mubr.f32.gmra.mrb[0].mxu0 %v214
    %v216 = vpop.f32.mrb[0].mxu0
    %v217 = vadd.f32 %v87, %v216
    %v218 = vpop.f32.mrb[0].mxu0
    %v219 = vadd.f32 %v91, %v218
    %220 = vmatprep.mubr.f32.mxu0 0.0
    %v221 = vand.u32 %v105, 4294901760
    %v222 = vsub.f32 %v105, %v221
    %v223 = vand.u32 %v222, 4294901760
    %v224 = vsub.f32 %v222, %v223
    %v225 = vand.u32 %v224, 4294901760
    %226 = vmatmul.mubr.f32.gmra.mrb[0].mxu0 %v225
    %v227 = vpop.f32.mrb[0].mxu0
    %v228 = vadd.f32 %v87, %v227
    %v229 = vpop.f32.mrb[0].mxu0
    %v230 = vadd.f32 %v91, %v229
    %231 = vdwg.mxu0
    %v232 = vand.u32 %v67, 4294901760
    %v233 = vsub.f32 %v67, %v232
    %v234 = vand.u32 %v233, 4294901760
    %v235 = vsub.f32 %v233, %v234
    %v236 = vand.u32 %v235, 4294901760
    %237 = vmatprep.subr.mxu0 %v236
    %v238 = vand.u32 %v66, 4294901760
    %v239 = vsub.f32 %v66, %v238
    %v240 = vand.u32 %v239, 4294901760
    %v241 = vsub.f32 %v239, %v240
    %v242 = vand.u32 %v241, 4294901760
    %243 = vmatpush1.msra.mxu0 %v242
    %v244 = vand.u32 %v69, 4294901760
    %v245 = vsub.f32 %v69, %v244
    %v246 = vand.u32 %v245, 4294901760
    %v247 = vsub.f32 %v245, %v246
    %v248 = vand.u32 %v247, 4294901760
    %249 = vmatprep.subr.mxu0 %v248
    %v250 = vand.u32 %v68, 4294901760
    %v251 = vsub.f32 %v68, %v250
    %v252 = vand.u32 %v251, 4294901760
    %v253 = vsub.f32 %v251, %v252
    %v254 = vand.u32 %v253, 4294901760
    %255 = vmatpush1.msra.mxu0 %v254
    %v256 = vand.u32 %v71, 4294901760
    %v257 = vsub.f32 %v71, %v256
    %v258 = vand.u32 %v257, 4294901760
    %v259 = vsub.f32 %v257, %v258
    %v260 = vand.u32 %v259, 4294901760
    %261 = vmatprep.subr.mxu0 %v260
    %v262 = vand.u32 %v70, 4294901760
    %v263 = vsub.f32 %v70, %v262
    %v264 = vand.u32 %v263, 4294901760
    %v265 = vsub.f32 %v263, %v264
    %v266 = vand.u32 %v265, 4294901760
    %267 = vmatpush1.msra.mxu0 %v266
    %v268 = vand.u32 %v73, 4294901760
    %v269 = vsub.f32 %v73, %v268
    %v270 = vand.u32 %v269, 4294901760
    %v271 = vsub.f32 %v269, %v270
    %v272 = vand.u32 %v271, 4294901760
    %273 = vmatprep.subr.mxu0 %v272
    %v274 = vand.u32 %v72, 4294901760
    %v275 = vsub.f32 %v72, %v274
    %v276 = vand.u32 %v275, 4294901760
    %v277 = vsub.f32 %v275, %v276
    %v278 = vand.u32 %v277, 4294901760
    %279 = vmatpush1.msra.mxu0 %v278
    %v280 = vand.u32 %v75, 4294901760
    %v281 = vsub.f32 %v75, %v280
    %v282 = vand.u32 %v281, 4294901760
    %v283 = vsub.f32 %v281, %v282
    %v284 = vand.u32 %v283, 4294901760
    %285 = vmatprep.subr.mxu0 %v284
    %v286 = vand.u32 %v74, 4294901760
    %v287 = vsub.f32 %v74, %v286
    %v288 = vand.u32 %v287, 4294901760
    %v289 = vsub.f32 %v287, %v288
    %v290 = vand.u32 %v289, 4294901760
    %291 = vmatpush1.msra.mxu0 %v290
    %v292 = vand.u32 %v77, 4294901760
    %v293 = vsub.f32 %v77, %v292
    %v294 = vand.u32 %v293, 4294901760
    %v295 = vsub.f32 %v293, %v294
    %v296 = vand.u32 %v295, 4294901760
    %297 = vmatprep.subr.mxu0 %v296
    %v298 = vand.u32 %v76, 4294901760
    %v299 = vsub.f32 %v76, %v298
    %v300 = vand.u32 %v299, 4294901760
    %v301 = vsub.f32 %v299, %v300
    %v302 = vand.u32 %v301, 4294901760
    %303 = vmatpush1.msra.mxu0 %v302
    %v304 = vand.u32 %v79, 4294901760
    %v305 = vsub.f32 %v79, %v304
    %v306 = vand.u32 %v305, 4294901760
    %v307 = vsub.f32 %v305, %v306
    %v308 = vand.u32 %v307, 4294901760
    %309 = vmatprep.subr.mxu0 %v308
    %v310 = vand.u32 %v78, 4294901760
    %v311 = vsub.f32 %v78, %v310
    %v312 = vand.u32 %v311, 4294901760
    %v313 = vsub.f32 %v311, %v312
    %v314 = vand.u32 %v313, 4294901760
    %315 = vmatpush1.msra.mxu0 %v314
    %v316 = vand.u32 %v81, 4294901760
    %v317 = vsub.f32 %v81, %v316
    %v318 = vand.u32 %v317, 4294901760
    %v319 = vsub.f32 %v317, %v318
    %v320 = vand.u32 %v319, 4294901760
    %321 = vmatprep.subr.mxu0 %v320
    %v322 = vand.u32 %v80, 4294901760
    %v323 = vsub.f32 %v80, %v322
    %v324 = vand.u32 %v323, 4294901760
    %v325 = vsub.f32 %v323, %v324
    %v326 = vand.u32 %v325, 4294901760
    %327 = vmatpush1.msra.mxu0 %v326
    %328 = vmatprep.subr.mxu0 0.0
    %329 = vmatpush1.msra.mxu0 0.0
    %330 = vmatprep.subr.mxu0 0.0
    %331 = vmatpush1.msra.mxu0 0.0
    %332 = vmatprep.subr.mxu0 0.0
    %333 = vmatpush1.msra.mxu0 0.0
    %334 = vmatprep.subr.mxu0 0.0
    %335 = vmatpush1.msra.mxu0 0.0
    %336 = vmatprep.subr.mxu0 0.0
    %337 = vmatpush1.msra.mxu0 0.0
    %338 = vmatprep.subr.mxu0 0.0
    %339 = vmatpush1.msra.mxu0 0.0
    %340 = vmatprep.subr.mxu0 0.0
    %341 = vmatpush1.msra.mxu0 0.0
    %342 = vmatprep.subr.mxu0 0.0
    %343 = vmatpush1.msra.mxu0 0.0
    %344 = vmatprep.subr.mxu0 0.0
    %345 = vmatpush1.msra.mxu0 0.0
    %346 = vmatprep.subr.mxu0 0.0
    %347 = vmatpush1.msra.mxu0 0.0
    %348 = vmatprep.subr.mxu0 0.0
    %349 = vmatpush1.msra.mxu0 0.0
    %350 = vmatprep.subr.mxu0 0.0
    %351 = vmatpush1.msra.mxu0 0.0
    %352 = vmatprep.subr.mxu0 0.0
    %353 = vmatpush1.msra.mxu0 0.0
    %354 = vmatprep.subr.mxu0 0.0
    %355 = vmatpush1.msra.mxu0 0.0
    %356 = vmatprep.subr.mxu0 0.0
    %357 = vmatpush1.msra.mxu0 0.0
    %358 = vmatprep.subr.mxu0 0.0
    %359 = vmatpush1.msra.mxu0 0.0
    %360 = vmatprep.subr.mxu0 0.0
    %361 = vmatpush1.msra.mxu0 0.0
    %362 = vmatprep.subr.mxu0 0.0
    %363 = vmatpush1.msra.mxu0 0.0
    %364 = vmatprep.subr.mxu0 0.0
    %365 = vmatpush1.msra.mxu0 0.0
    %366 = vmatprep.subr.mxu0 0.0
    %367 = vmatpush1.msra.mxu0 0.0
    %368 = vmatprep.subr.mxu0 0.0
    %369 = vmatpush1.msra.mxu0 0.0
    %370 = vmatprep.subr.mxu0 0.0
    %371 = vmatpush1.msra.mxu0 0.0
    %372 = vmatprep.subr.mxu0 0.0
    %373 = vmatpush1.msra.mxu0 0.0
    %374 = vmatprep.subr.mxu0 0.0
    %375 = vmatpush1.msra.mxu0 0.0
    %376 = vmatprep.mubr.f32.mxu0 0.0
    %v377 = vand.u32 %v96, 4294901760
    %378 = vmatmul.mubr.f32.gmra.mrb[0].mxu0 %v377
    %v379 = vpop.f32.mrb[0].mxu0
    %v380 = vadd.f32 %v195, %v379
    %v381 = vpop.f32.mrb[0].mxu0
    %v382 = vadd.f32 %v197, %v381
    %383 = vmatprep.mubr.f32.mxu0 0.0
    %v384 = vand.u32 %v99, 4294901760
    %385 = vmatmul.mubr.f32.gmra.mrb[0].mxu0 %v384
    %v386 = vpop.f32.mrb[0].mxu0
    %v387 = vadd.f32 %v206, %v386
    %v388 = vpop.f32.mrb[0].mxu0
    %v389 = vadd.f32 %v208, %v388
    %390 = vmatprep.mubr.f32.mxu0 0.0
    %v391 = vand.u32 %v102, 4294901760
    %392 = vmatmul.mubr.f32.gmra.mrb[0].mxu0 %v391
    %v393 = vpop.f32.mrb[0].mxu0
    %v394 = vadd.f32 %v217, %v393
    %v395 = vpop.f32.mrb[0].mxu0
    %v396 = vadd.f32 %v219, %v395
    %397 = vmatprep.mubr.f32.mxu0 0.0
    %v398 = vand.u32 %v105, 4294901760
    %399 = vmatmul.mubr.f32.gmra.mrb[0].mxu0 %v398
    %v400 = vpop.f32.mrb[0].mxu0
    %v401 = vadd.f32 %v228, %v400
    %v402 = vpop.f32.mrb[0].mxu0
    %v403 = vadd.f32 %v230, %v402
    %404 = vdwg.mxu0
    %v405 = vand.u32 %v67, 4294901760
    %v406 = vsub.f32 %v67, %v405
    %407 = vmatprep.subr.mxu0 %v406
    %v408 = vand.u32 %v66, 4294901760
    %v409 = vsub.f32 %v66, %v408
    %410 = vmatpush1.msra.mxu0 %v409
    %v411 = vand.u32 %v69, 4294901760
    %v412 = vsub.f32 %v69, %v411
    %413 = vmatprep.subr.mxu0 %v412
    %v414 = vand.u32 %v68, 4294901760
    %v415 = vsub.f32 %v68, %v414
    %416 = vmatpush1.msra.mxu0 %v415
    %v417 = vand.u32 %v71, 4294901760
    %v418 = vsub.f32 %v71, %v417
    %419 = vmatprep.subr.mxu0 %v418
    %v420 = vand.u32 %v70, 4294901760
    %v421 = vsub.f32 %v70, %v420
    %422 = vmatpush1.msra.mxu0 %v421
    %v423 = vand.u32 %v73, 4294901760
    %v424 = vsub.f32 %v73, %v423
    %425 = vmatprep.subr.mxu0 %v424
    %v426 = vand.u32 %v72, 4294901760
    %v427 = vsub.f32 %v72, %v426
    %428 = vmatpush1.msra.mxu0 %v427
    %v429 = vand.u32 %v75, 4294901760
    %v430 = vsub.f32 %v75, %v429
    %431 = vmatprep.subr.mxu0 %v430
    %v432 = vand.u32 %v74, 4294901760
    %v433 = vsub.f32 %v74, %v432
    %434 = vmatpush1.msra.mxu0 %v433
    %v435 = vand.u32 %v77, 4294901760
    %v436 = vsub.f32 %v77, %v435
    %437 = vmatprep.subr.mxu0 %v436
    %v438 = vand.u32 %v76, 4294901760
    %v439 = vsub.f32 %v76, %v438
    %440 = vmatpush1.msra.mxu0 %v439
    %v441 = vand.u32 %v79, 4294901760
    %v442 = vsub.f32 %v79, %v441
    %443 = vmatprep.subr.mxu0 %v442
    %v444 = vand.u32 %v78, 4294901760
    %v445 = vsub.f32 %v78, %v444
    %446 = vmatpush1.msra.mxu0 %v445
    %v447 = vand.u32 %v81, 4294901760
    %v448 = vsub.f32 %v81, %v447
    %449 = vmatprep.subr.mxu0 %v448
    %v450 = vand.u32 %v80, 4294901760
    %v451 = vsub.f32 %v80, %v450
    %452 = vmatpush1.msra.mxu0 %v451
    %453 = vmatprep.subr.mxu0 0.0
    %454 = vmatpush1.msra.mxu0 0.0
    %455 = vmatprep.subr.mxu0 0.0
    %456 = vmatpush1.msra.mxu0 0.0
    %457 = vmatprep.subr.mxu0 0.0
    %458 = vmatpush1.msra.mxu0 0.0
    %459 = vmatprep.subr.mxu0 0.0
    %460 = vmatpush1.msra.mxu0 0.0
    %461 = vmatprep.subr.mxu0 0.0
    %462 = vmatpush1.msra.mxu0 0.0
    %463 = vmatprep.subr.mxu0 0.0
    %464 = vmatpush1.msra.mxu0 0.0
    %465 = vmatprep.subr.mxu0 0.0
    %466 = vmatpush1.msra.mxu0 0.0
    %467 = vmatprep.subr.mxu0 0.0
    %468 = vmatpush1.msra.mxu0 0.0
    %469 = vmatprep.subr.mxu0 0.0
    %470 = vmatpush1.msra.mxu0 0.0
    %471 = vmatprep.subr.mxu0 0.0
    %472 = vmatpush1.msra.mxu0 0.0
    %473 = vmatprep.subr.mxu0 0.0
    %474 = vmatpush1.msra.mxu0 0.0
    %475 = vmatprep.subr.mxu0 0.0
    %476 = vmatpush1.msra.mxu0 0.0
    %477 = vmatprep.subr.mxu0 0.0
    %478 = vmatpush1.msra.mxu0 0.0
    %479 = vmatprep.subr.mxu0 0.0
    %480 = vmatpush1.msra.mxu0 0.0
    %481 = vmatprep.subr.mxu0 0.0
    %482 = vmatpush1.msra.mxu0 0.0
    %483 = vmatprep.subr.mxu0 0.0
    %484 = vmatpush1.msra.mxu0 0.0
    %485 = vmatprep.subr.mxu0 0.0
    %486 = vmatpush1.msra.mxu0 0.0
    %487 = vmatprep.subr.mxu0 0.0
    %488 = vmatpush1.msra.mxu0 0.0
    %489 = vmatprep.subr.mxu0 0.0
    %490 = vmatpush1.msra.mxu0 0.0
    %491 = vmatprep.subr.mxu0 0.0
    %492 = vmatpush1.msra.mxu0 0.0
    %493 = vmatprep.subr.mxu0 0.0
    %494 = vmatpush1.msra.mxu0 0.0
    %495 = vmatprep.subr.mxu0 0.0
    %496 = vmatpush1.msra.mxu0 0.0
    %497 = vmatprep.subr.mxu0 0.0
    %498 = vmatpush1.msra.mxu0 0.0
    %499 = vmatprep.subr.mxu0 0.0
    %500 = vmatpush1.msra.mxu0 0.0
    %501 = vmatprep.mubr.f32.mxu0 0.0
    %v502 = vand.u32 %v96, 4294901760
    %v503 = vsub.f32 %v96, %v502
    %504 = vmatmul.mubr.f32.gmra.mrb[0].mxu0 %v503
    %v505 = vpop.f32.mrb[0].mxu0
    %v506 = vadd.f32 %v380, %v505
    %v507 = vpop.f32.mrb[0].mxu0
    %v508 = vadd.f32 %v382, %v507
    %509 = vmatprep.mubr.f32.mxu0 0.0
    %v510 = vand.u32 %v99, 4294901760
    %v511 = vsub.f32 %v99, %v510
    %512 = vmatmul.mubr.f32.gmra.mrb[0].mxu0 %v511
    %v513 = vpop.f32.mrb[0].mxu0
    %v514 = vadd.f32 %v387, %v513
    %v515 = vpop.f32.mrb[0].mxu0
    %v516 = vadd.f32 %v389, %v515
    %517 = vmatprep.mubr.f32.mxu0 0.0
    %v518 = vand.u32 %v102, 4294901760
    %v519 = vsub.f32 %v102, %v518
    %520 = vmatmul.mubr.f32.gmra.mrb[0].mxu0 %v519
    %v521 = vpop.f32.mrb[0].mxu0
    %v522 = vadd.f32 %v394, %v521
    %v523 = vpop.f32.mrb[0].mxu0
    %v524 = vadd.f32 %v396, %v523
    %525 = vmatprep.mubr.f32.mxu0 0.0
    %v526 = vand.u32 %v105, 4294901760
    %v527 = vsub.f32 %v105, %v526
    %528 = vmatmul.mubr.f32.gmra.mrb[0].mxu0 %v527
    %v529 = vpop.f32.mrb[0].mxu0
    %v530 = vadd.f32 %v401, %v529
    %v531 = vpop.f32.mrb[0].mxu0
    %v532 = vadd.f32 %v403, %v531
    %533 = vdwg.mxu0
    %v534 = vand.u32 %v67, 4294901760
    %535 = vmatprep.subr.mxu0 %v534
    %v536 = vand.u32 %v66, 4294901760
    %537 = vmatpush1.msra.mxu0 %v536
    %v538 = vand.u32 %v69, 4294901760
    %539 = vmatprep.subr.mxu0 %v538
    %v540 = vand.u32 %v68, 4294901760
    %541 = vmatpush1.msra.mxu0 %v540
    %v542 = vand.u32 %v71, 4294901760
    %543 = vmatprep.subr.mxu0 %v542
    %v544 = vand.u32 %v70, 4294901760
    %545 = vmatpush1.msra.mxu0 %v544
    %v546 = vand.u32 %v73, 4294901760
    %547 = vmatprep.subr.mxu0 %v546
    %v548 = vand.u32 %v72, 4294901760
    %549 = vmatpush1.msra.mxu0 %v548
    %v550 = vand.u32 %v75, 4294901760
    %551 = vmatprep.subr.mxu0 %v550
    %v552 = vand.u32 %v74, 4294901760
    %553 = vmatpush1.msra.mxu0 %v552
    %v554 = vand.u32 %v77, 4294901760
    %555 = vmatprep.subr.mxu0 %v554
    %v556 = vand.u32 %v76, 4294901760
    %557 = vmatpush1.msra.mxu0 %v556
    %v558 = vand.u32 %v79, 4294901760
    %559 = vmatprep.subr.mxu0 %v558
    %v560 = vand.u32 %v78, 4294901760
    %561 = vmatpush1.msra.mxu0 %v560
    %v562 = vand.u32 %v81, 4294901760
    %563 = vmatprep.subr.mxu0 %v562
    %v564 = vand.u32 %v80, 4294901760
    %565 = vmatpush1.msra.mxu0 %v564
    %566 = vmatprep.subr.mxu0 0.0
    %567 = vmatpush1.msra.mxu0 0.0
    %568 = vmatprep.subr.mxu0 0.0
    %569 = vmatpush1.msra.mxu0 0.0
    %570 = vmatprep.subr.mxu0 0.0
    %571 = vmatpush1.msra.mxu0 0.0
    %572 = vmatprep.subr.mxu0 0.0
    %573 = vmatpush1.msra.mxu0 0.0
    %574 = vmatprep.subr.mxu0 0.0
    %575 = vmatpush1.msra.mxu0 0.0
    %576 = vmatprep.subr.mxu0 0.0
    %577 = vmatpush1.msra.mxu0 0.0
    %578 = vmatprep.subr.mxu0 0.0
    %579 = vmatpush1.msra.mxu0 0.0
    %580 = vmatprep.subr.mxu0 0.0
    %581 = vmatpush1.msra.mxu0 0.0
    %582 = vmatprep.subr.mxu0 0.0
    %583 = vmatpush1.msra.mxu0 0.0
    %584 = vmatprep.subr.mxu0 0.0
    %585 = vmatpush1.msra.mxu0 0.0
    %586 = vmatprep.subr.mxu0 0.0
    %587 = vmatpush1.msra.mxu0 0.0
    %588 = vmatprep.subr.mxu0 0.0
    %589 = vmatpush1.msra.mxu0 0.0
    %590 = vmatprep.subr.mxu0 0.0
    %591 = vmatpush1.msra.mxu0 0.0
    %592 = vmatprep.subr.mxu0 0.0
    %593 = vmatpush1.msra.mxu0 0.0
    %594 = vmatprep.subr.mxu0 0.0
    %595 = vmatpush1.msra.mxu0 0.0
    %596 = vmatprep.subr.mxu0 0.0
    %597 = vmatpush1.msra.mxu0 0.0
    %598 = vmatprep.subr.mxu0 0.0
    %599 = vmatpush1.msra.mxu0 0.0
    %600 = vmatprep.subr.mxu0 0.0
    %601 = vmatpush1.msra.mxu0 0.0
    %602 = vmatprep.subr.mxu0 0.0
    %603 = vmatpush1.msra.mxu0 0.0
    %604 = vmatprep.subr.mxu0 0.0
    %605 = vmatpush1.msra.mxu0 0.0
    %606 = vmatprep.subr.mxu0 0.0
    %607 = vmatpush1.msra.mxu0 0.0
    %608 = vmatprep.subr.mxu0 0.0
    %609 = vmatpush1.msra.mxu0 0.0
    %610 = vmatprep.subr.mxu0 0.0
    %611 = vmatpush1.msra.mxu0 0.0
    %612 = vmatprep.subr.mxu0 0.0
    %613 = vmatpush1.msra.mxu0 0.0
    %614 = vmatprep.mubr.f32.mxu0 0.0
    %v615 = vand.u32 %v96, 4294901760
    %v616 = vsub.f32 %v96, %v615
    %v617 = vand.u32 %v616, 4294901760
    %618 = vmatmul.mubr.f32.gmra.mrb[0].mxu0 %v617
    %v619 = vpop.f32.mrb[0].mxu0
    %v620 = vadd.f32 %v506, %v619
    %v621 = vpop.f32.mrb[0].mxu0
    %v622 = vadd.f32 %v508, %v621
    %623 = vmatprep.mubr.f32.mxu0 0.0
    %v624 = vand.u32 %v99, 4294901760
    %v625 = vsub.f32 %v99, %v624
    %v626 = vand.u32 %v625, 4294901760
    %627 = vmatmul.mubr.f32.gmra.mrb[0].mxu0 %v626
    %v628 = vpop.f32.mrb[0].mxu0
    %v629 = vadd.f32 %v514, %v628
    %v630 = vpop.f32.mrb[0].mxu0
    %v631 = vadd.f32 %v516, %v630
    %632 = vmatprep.mubr.f32.mxu0 0.0
    %v633 = vand.u32 %v102, 4294901760
    %v634 = vsub.f32 %v102, %v633
    %v635 = vand.u32 %v634, 4294901760
    %636 = vmatmul.mubr.f32.gmra.mrb[0].mxu0 %v635
    %v637 = vpop.f32.mrb[0].mxu0
    %v638 = vadd.f32 %v522, %v637
    %v639 = vpop.f32.mrb[0].mxu0
    %v640 = vadd.f32 %v524, %v639
    %641 = vmatprep.mubr.f32.mxu0 0.0
    %v642 = vand.u32 %v105, 4294901760
    %v643 = vsub.f32 %v105, %v642
    %v644 = vand.u32 %v643, 4294901760
    %645 = vmatmul.mubr.f32.gmra.mrb[0].mxu0 %v644
    %v646 = vpop.f32.mrb[0].mxu0
    %v647 = vadd.f32 %v530, %v646
    %v648 = vpop.f32.mrb[0].mxu0
    %v649 = vadd.f32 %v532, %v648
    %650 = vdwg.mxu0
    %v651 = vand.u32 %v67, 4294901760
    %v652 = vsub.f32 %v67, %v651
    %v653 = vand.u32 %v652, 4294901760
    %654 = vmatprep.subr.mxu0 %v653
    %v655 = vand.u32 %v66, 4294901760
    %v656 = vsub.f32 %v66, %v655
    %v657 = vand.u32 %v656, 4294901760
    %658 = vmatpush1.msra.mxu0 %v657
    %v659 = vand.u32 %v69, 4294901760
    %v660 = vsub.f32 %v69, %v659
    %v661 = vand.u32 %v660, 4294901760
    %662 = vmatprep.subr.mxu0 %v661
    %v663 = vand.u32 %v68, 4294901760
    %v664 = vsub.f32 %v68, %v663
    %v665 = vand.u32 %v664, 4294901760
    %666 = vmatpush1.msra.mxu0 %v665
    %v667 = vand.u32 %v71, 4294901760
    %v668 = vsub.f32 %v71, %v667
    %v669 = vand.u32 %v668, 4294901760
    %670 = vmatprep.subr.mxu0 %v669
    %v671 = vand.u32 %v70, 4294901760
    %v672 = vsub.f32 %v70, %v671
    %v673 = vand.u32 %v672, 4294901760
    %674 = vmatpush1.msra.mxu0 %v673
    %v675 = vand.u32 %v73, 4294901760
    %v676 = vsub.f32 %v73, %v675
    %v677 = vand.u32 %v676, 4294901760
    %678 = vmatprep.subr.mxu0 %v677
    %v679 = vand.u32 %v72, 4294901760
    %v680 = vsub.f32 %v72, %v679
    %v681 = vand.u32 %v680, 4294901760
    %682 = vmatpush1.msra.mxu0 %v681
    %v683 = vand.u32 %v75, 4294901760
    %v684 = vsub.f32 %v75, %v683
    %v685 = vand.u32 %v684, 4294901760
    %686 = vmatprep.subr.mxu0 %v685
    %v687 = vand.u32 %v74, 4294901760
    %v688 = vsub.f32 %v74, %v687
    %v689 = vand.u32 %v688, 4294901760
    %690 = vmatpush1.msra.mxu0 %v689
    %v691 = vand.u32 %v77, 4294901760
    %v692 = vsub.f32 %v77, %v691
    %v693 = vand.u32 %v692, 4294901760
    %694 = vmatprep.subr.mxu0 %v693
    %v695 = vand.u32 %v76, 4294901760
    %v696 = vsub.f32 %v76, %v695
    %v697 = vand.u32 %v696, 4294901760
    %698 = vmatpush1.msra.mxu0 %v697
    %v699 = vand.u32 %v79, 4294901760
    %v700 = vsub.f32 %v79, %v699
    %v701 = vand.u32 %v700, 4294901760
    %702 = vmatprep.subr.mxu0 %v701
    %v703 = vand.u32 %v78, 4294901760
    %v704 = vsub.f32 %v78, %v703
    %v705 = vand.u32 %v704, 4294901760
    %706 = vmatpush1.msra.mxu0 %v705
    %v707 = vand.u32 %v81, 4294901760
    %v708 = vsub.f32 %v81, %v707
    %v709 = vand.u32 %v708, 4294901760
    %710 = vmatprep.subr.mxu0 %v709
    %v711 = vand.u32 %v80, 4294901760
    %v712 = vsub.f32 %v80, %v711
    %v713 = vand.u32 %v712, 4294901760
    %714 = vmatpush1.msra.mxu0 %v713
    %715 = vmatprep.subr.mxu0 0.0
    %716 = vmatpush1.msra.mxu0 0.0
    %717 = vmatprep.subr.mxu0 0.0
    %718 = vmatpush1.msra.mxu0 0.0
    %719 = vmatprep.subr.mxu0 0.0
    %720 = vmatpush1.msra.mxu0 0.0
    %721 = vmatprep.subr.mxu0 0.0
    %722 = vmatpush1.msra.mxu0 0.0
    %723 = vmatprep.subr.mxu0 0.0
    %724 = vmatpush1.msra.mxu0 0.0
    %725 = vmatprep.subr.mxu0 0.0
    %726 = vmatpush1.msra.mxu0 0.0
    %727 = vmatprep.subr.mxu0 0.0
    %728 = vmatpush1.msra.mxu0 0.0
    %729 = vmatprep.subr.mxu0 0.0
    %730 = vmatpush1.msra.mxu0 0.0
    %731 = vmatprep.subr.mxu0 0.0
    %732 = vmatpush1.msra.mxu0 0.0
    %733 = vmatprep.subr.mxu0 0.0
    %734 = vmatpush1.msra.mxu0 0.0
    %735 = vmatprep.subr.mxu0 0.0
    %736 = vmatpush1.msra.mxu0 0.0
    %737 = vmatprep.subr.mxu0 0.0
    %738 = vmatpush1.msra.mxu0 0.0
    %739 = vmatprep.subr.mxu0 0.0
    %740 = vmatpush1.msra.mxu0 0.0
    %741 = vmatprep.subr.mxu0 0.0
    %742 = vmatpush1.msra.mxu0 0.0
    %743 = vmatprep.subr.mxu0 0.0
    %744 = vmatpush1.msra.mxu0 0.0
    %745 = vmatprep.subr.mxu0 0.0
    %746 = vmatpush1.msra.mxu0 0.0
    %747 = vmatprep.subr.mxu0 0.0
    %748 = vmatpush1.msra.mxu0 0.0
    %749 = vmatprep.subr.mxu0 0.0
    %750 = vmatpush1.msra.mxu0 0.0
    %751 = vmatprep.subr.mxu0 0.0
    %752 = vmatpush1.msra.mxu0 0.0
    %753 = vmatprep.subr.mxu0 0.0
    %754 = vmatpush1.msra.mxu0 0.0
    %755 = vmatprep.subr.mxu0 0.0
    %756 = vmatpush1.msra.mxu0 0.0
    %757 = vmatprep.subr.mxu0 0.0
    %758 = vmatpush1.msra.mxu0 0.0
    %759 = vmatprep.subr.mxu0 0.0
    %760 = vmatpush1.msra.mxu0 0.0
    %761 = vmatprep.subr.mxu0 0.0
    %762 = vmatpush1.msra.mxu0 0.0
    %763 = vmatprep.mubr.f32.mxu0 0.0
    %v764 = vand.u32 %v96, 4294901760
    %765 = vmatmul.mubr.f32.gmra.mrb[0].mxu0 %v764
    %v766 = vpop.f32.mrb[0].mxu0
    %v767 = vadd.f32 %v620, %v766
    %v768 = vpop.f32.mrb[0].mxu0
    %v769 = vadd.f32 %v622, %v768
    %770 = vmatprep.mubr.f32.mxu0 0.0
    %v771 = vand.u32 %v99, 4294901760
    %772 = vmatmul.mubr.f32.gmra.mrb[0].mxu0 %v771
    %v773 = vpop.f32.mrb[0].mxu0
    %v774 = vadd.f32 %v629, %v773
    %v775 = vpop.f32.mrb[0].mxu0
    %v776 = vadd.f32 %v631, %v775
    %777 = vmatprep.mubr.f32.mxu0 0.0
    %v778 = vand.u32 %v102, 4294901760
    %779 = vmatmul.mubr.f32.gmra.mrb[0].mxu0 %v778
    %v780 = vpop.f32.mrb[0].mxu0
    %v781 = vadd.f32 %v638, %v780
    %v782 = vpop.f32.mrb[0].mxu0
    %v783 = vadd.f32 %v640, %v782
    %784 = vmatprep.mubr.f32.mxu0 0.0
    %v785 = vand.u32 %v105, 4294901760
    %786 = vmatmul.mubr.f32.gmra.mrb[0].mxu0 %v785
    %v787 = vpop.f32.mrb[0].mxu0
    %v788 = vadd.f32 %v647, %v787
    %v789 = vpop.f32.mrb[0].mxu0
    %v790 = vadd.f32 %v649, %v789
    %791 = vdwg.mxu0
    %v792 = vand.u32 %v67, 4294901760
    %793 = vmatprep.subr.mxu0 %v792
    %v794 = vand.u32 %v66, 4294901760
    %795 = vmatpush1.msra.mxu0 %v794
    %v796 = vand.u32 %v69, 4294901760
    %797 = vmatprep.subr.mxu0 %v796
    %v798 = vand.u32 %v68, 4294901760
    %799 = vmatpush1.msra.mxu0 %v798
    %v800 = vand.u32 %v71, 4294901760
    %801 = vmatprep.subr.mxu0 %v800
    %v802 = vand.u32 %v70, 4294901760
    %803 = vmatpush1.msra.mxu0 %v802
    %v804 = vand.u32 %v73, 4294901760
    %805 = vmatprep.subr.mxu0 %v804
    %v806 = vand.u32 %v72, 4294901760
    %807 = vmatpush1.msra.mxu0 %v806
    %v808 = vand.u32 %v75, 4294901760
    %809 = vmatprep.subr.mxu0 %v808
    %v810 = vand.u32 %v74, 4294901760
    %811 = vmatpush1.msra.mxu0 %v810
    %v812 = vand.u32 %v77, 4294901760
    %813 = vmatprep.subr.mxu0 %v812
    %v814 = vand.u32 %v76, 4294901760
    %815 = vmatpush1.msra.mxu0 %v814
    %v816 = vand.u32 %v79, 4294901760
    %817 = vmatprep.subr.mxu0 %v816
    %v818 = vand.u32 %v78, 4294901760
    %819 = vmatpush1.msra.mxu0 %v818
    %v820 = vand.u32 %v81, 4294901760
    %821 = vmatprep.subr.mxu0 %v820
    %v822 = vand.u32 %v80, 4294901760
    %823 = vmatpush1.msra.mxu0 %v822
    %824 = vmatprep.subr.mxu0 0.0
    %825 = vmatpush1.msra.mxu0 0.0
    %826 = vmatprep.subr.mxu0 0.0
    %827 = vmatpush1.msra.mxu0 0.0
    %828 = vmatprep.subr.mxu0 0.0
    %829 = vmatpush1.msra.mxu0 0.0
    %830 = vmatprep.subr.mxu0 0.0
    %831 = vmatpush1.msra.mxu0 0.0
    %832 = vmatprep.subr.mxu0 0.0
    %833 = vmatpush1.msra.mxu0 0.0
    %834 = vmatprep.subr.mxu0 0.0
    %835 = vmatpush1.msra.mxu0 0.0
    %836 = vmatprep.subr.mxu0 0.0
    %837 = vmatpush1.msra.mxu0 0.0
    %838 = vmatprep.subr.mxu0 0.0
    %839 = vmatpush1.msra.mxu0 0.0
    %840 = vmatprep.subr.mxu0 0.0
    %841 = vmatpush1.msra.mxu0 0.0
    %842 = vmatprep.subr.mxu0 0.0
    %843 = vmatpush1.msra.mxu0 0.0
    %844 = vmatprep.subr.mxu0 0.0
    %845 = vmatpush1.msra.mxu0 0.0
    %846 = vmatprep.subr.mxu0 0.0
    %847 = vmatpush1.msra.mxu0 0.0
    %848 = vmatprep.subr.mxu0 0.0
    %849 = vmatpush1.msra.mxu0 0.0
    %850 = vmatprep.subr.mxu0 0.0
    %851 = vmatpush1.msra.mxu0 0.0
    %852 = vmatprep.subr.mxu0 0.0
    %853 = vmatpush1.msra.mxu0 0.0
    %854 = vmatprep.subr.mxu0 0.0
    %855 = vmatpush1.msra.mxu0 0.0
    %856 = vmatprep.subr.mxu0 0.0
    %857 = vmatpush1.msra.mxu0 0.0
    %858 = vmatprep.subr.mxu0 0.0
    %859 = vmatpush1.msra.mxu0 0.0
    %860 = vmatprep.subr.mxu0 0.0
    %861 = vmatpush1.msra.mxu0 0.0
    %862 = vmatprep.subr.mxu0 0.0
    %863 = vmatpush1.msra.mxu0 0.0
    %864 = vmatprep.subr.mxu0 0.0
    %865 = vmatpush1.msra.mxu0 0.0
    %866 = vmatprep.subr.mxu0 0.0
    %867 = vmatpush1.msra.mxu0 0.0
    %868 = vmatprep.subr.mxu0 0.0
    %869 = vmatpush1.msra.mxu0 0.0
    %870 = vmatprep.subr.mxu0 0.0
    %871 = vmatpush1.msra.mxu0 0.0
    %872 = vmatprep.mubr.f32.mxu0 0.0
    %v873 = vand.u32 %v96, 4294901760
    %874 = vmatmul.mubr.f32.gmra.mrb[0].mxu0 %v873
    %v875 = vpop.f32.mrb[0].mxu0
    %v876 = vadd.f32 %v767, %v875
    %v877 = vpop.f32.mrb[0].mxu0
    %v878 = vadd.f32 %v769, %v877
    %879 = vmatprep.mubr.f32.mxu0 0.0
    %v880 = vand.u32 %v99, 4294901760
    %881 = vmatmul.mubr.f32.gmra.mrb[0].mxu0 %v880
    %v882 = vpop.f32.mrb[0].mxu0
    %v883 = vadd.f32 %v774, %v882
    %v884 = vpop.f32.mrb[0].mxu0
    %v885 = vadd.f32 %v776, %v884
    %886 = vmatprep.mubr.f32.mxu0 0.0
    %v887 = vand.u32 %v102, 4294901760
    %888 = vmatmul.mubr.f32.gmra.mrb[0].mxu0 %v887
    %v889 = vpop.f32.mrb[0].mxu0
    %v890 = vadd.f32 %v781, %v889
    %v891 = vpop.f32.mrb[0].mxu0
    %v892 = vadd.f32 %v783, %v891
    %893 = vmatprep.mubr.f32.mxu0 0.0
    %v894 = vand.u32 %v105, 4294901760
    %895 = vmatmul.mubr.f32.gmra.mrb[0].mxu0 %v894
    %v896 = vpop.f32.mrb[0].mxu0
    %v897 = vadd.f32 %v788, %v896
    %v898 = vpop.f32.mrb[0].mxu0
    %v899 = vadd.f32 %v790, %v898
    %900 = vdwg.mxu0
    %v901 = vmul.f32 %v876, 0.5
    %v902 = vmul.f32 %v878, 0.5
    %v903 = vmul.f32 %v883, 0.5
    %v904 = vmul.f32 %v885, 0.5
    %v905 = vmul.f32 %v890, 0.5
    %v906 = vmul.f32 %v892, 0.5
    %v907 = vmul.f32 %v897, 0.5
    %v908 = vmul.f32 %v899, 0.5
    %v909 = vmul.f32 %v876, 0.70710677
    %v910 = vmul.f32 %v878, 0.70710677
    %v911 = vmul.f32 %v883, 0.70710677
    %v912 = vmul.f32 %v885, 0.70710677
    %v913 = vmul.f32 %v890, 0.70710677
    %v914 = vmul.f32 %v892, 0.70710677
    %v915 = vmul.f32 %v897, 0.70710677
    %v916 = vmul.f32 %v899, 0.70710677
    %v917 = vand.u32 2147483647, %v909
    %v918 = vand.u32 2147483647, %v910
    %v919 = vand.u32 2147483647, %v911
    %v920 = vand.u32 2147483647, %v912
    %v921 = vand.u32 2147483647, %v913
    %v922 = vand.u32 2147483647, %v914
    %v923 = vand.u32 2147483647, %v915
    %v924 = vand.u32 2147483647, %v916
    %v925 = vmul.f32 %v917, 0.3275911
    %v926 = vmul.f32 %v918, 0.3275911
    %v927 = vmul.f32 %v919, 0.3275911
    %v928 = vmul.f32 %v920, 0.3275911
    %v929 = vmul.f32 %v921, 0.3275911
    %v930 = vmul.f32 %v922, 0.3275911
    %v931 = vmul.f32 %v923, 0.3275911
    %v932 = vmul.f32 %v924, 0.3275911
    %v933 = vadd.f32 %v925, 1.0
    %v934 = vadd.f32 %v926, 1.0
    %v935 = vadd.f32 %v927, 1.0
    %v936 = vadd.f32 %v928, 1.0
    %v937 = vadd.f32 %v929, 1.0
    %v938 = vadd.f32 %v930, 1.0
    %v939 = vadd.f32 %v931, 1.0
    %v940 = vadd.f32 %v932, 1.0
    %v941 = vrcp.pop %v933
    %v942 = vmul.f32 1.0, %v941
    %v943 = vrcp.pop %v934
    %v944 = vmul.f32 1.0, %v943
    %v945 = vrcp.pop %v935
    %v946 = vmul.f32 1.0, %v945
    %v947 = vrcp.pop %v936
    %v948 = vmul.f32 1.0, %v947
    %v949 = vrcp.pop %v937
    %v950 = vmul.f32 1.0, %v949
    %v951 = vrcp.pop %v938
    %v952 = vmul.f32 1.0, %v951
    %v953 = vrcp.pop %v939
    %v954 = vmul.f32 1.0, %v953
    %v955 = vrcp.pop %v940
    %v956 = vmul.f32 1.0, %v955
    %v957 = vmul.f32 %v942, 1.0614054
    %v958 = vmul.f32 %v944, 1.0614054
    %v959 = vmul.f32 %v946, 1.0614054
    %v960 = vmul.f32 %v948, 1.0614054
    %v961 = vmul.f32 %v950, 1.0614054
    %v962 = vmul.f32 %v952, 1.0614054
    %v963 = vmul.f32 %v954, 1.0614054
    %v964 = vmul.f32 %v956, 1.0614054
    %v965 = vadd.f32 %v957, -1.4531521
    %v966 = vadd.f32 %v958, -1.4531521
    %v967 = vadd.f32 %v959, -1.4531521
    %v968 = vadd.f32 %v960, -1.4531521
    %v969 = vadd.f32 %v961, -1.4531521
    %v970 = vadd.f32 %v962, -1.4531521
    %v971 = vadd.f32 %v963, -1.4531521
    %v972 = vadd.f32 %v964, -1.4531521
    %v973 = vmul.f32 %v965, %v942
    %v974 = vmul.f32 %v966, %v944
    %v975 = vmul.f32 %v967, %v946
    %v976 = vmul.f32 %v968, %v948
    %v977 = vmul.f32 %v969, %v950
    %v978 = vmul.f32 %v970, %v952
    %v979 = vmul.f32 %v971, %v954
    %v980 = vmul.f32 %v972, %v956
    %v981 = vadd.f32 %v973, 1.4214138
    %v982 = vadd.f32 %v974, 1.4214138
    %v983 = vadd.f32 %v975, 1.4214138
    %v984 = vadd.f32 %v976, 1.4214138
    %v985 = vadd.f32 %v977, 1.4214138
    %v986 = vadd.f32 %v978, 1.4214138
    %v987 = vadd.f32 %v979, 1.4214138
    %v988 = vadd.f32 %v980, 1.4214138
    %v989 = vmul.f32 %v981, %v942
    %v990 = vmul.f32 %v982, %v944
    %v991 = vmul.f32 %v983, %v946
    %v992 = vmul.f32 %v984, %v948
    %v993 = vmul.f32 %v985, %v950
    %v994 = vmul.f32 %v986, %v952
    %v995 = vmul.f32 %v987, %v954
    %v996 = vmul.f32 %v988, %v956
    %v997 = vadd.f32 %v989, -0.28449672
    %v998 = vadd.f32 %v990, -0.28449672
    %v999 = vadd.f32 %v991, -0.28449672
    %v1000 = vadd.f32 %v992, -0.28449672
    %v1001 = vadd.f32 %v993, -0.28449672
    %v1002 = vadd.f32 %v994, -0.28449672
    %v1003 = vadd.f32 %v995, -0.28449672
    %v1004 = vadd.f32 %v996, -0.28449672
    %v1005 = vmul.f32 %v997, %v942
    %v1006 = vmul.f32 %v998, %v944
    %v1007 = vmul.f32 %v999, %v946
    %v1008 = vmul.f32 %v1000, %v948
    %v1009 = vmul.f32 %v1001, %v950
    %v1010 = vmul.f32 %v1002, %v952
    %v1011 = vmul.f32 %v1003, %v954
    %v1012 = vmul.f32 %v1004, %v956
    %v1013 = vadd.f32 %v1005, 0.2548296
    %v1014 = vadd.f32 %v1006, 0.2548296
    %v1015 = vadd.f32 %v1007, 0.2548296
    %v1016 = vadd.f32 %v1008, 0.2548296
    %v1017 = vadd.f32 %v1009, 0.2548296
    %v1018 = vadd.f32 %v1010, 0.2548296
    %v1019 = vadd.f32 %v1011, 0.2548296
    %v1020 = vadd.f32 %v1012, 0.2548296
    %v1021 = vmul.f32 %v1013, %v942
    %v1022 = vmul.f32 %v1014, %v944
    %v1023 = vmul.f32 %v1015, %v946
    %v1024 = vmul.f32 %v1016, %v948
    %v1025 = vmul.f32 %v1017, %v950
    %v1026 = vmul.f32 %v1018, %v952
    %v1027 = vmul.f32 %v1019, %v954
    %v1028 = vmul.f32 %v1020, %v956
    %v1029 = vmul.f32 %v917, %v917
    %v1030 = vmul.f32 %v918, %v918
    %v1031 = vmul.f32 %v919, %v919
    %v1032 = vmul.f32 %v920, %v920
    %v1033 = vmul.f32 %v921, %v921
    %v1034 = vmul.f32 %v922, %v922
    %v1035 = vmul.f32 %v923, %v923
    %v1036 = vmul.f32 %v924, %v924
    %v1037 = vsub.f32 0.0, %v1029
    %v1038 = vsub.f32 0.0, %v1030
    %v1039 = vsub.f32 0.0, %v1031
    %v1040 = vsub.f32 0.0, %v1032
    %v1041 = vsub.f32 0.0, %v1033
    %v1042 = vsub.f32 0.0, %v1034
    %v1043 = vsub.f32 0.0, %v1035
    %v1044 = vsub.f32 0.0, %v1036
    %v1045 = vmul.f32 %v1037, 1.442695
    %v1046 = vpow.pop %v1045
    %v1047 = vmul.f32 %v1038, 1.442695
    %v1048 = vpow.pop %v1047
    %v1049 = vmul.f32 %v1039, 1.442695
    %v1050 = vpow.pop %v1049
    %v1051 = vmul.f32 %v1040, 1.442695
    %v1052 = vpow.pop %v1051
    %v1053 = vmul.f32 %v1041, 1.442695
    %v1054 = vpow.pop %v1053
    %v1055 = vmul.f32 %v1042, 1.442695
    %v1056 = vpow.pop %v1055
    %v1057 = vmul.f32 %v1043, 1.442695
    %v1058 = vpow.pop %v1057
    %v1059 = vmul.f32 %v1044, 1.442695
    %v1060 = vpow.pop %v1059
    %v1061 = vmul.f32 %v1021, %v1046
    %v1062 = vmul.f32 %v1022, %v1048
    %v1063 = vmul.f32 %v1023, %v1050
    %v1064 = vmul.f32 %v1024, %v1052
    %v1065 = vmul.f32 %v1025, %v1054
    %v1066 = vmul.f32 %v1026, %v1056
    %v1067 = vmul.f32 %v1027, %v1058
    %v1068 = vmul.f32 %v1028, %v1060
    %v1069 = vsub.f32 1.0, %v1061
    %v1070 = vsub.f32 1.0, %v1062
    %v1071 = vsub.f32 1.0, %v1063
    %v1072 = vsub.f32 1.0, %v1064
    %v1073 = vsub.f32 1.0, %v1065
    %v1074 = vsub.f32 1.0, %v1066
    %v1075 = vsub.f32 1.0, %v1067
    %v1076 = vsub.f32 1.0, %v1068
    %vm1077 = vcmp.lt.f32.partialorder %v909, 0.0
    %vm1078 = vcmp.lt.f32.partialorder %v910, 0.0
    %vm1079 = vcmp.lt.f32.partialorder %v911, 0.0
    %vm1080 = vcmp.lt.f32.partialorder %v912, 0.0
    %vm1081 = vcmp.lt.f32.partialorder %v913, 0.0
    %vm1082 = vcmp.lt.f32.partialorder %v914, 0.0
    %vm1083 = vcmp.lt.f32.partialorder %v915, 0.0
    %vm1084 = vcmp.lt.f32.partialorder %v916, 0.0
    %v1085 = vsub.f32 0.0, %v1069
    %v1086 = vsub.f32 0.0, %v1070
    %v1087 = vsub.f32 0.0, %v1071
    %v1088 = vsub.f32 0.0, %v1072
    %v1089 = vsub.f32 0.0, %v1073
    %v1090 = vsub.f32 0.0, %v1074
    %v1091 = vsub.f32 0.0, %v1075
    %v1092 = vsub.f32 0.0, %v1076
    %v1093 = vsel %vm1077, %v1085, %v1069
    %v1094 = vsel %vm1078, %v1086, %v1070
    %v1095 = vsel %vm1079, %v1087, %v1071
    %v1096 = vsel %vm1080, %v1088, %v1072
    %v1097 = vsel %vm1081, %v1089, %v1073
    %v1098 = vsel %vm1082, %v1090, %v1074
    %v1099 = vsel %vm1083, %v1091, %v1075
    %v1100 = vsel %vm1084, %v1092, %v1076
    %v1101 = vadd.f32 %v1093, 1.0
    %v1102 = vadd.f32 %v1094, 1.0
    %v1103 = vadd.f32 %v1095, 1.0
    %v1104 = vadd.f32 %v1096, 1.0
    %v1105 = vadd.f32 %v1097, 1.0
    %v1106 = vadd.f32 %v1098, 1.0
    %v1107 = vadd.f32 %v1099, 1.0
    %v1108 = vadd.f32 %v1100, 1.0
    %v1109 = vmul.f32 %v901, %v1101
    %v1110 = vmul.f32 %v902, %v1102
    %v1111 = vmul.f32 %v903, %v1103
    %v1112 = vmul.f32 %v904, %v1104
    %v1113 = vmul.f32 %v905, %v1105
    %v1114 = vmul.f32 %v906, %v1106
    %v1115 = vmul.f32 %v907, %v1107
    %v1116 = vmul.f32 %v908, %v1108
    %v1117 = vld [vmem:[#allocation7] sm:$0xff]
    %v1118 = vld [vmem:[#allocation7 + $0x8] sm:$0xff]
    %v1119 = vld [vmem:[#allocation7 + $0x10] sm:$0xff]
    %v1120 = vld [vmem:[#allocation7 + $0x18] sm:$0xff]
    %v1121 = vld [vmem:[#allocation7 + $0x20] sm:$0xff]
    %v1122 = vld [vmem:[#allocation7 + $0x28] sm:$0xff]
    %v1123 = vld [vmem:[#allocation7 + $0x30] sm:$0xff]
    %v1124 = vld [vmem:[#allocation7 + $0x38] sm:$0xff]
    %v1125 = vld [vmem:[#allocation7 + $0x40] sm:$0xff]
    %v1126 = vld [vmem:[#allocation7 + $0x48] sm:$0xff]
    %v1127 = vld [vmem:[#allocation7 + $0x50] sm:$0xff]
    %v1128 = vld [vmem:[#allocation7 + $0x58] sm:$0xff]
    %v1129 = vld [vmem:[#allocation7 + $0x60] sm:$0xff]
    %v1130 = vld [vmem:[#allocation7 + $0x68] sm:$0xff]
    %v1131 = vld [vmem:[#allocation7 + $0x70] sm:$0xff]
    %v1132 = vld [vmem:[#allocation7 + $0x78] sm:$0xff]
    %v1133 = vld [vmem:[#allocation7 + $0x80] sm:$0xff]
    %v1134 = vld [vmem:[#allocation7 + $0x88] sm:$0xff]
    %v1135 = vld [vmem:[#allocation7 + $0x90] sm:$0xff]
    %v1136 = vld [vmem:[#allocation7 + $0x98] sm:$0xff]
    %v1137 = vld [vmem:[#allocation7 + $0xa0] sm:$0xff]
    %v1138 = vld [vmem:[#allocation7 + $0xa8] sm:$0xff]
    %v1139 = vld [vmem:[#allocation7 + $0xb0] sm:$0xff]
    %v1140 = vld [vmem:[#allocation7 + $0xb8] sm:$0xff]
    %v1141 = vld [vmem:[#allocation7 + $0xc0] sm:$0xff]
    %v1142 = vld [vmem:[#allocation7 + $0xc8] sm:$0xff]
    %v1143 = vld [vmem:[#allocation7 + $0xd0] sm:$0xff]
    %v1144 = vld [vmem:[#allocation7 + $0xd8] sm:$0xff]
    %v1145 = vld [vmem:[#allocation7 + $0xe0] sm:$0xff]
    %v1146 = vld [vmem:[#allocation7 + $0xe8] sm:$0xff]
    %v1147 = vld [vmem:[#allocation7 + $0xf0] sm:$0xff]
    %v1148 = vld [vmem:[#allocation7 + $0xf8] sm:$0xff]
    %v1149 = vld [vmem:[%s4] sm:$0x1]
    %v1151 = vlaneseq
    %v1152 = vshrl.u32 %v1151, 7
    %v1153 = vsub.s32 0, %v1152
    %v1154 = vrot.slane %v1149, %v1153
    %1156 = vmatprep.subr.mxu0 0.0
    %v1157 = vand.u32 %v1117, 4294901760
    %1158 = vmatpush1.msra.mxu0 %v1157
    %1159 = vmatprep.subr.mxu0 0.0
    %v1160 = vand.u32 %v1118, 4294901760
    %1161 = vmatpush1.msra.mxu0 %v1160
    %1162 = vmatprep.subr.mxu0 0.0
    %v1163 = vand.u32 %v1119, 4294901760
    %1164 = vmatpush1.msra.mxu0 %v1163
    %1165 = vmatprep.subr.mxu0 0.0
    %v1166 = vand.u32 %v1120, 4294901760
    %1167 = vmatpush1.msra.mxu0 %v1166
    %1168 = vmatprep.subr.mxu0 0.0
    %v1169 = vand.u32 %v1121, 4294901760
    %1170 = vmatpush1.msra.mxu0 %v1169
    %1171 = vmatprep.subr.mxu0 0.0
    %v1172 = vand.u32 %v1122, 4294901760
    %1173 = vmatpush1.msra.mxu0 %v1172
    %1174 = vmatprep.subr.mxu0 0.0
    %v1175 = vand.u32 %v1123, 4294901760
    %1176 = vmatpush1.msra.mxu0 %v1175
    %1177 = vmatprep.subr.mxu0 0.0
    %v1178 = vand.u32 %v1124, 4294901760
    %1179 = vmatpush1.msra.mxu0 %v1178
    %1180 = vmatprep.subr.mxu0 0.0
    %v1181 = vand.u32 %v1125, 4294901760
    %1182 = vmatpush1.msra.mxu0 %v1181
    %1183 = vmatprep.subr.mxu0 0.0
    %v1184 = vand.u32 %v1126, 4294901760
    %1185 = vmatpush1.msra.mxu0 %v1184
    %1186 = vmatprep.subr.mxu0 0.0
    %v1187 = vand.u32 %v1127, 4294901760
    %1188 = vmatpush1.msra.mxu0 %v1187
    %1189 = vmatprep.subr.mxu0 0.0
    %v1190 = vand.u32 %v1128, 4294901760
    %1191 = vmatpush1.msra.mxu0 %v1190
    %1192 = vmatprep.subr.mxu0 0.0
    %v1193 = vand.u32 %v1129, 4294901760
    %1194 = vmatpush1.msra.mxu0 %v1193
    %1195 = vmatprep.subr.mxu0 0.0
    %v1196 = vand.u32 %v1130, 4294901760
    %1197 = vmatpush1.msra.mxu0 %v1196
    %1198 = vmatprep.subr.mxu0 0.0
    %v1199 = vand.u32 %v1131, 4294901760
    %1200 = vmatpush1.msra.mxu0 %v1199
    %1201 = vmatprep.subr.mxu0 0.0
    %v1202 = vand.u32 %v1132, 4294901760
    %1203 = vmatpush1.msra.mxu0 %v1202
    %1204 = vmatprep.subr.mxu0 0.0
    %v1205 = vand.u32 %v1133, 4294901760
    %1206 = vmatpush1.msra.mxu0 %v1205
    %1207 = vmatprep.subr.mxu0 0.0
    %v1208 = vand.u32 %v1134, 4294901760
    %1209 = vmatpush1.msra.mxu0 %v1208
    %1210 = vmatprep.subr.mxu0 0.0
    %v1211 = vand.u32 %v1135, 4294901760
    %1212 = vmatpush1.msra.mxu0 %v1211
    %1213 = vmatprep.subr.mxu0 0.0
    %v1214 = vand.u32 %v1136, 4294901760
    %1215 = vmatpush1.msra.mxu0 %v1214
    %1216 = vmatprep.subr.mxu0 0.0
    %v1217 = vand.u32 %v1137, 4294901760
    %1218 = vmatpush1.msra.mxu0 %v1217
    %1219 = vmatprep.subr.mxu0 0.0
    %v1220 = vand.u32 %v1138, 4294901760
    %1221 = vmatpush1.msra.mxu0 %v1220
    %1222 = vmatprep.subr.mxu0 0.0
    %v1223 = vand.u32 %v1139, 4294901760
    %1224 = vmatpush1.msra.mxu0 %v1223
    %1225 = vmatprep.subr.mxu0 0.0
    %v1226 = vand.u32 %v1140, 4294901760
    %1227 = vmatpush1.msra.mxu0 %v1226
    %1228 = vmatprep.subr.mxu0 0.0
    %v1229 = vand.u32 %v1141, 4294901760
    %1230 = vmatpush1.msra.mxu0 %v1229
    %1231 = vmatprep.subr.mxu0 0.0
    %v1232 = vand.u32 %v1142, 4294901760
    %1233 = vmatpush1.msra.mxu0 %v1232
    %1234 = vmatprep.subr.mxu0 0.0
    %v1235 = vand.u32 %v1143, 4294901760
    %1236 = vmatpush1.msra.mxu0 %v1235
    %1237 = vmatprep.subr.mxu0 0.0
    %v1238 = vand.u32 %v1144, 4294901760
    %1239 = vmatpush1.msra.mxu0 %v1238
    %1240 = vmatprep.subr.mxu0 0.0
    %v1241 = vand.u32 %v1145, 4294901760
    %1242 = vmatpush1.msra.mxu0 %v1241
    %1243 = vmatprep.subr.mxu0 0.0
    %v1244 = vand.u32 %v1146, 4294901760
    %1245 = vmatpush1.msra.mxu0 %v1244
    %1246 = vmatprep.subr.mxu0 0.0
    %v1247 = vand.u32 %v1147, 4294901760
    %1248 = vmatpush1.msra.mxu0 %v1247
    %1249 = vmatprep.subr.mxu0 0.0
    %v1250 = vand.u32 %v1148, 4294901760
    %1251 = vmatpush1.msra.mxu0 %v1250
    %v1252 = vand.u32 %v1110, 4294901760
    %v1253 = vsub.f32 %v1110, %v1252
    %v1254 = vand.u32 %v1253, 4294901760
    %v1255 = vsub.f32 %v1253, %v1254
    %v1256 = vand.u32 %v1255, 4294901760
    %1257 = vmatprep.mubr.f32.mxu0 %v1256
    %v1258 = vand.u32 %v1109, 4294901760
    %v1259 = vsub.f32 %v1109, %v1258
    %v1260 = vand.u32 %v1259, 4294901760
    %v1261 = vsub.f32 %v1259, %v1260
    %v1262 = vand.u32 %v1261, 4294901760
    %1263 = vmatmul.mubr.f32.gmra.mrb[0].mxu0 %v1262
    %v1264 = vpop.f32.mrb[0].mxu0
    %v1265 = vadd.f32 %v1154, %v1264
    %v1266 = vpop.f32.mrb[0].mxu0
    %v1267 = vand.u32 %v1112, 4294901760
    %v1268 = vsub.f32 %v1112, %v1267
    %v1269 = vand.u32 %v1268, 4294901760
    %v1270 = vsub.f32 %v1268, %v1269
    %v1271 = vand.u32 %v1270, 4294901760
    %1272 = vmatprep.mubr.f32.mxu0 %v1271
    %v1273 = vand.u32 %v1111, 4294901760
    %v1274 = vsub.f32 %v1111, %v1273
    %v1275 = vand.u32 %v1274, 4294901760
    %v1276 = vsub.f32 %v1274, %v1275
    %v1277 = vand.u32 %v1276, 4294901760
    %1278 = vmatmul.mubr.f32.gmra.mrb[0].mxu0 %v1277
    %v1279 = vpop.f32.mrb[0].mxu0
    %v1280 = vadd.f32 %v1154, %v1279
    %v1281 = vpop.f32.mrb[0].mxu0
    %v1282 = vand.u32 %v1114, 4294901760
    %v1283 = vsub.f32 %v1114, %v1282
    %v1284 = vand.u32 %v1283, 4294901760
    %v1285 = vsub.f32 %v1283, %v1284
    %v1286 = vand.u32 %v1285, 4294901760
    %1287 = vmatprep.mubr.f32.mxu0 %v1286
    %v1288 = vand.u32 %v1113, 4294901760
    %v1289 = vsub.f32 %v1113, %v1288
    %v1290 = vand.u32 %v1289, 4294901760
    %v1291 = vsub.f32 %v1289, %v1290
    %v1292 = vand.u32 %v1291, 4294901760
    %1293 = vmatmul.mubr.f32.gmra.mrb[0].mxu0 %v1292
    %v1294 = vpop.f32.mrb[0].mxu0
    %v1295 = vadd.f32 %v1154, %v1294
    %v1296 = vpop.f32.mrb[0].mxu0
    %v1297 = vand.u32 %v1116, 4294901760
    %v1298 = vsub.f32 %v1116, %v1297
    %v1299 = vand.u32 %v1298, 4294901760
    %v1300 = vsub.f32 %v1298, %v1299
    %v1301 = vand.u32 %v1300, 4294901760
    %1302 = vmatprep.mubr.f32.mxu0 %v1301
    %v1303 = vand.u32 %v1115, 4294901760
    %v1304 = vsub.f32 %v1115, %v1303
    %v1305 = vand.u32 %v1304, 4294901760
    %v1306 = vsub.f32 %v1304, %v1305
    %v1307 = vand.u32 %v1306, 4294901760
    %1308 = vmatmul.mubr.f32.gmra.mrb[0].mxu0 %v1307
    %v1309 = vpop.f32.mrb[0].mxu0
    %v1310 = vadd.f32 %v1154, %v1309
    %v1311 = vpop.f32.mrb[0].mxu0
    %1312 = vdwg.mxu0
    %1313 = vmatprep.subr.mxu0 0.0
    %v1314 = vand.u32 %v1117, 4294901760
    %v1315 = vsub.f32 %v1117, %v1314
    %v1316 = vand.u32 %v1315, 4294901760
    %v1317 = vsub.f32 %v1315, %v1316
    %v1318 = vand.u32 %v1317, 4294901760
    %1319 = vmatpush1.msra.mxu0 %v1318
    %1320 = vmatprep.subr.mxu0 0.0
    %v1321 = vand.u32 %v1118, 4294901760
    %v1322 = vsub.f32 %v1118, %v1321
    %v1323 = vand.u32 %v1322, 4294901760
    %v1324 = vsub.f32 %v1322, %v1323
    %v1325 = vand.u32 %v1324, 4294901760
    %1326 = vmatpush1.msra.mxu0 %v1325
    %1327 = vmatprep.subr.mxu0 0.0
    %v1328 = vand.u32 %v1119, 4294901760
    %v1329 = vsub.f32 %v1119, %v1328
    %v1330 = vand.u32 %v1329, 4294901760
    %v1331 = vsub.f32 %v1329, %v1330
    %v1332 = vand.u32 %v1331, 4294901760
    %1333 = vmatpush1.msra.mxu0 %v1332
    %1334 = vmatprep.subr.mxu0 0.0
    %v1335 = vand.u32 %v1120, 4294901760
    %v1336 = vsub.f32 %v1120, %v1335
    %v1337 = vand.u32 %v1336, 4294901760
    %v1338 = vsub.f32 %v1336, %v1337
    %v1339 = vand.u32 %v1338, 4294901760
    %1340 = vmatpush1.msra.mxu0 %v1339
    %1341 = vmatprep.subr.mxu0 0.0
    %v1342 = vand.u32 %v1121, 4294901760
    %v1343 = vsub.f32 %v1121, %v1342
    %v1344 = vand.u32 %v1343, 4294901760
    %v1345 = vsub.f32 %v1343, %v1344
    %v1346 = vand.u32 %v1345, 4294901760
    %1347 = vmatpush1.msra.mxu0 %v1346
    %1348 = vmatprep.subr.mxu0 0.0
    %v1349 = vand.u32 %v1122, 4294901760
    %v1350 = vsub.f32 %v1122, %v1349
    %v1351 = vand.u32 %v1350, 4294901760
    %v1352 = vsub.f32 %v1350, %v1351
    %v1353 = vand.u32 %v1352, 4294901760
    %1354 = vmatpush1.msra.mxu0 %v1353
    %1355 = vmatprep.subr.mxu0 0.0
    %v1356 = vand.u32 %v1123, 4294901760
    %v1357 = vsub.f32 %v1123, %v1356
    %v1358 = vand.u32 %v1357, 4294901760
    %v1359 = vsub.f32 %v1357, %v1358
    %v1360 = vand.u32 %v1359, 4294901760
    %1361 = vmatpush1.msra.mxu0 %v1360
    %1362 = vmatprep.subr.mxu0 0.0
    %v1363 = vand.u32 %v1124, 4294901760
    %v1364 = vsub.f32 %v1124, %v1363
    %v1365 = vand.u32 %v1364, 4294901760
    %v1366 = vsub.f32 %v1364, %v1365
    %v1367 = vand.u32 %v1366, 4294901760
    %1368 = vmatpush1.msra.mxu0 %v1367
    %1369 = vmatprep.subr.mxu0 0.0
    %v1370 = vand.u32 %v1125, 4294901760
    %v1371 = vsub.f32 %v1125, %v1370
    %v1372 = vand.u32 %v1371, 4294901760
    %v1373 = vsub.f32 %v1371, %v1372
    %v1374 = vand.u32 %v1373, 4294901760
    %1375 = vmatpush1.msra.mxu0 %v1374
    %1376 = vmatprep.subr.mxu0 0.0
    %v1377 = vand.u32 %v1126, 4294901760
    %v1378 = vsub.f32 %v1126, %v1377
    %v1379 = vand.u32 %v1378, 4294901760
    %v1380 = vsub.f32 %v1378, %v1379
    %v1381 = vand.u32 %v1380, 4294901760
    %1382 = vmatpush1.msra.mxu0 %v1381
    %1383 = vmatprep.subr.mxu0 0.0
    %v1384 = vand.u32 %v1127, 4294901760
    %v1385 = vsub.f32 %v1127, %v1384
    %v1386 = vand.u32 %v1385, 4294901760
    %v1387 = vsub.f32 %v1385, %v1386
    %v1388 = vand.u32 %v1387, 4294901760
    %1389 = vmatpush1.msra.mxu0 %v1388
    %1390 = vmatprep.subr.mxu0 0.0
    %v1391 = vand.u32 %v1128, 4294901760
    %v1392 = vsub.f32 %v1128, %v1391
    %v1393 = vand.u32 %v1392, 4294901760
    %v1394 = vsub.f32 %v1392, %v1393
    %v1395 = vand.u32 %v1394, 4294901760
    %1396 = vmatpush1.msra.mxu0 %v1395
    %1397 = vmatprep.subr.mxu0 0.0
    %v1398 = vand.u32 %v1129, 4294901760
    %v1399 = vsub.f32 %v1129, %v1398
    %v1400 = vand.u32 %v1399, 4294901760
    %v1401 = vsub.f32 %v1399, %v1400
    %v1402 = vand.u32 %v1401, 4294901760
    %1403 = vmatpush1.msra.mxu0 %v1402
    %1404 = vmatprep.subr.mxu0 0.0
    %v1405 = vand.u32 %v1130, 4294901760
    %v1406 = vsub.f32 %v1130, %v1405
    %v1407 = vand.u32 %v1406, 4294901760
    %v1408 = vsub.f32 %v1406, %v1407
    %v1409 = vand.u32 %v1408, 4294901760
    %1410 = vmatpush1.msra.mxu0 %v1409
    %1411 = vmatprep.subr.mxu0 0.0
    %v1412 = vand.u32 %v1131, 4294901760
    %v1413 = vsub.f32 %v1131, %v1412
    %v1414 = vand.u32 %v1413, 4294901760
    %v1415 = vsub.f32 %v1413, %v1414
    %v1416 = vand.u32 %v1415, 4294901760
    %1417 = vmatpush1.msra.mxu0 %v1416
    %1418 = vmatprep.subr.mxu0 0.0
    %v1419 = vand.u32 %v1132, 4294901760
    %v1420 = vsub.f32 %v1132, %v1419
    %v1421 = vand.u32 %v1420, 4294901760
    %v1422 = vsub.f32 %v1420, %v1421
    %v1423 = vand.u32 %v1422, 4294901760
    %1424 = vmatpush1.msra.mxu0 %v1423
    %1425 = vmatprep.subr.mxu0 0.0
    %v1426 = vand.u32 %v1133, 4294901760
    %v1427 = vsub.f32 %v1133, %v1426
    %v1428 = vand.u32 %v1427, 4294901760
    %v1429 = vsub.f32 %v1427, %v1428
    %v1430 = vand.u32 %v1429, 4294901760
    %1431 = vmatpush1.msra.mxu0 %v1430
    %1432 = vmatprep.subr.mxu0 0.0
    %v1433 = vand.u32 %v1134, 4294901760
    %v1434 = vsub.f32 %v1134, %v1433
    %v1435 = vand.u32 %v1434, 4294901760
    %v1436 = vsub.f32 %v1434, %v1435
    %v1437 = vand.u32 %v1436, 4294901760
    %1438 = vmatpush1.msra.mxu0 %v1437
    %1439 = vmatprep.subr.mxu0 0.0
    %v1440 = vand.u32 %v1135, 4294901760
    %v1441 = vsub.f32 %v1135, %v1440
    %v1442 = vand.u32 %v1441, 4294901760
    %v1443 = vsub.f32 %v1441, %v1442
    %v1444 = vand.u32 %v1443, 4294901760
    %1445 = vmatpush1.msra.mxu0 %v1444
    %1446 = vmatprep.subr.mxu0 0.0
    %v1447 = vand.u32 %v1136, 4294901760
    %v1448 = vsub.f32 %v1136, %v1447
    %v1449 = vand.u32 %v1448, 4294901760
    %v1450 = vsub.f32 %v1448, %v1449
    %v1451 = vand.u32 %v1450, 4294901760
    %1452 = vmatpush1.msra.mxu0 %v1451
    %1453 = vmatprep.subr.mxu0 0.0
    %v1454 = vand.u32 %v1137, 4294901760
    %v1455 = vsub.f32 %v1137, %v1454
    %v1456 = vand.u32 %v1455, 4294901760
    %v1457 = vsub.f32 %v1455, %v1456
    %v1458 = vand.u32 %v1457, 4294901760
    %1459 = vmatpush1.msra.mxu0 %v1458
    %1460 = vmatprep.subr.mxu0 0.0
    %v1461 = vand.u32 %v1138, 4294901760
    %v1462 = vsub.f32 %v1138, %v1461
    %v1463 = vand.u32 %v1462, 4294901760
    %v1464 = vsub.f32 %v1462, %v1463
    %v1465 = vand.u32 %v1464, 4294901760
    %1466 = vmatpush1.msra.mxu0 %v1465
    %1467 = vmatprep.subr.mxu0 0.0
    %v1468 = vand.u32 %v1139, 4294901760
    %v1469 = vsub.f32 %v1139, %v1468
    %v1470 = vand.u32 %v1469, 4294901760
    %v1471 = vsub.f32 %v1469, %v1470
    %v1472 = vand.u32 %v1471, 4294901760
    %1473 = vmatpush1.msra.mxu0 %v1472
    %1474 = vmatprep.subr.mxu0 0.0
    %v1475 = vand.u32 %v1140, 4294901760
    %v1476 = vsub.f32 %v1140, %v1475
    %v1477 = vand.u32 %v1476, 4294901760
    %v1478 = vsub.f32 %v1476, %v1477
    %v1479 = vand.u32 %v1478, 4294901760
    %1480 = vmatpush1.msra.mxu0 %v1479
    %1481 = vmatprep.subr.mxu0 0.0
    %v1482 = vand.u32 %v1141, 4294901760
    %v1483 = vsub.f32 %v1141, %v1482
    %v1484 = vand.u32 %v1483, 4294901760
    %v1485 = vsub.f32 %v1483, %v1484
    %v1486 = vand.u32 %v1485, 4294901760
    %1487 = vmatpush1.msra.mxu0 %v1486
    %1488 = vmatprep.subr.mxu0 0.0
    %v1489 = vand.u32 %v1142, 4294901760
    %v1490 = vsub.f32 %v1142, %v1489
    %v1491 = vand.u32 %v1490, 4294901760
    %v1492 = vsub.f32 %v1490, %v1491
    %v1493 = vand.u32 %v1492, 4294901760
    %1494 = vmatpush1.msra.mxu0 %v1493
    %1495 = vmatprep.subr.mxu0 0.0
    %v1496 = vand.u32 %v1143, 4294901760
    %v1497 = vsub.f32 %v1143, %v1496
    %v1498 = vand.u32 %v1497, 4294901760
    %v1499 = vsub.f32 %v1497, %v1498
    %v1500 = vand.u32 %v1499, 4294901760
    %1501 = vmatpush1.msra.mxu0 %v1500
    %1502 = vmatprep.subr.mxu0 0.0
    %v1503 = vand.u32 %v1144, 4294901760
    %v1504 = vsub.f32 %v1144, %v1503
    %v1505 = vand.u32 %v1504, 4294901760
    %v1506 = vsub.f32 %v1504, %v1505
    %v1507 = vand.u32 %v1506, 4294901760
    %1508 = vmatpush1.msra.mxu0 %v1507
    %1509 = vmatprep.subr.mxu0 0.0
    %v1510 = vand.u32 %v1145, 4294901760
    %v1511 = vsub.f32 %v1145, %v1510
    %v1512 = vand.u32 %v1511, 4294901760
    %v1513 = vsub.f32 %v1511, %v1512
    %v1514 = vand.u32 %v1513, 4294901760
    %1515 = vmatpush1.msra.mxu0 %v1514
    %1516 = vmatprep.subr.mxu0 0.0
    %v1517 = vand.u32 %v1146, 4294901760
    %v1518 = vsub.f32 %v1146, %v1517
    %v1519 = vand.u32 %v1518, 4294901760
    %v1520 = vsub.f32 %v1518, %v1519
    %v1521 = vand.u32 %v1520, 4294901760
    %1522 = vmatpush1.msra.mxu0 %v1521
    %1523 = vmatprep.subr.mxu0 0.0
    %v1524 = vand.u32 %v1147, 4294901760
    %v1525 = vsub.f32 %v1147, %v1524
    %v1526 = vand.u32 %v1525, 4294901760
    %v1527 = vsub.f32 %v1525, %v1526
    %v1528 = vand.u32 %v1527, 4294901760
    %1529 = vmatpush1.msra.mxu0 %v1528
    %1530 = vmatprep.subr.mxu0 0.0
    %v1531 = vand.u32 %v1148, 4294901760
    %v1532 = vsub.f32 %v1148, %v1531
    %v1533 = vand.u32 %v1532, 4294901760
    %v1534 = vsub.f32 %v1532, %v1533
    %v1535 = vand.u32 %v1534, 4294901760
    %1536 = vmatpush1.msra.mxu0 %v1535
    %v1537 = vand.u32 %v1110, 4294901760
    %1538 = vmatprep.mubr.f32.mxu0 %v1537
    %v1539 = vand.u32 %v1109, 4294901760
    %1540 = vmatmul.mubr.f32.gmra.mrb[0].mxu0 %v1539
    %v1541 = vpop.f32.mrb[0].mxu0
    %v1542 = vadd.f32 %v1265, %v1541
    %v1543 = vpop.f32.mrb[0].mxu0
    %v1544 = vand.u32 %v1112, 4294901760
    %1545 = vmatprep.mubr.f32.mxu0 %v1544
    %v1546 = vand.u32 %v1111, 4294901760
    %1547 = vmatmul.mubr.f32.gmra.mrb[0].mxu0 %v1546
    %v1548 = vpop.f32.mrb[0].mxu0
    %v1549 = vadd.f32 %v1280, %v1548
    %v1550 = vpop.f32.mrb[0].mxu0
    %v1551 = vand.u32 %v1114, 4294901760
    %1552 = vmatprep.mubr.f32.mxu0 %v1551
    %v1553 = vand.u32 %v1113, 4294901760
    %1554 = vmatmul.mubr.f32.gmra.mrb[0].mxu0 %v1553
    %v1555 = vpop.f32.mrb[0].mxu0
    %v1556 = vadd.f32 %v1295, %v1555
    %v1557 = vpop.f32.mrb[0].mxu0
    %v1558 = vand.u32 %v1116, 4294901760
    %1559 = vmatprep.mubr.f32.mxu0 %v1558
    %v1560 = vand.u32 %v1115, 4294901760
    %1561 = vmatmul.mubr.f32.gmra.mrb[0].mxu0 %v1560
    %v1562 = vpop.f32.mrb[0].mxu0
    %v1563 = vadd.f32 %v1310, %v1562
    %v1564 = vpop.f32.mrb[0].mxu0
    %1565 = vdwg.mxu0
    %1566 = vmatprep.subr.mxu0 0.0
    %v1567 = vand.u32 %v1117, 4294901760
    %v1568 = vsub.f32 %v1117, %v1567
    %1569 = vmatpush1.msra.mxu0 %v1568
    %1570 = vmatprep.subr.mxu0 0.0
    %v1571 = vand.u32 %v1118, 4294901760
    %v1572 = vsub.f32 %v1118, %v1571
    %1573 = vmatpush1.msra.mxu0 %v1572
    %1574 = vmatprep.subr.mxu0 0.0
    %v1575 = vand.u32 %v1119, 4294901760
    %v1576 = vsub.f32 %v1119, %v1575
    %1577 = vmatpush1.msra.mxu0 %v1576
    %1578 = vmatprep.subr.mxu0 0.0
    %v1579 = vand.u32 %v1120, 4294901760
    %v1580 = vsub.f32 %v1120, %v1579
    %1581 = vmatpush1.msra.mxu0 %v1580
    %1582 = vmatprep.subr.mxu0 0.0
    %v1583 = vand.u32 %v1121, 4294901760
    %v1584 = vsub.f32 %v1121, %v1583
    %1585 = vmatpush1.msra.mxu0 %v1584
    %1586 = vmatprep.subr.mxu0 0.0
    %v1587 = vand.u32 %v1122, 4294901760
    %v1588 = vsub.f32 %v1122, %v1587
    %1589 = vmatpush1.msra.mxu0 %v1588
    %1590 = vmatprep.subr.mxu0 0.0
    %v1591 = vand.u32 %v1123, 4294901760
    %v1592 = vsub.f32 %v1123, %v1591
    %1593 = vmatpush1.msra.mxu0 %v1592
    %1594 = vmatprep.subr.mxu0 0.0
    %v1595 = vand.u32 %v1124, 4294901760
    %v1596 = vsub.f32 %v1124, %v1595
    %1597 = vmatpush1.msra.mxu0 %v1596
    %1598 = vmatprep.subr.mxu0 0.0
    %v1599 = vand.u32 %v1125, 4294901760
    %v1600 = vsub.f32 %v1125, %v1599
    %1601 = vmatpush1.msra.mxu0 %v1600
    %1602 = vmatprep.subr.mxu0 0.0
    %v1603 = vand.u32 %v1126, 4294901760
    %v1604 = vsub.f32 %v1126, %v1603
    %1605 = vmatpush1.msra.mxu0 %v1604
    %1606 = vmatprep.subr.mxu0 0.0
    %v1607 = vand.u32 %v1127, 4294901760
    %v1608 = vsub.f32 %v1127, %v1607
    %1609 = vmatpush1.msra.mxu0 %v1608
    %1610 = vmatprep.subr.mxu0 0.0
    %v1611 = vand.u32 %v1128, 4294901760
    %v1612 = vsub.f32 %v1128, %v1611
    %1613 = vmatpush1.msra.mxu0 %v1612
    %1614 = vmatprep.subr.mxu0 0.0
    %v1615 = vand.u32 %v1129, 4294901760
    %v1616 = vsub.f32 %v1129, %v1615
    %1617 = vmatpush1.msra.mxu0 %v1616
    %1618 = vmatprep.subr.mxu0 0.0
    %v1619 = vand.u32 %v1130, 4294901760
    %v1620 = vsub.f32 %v1130, %v1619
    %1621 = vmatpush1.msra.mxu0 %v1620
    %1622 = vmatprep.subr.mxu0 0.0
    %v1623 = vand.u32 %v1131, 4294901760
    %v1624 = vsub.f32 %v1131, %v1623
    %1625 = vmatpush1.msra.mxu0 %v1624
    %1626 = vmatprep.subr.mxu0 0.0
    %v1627 = vand.u32 %v1132, 4294901760
    %v1628 = vsub.f32 %v1132, %v1627
    %1629 = vmatpush1.msra.mxu0 %v1628
    %1630 = vmatprep.subr.mxu0 0.0
    %v1631 = vand.u32 %v1133, 4294901760
    %v1632 = vsub.f32 %v1133, %v1631
    %1633 = vmatpush1.msra.mxu0 %v1632
    %1634 = vmatprep.subr.mxu0 0.0
    %v1635 = vand.u32 %v1134, 4294901760
    %v1636 = vsub.f32 %v1134, %v1635
    %1637 = vmatpush1.msra.mxu0 %v1636
    %1638 = vmatprep.subr.mxu0 0.0
    %v1639 = vand.u32 %v1135, 4294901760
    %v1640 = vsub.f32 %v1135, %v1639
    %1641 = vmatpush1.msra.mxu0 %v1640
    %1642 = vmatprep.subr.mxu0 0.0
    %v1643 = vand.u32 %v1136, 4294901760
    %v1644 = vsub.f32 %v1136, %v1643
    %1645 = vmatpush1.msra.mxu0 %v1644
    %1646 = vmatprep.subr.mxu0 0.0
    %v1647 = vand.u32 %v1137, 4294901760
    %v1648 = vsub.f32 %v1137, %v1647
    %1649 = vmatpush1.msra.mxu0 %v1648
    %1650 = vmatprep.subr.mxu0 0.0
    %v1651 = vand.u32 %v1138, 4294901760
    %v1652 = vsub.f32 %v1138, %v1651
    %1653 = vmatpush1.msra.mxu0 %v1652
    %1654 = vmatprep.subr.mxu0 0.0
    %v1655 = vand.u32 %v1139, 4294901760
    %v1656 = vsub.f32 %v1139, %v1655
    %1657 = vmatpush1.msra.mxu0 %v1656
    %1658 = vmatprep.subr.mxu0 0.0
    %v1659 = vand.u32 %v1140, 4294901760
    %v1660 = vsub.f32 %v1140, %v1659
    %1661 = vmatpush1.msra.mxu0 %v1660
    %1662 = vmatprep.subr.mxu0 0.0
    %v1663 = vand.u32 %v1141, 4294901760
    %v1664 = vsub.f32 %v1141, %v1663
    %1665 = vmatpush1.msra.mxu0 %v1664
    %1666 = vmatprep.subr.mxu0 0.0
    %v1667 = vand.u32 %v1142, 4294901760
    %v1668 = vsub.f32 %v1142, %v1667
    %1669 = vmatpush1.msra.mxu0 %v1668
    %1670 = vmatprep.subr.mxu0 0.0
    %v1671 = vand.u32 %v1143, 4294901760
    %v1672 = vsub.f32 %v1143, %v1671
    %1673 = vmatpush1.msra.mxu0 %v1672
    %1674 = vmatprep.subr.mxu0 0.0
    %v1675 = vand.u32 %v1144, 4294901760
    %v1676 = vsub.f32 %v1144, %v1675
    %1677 = vmatpush1.msra.mxu0 %v1676
    %1678 = vmatprep.subr.mxu0 0.0
    %v1679 = vand.u32 %v1145, 4294901760
    %v1680 = vsub.f32 %v1145, %v1679
    %1681 = vmatpush1.msra.mxu0 %v1680
    %1682 = vmatprep.subr.mxu0 0.0
    %v1683 = vand.u32 %v1146, 4294901760
    %v1684 = vsub.f32 %v1146, %v1683
    %1685 = vmatpush1.msra.mxu0 %v1684
    %1686 = vmatprep.subr.mxu0 0.0
    %v1687 = vand.u32 %v1147, 4294901760
    %v1688 = vsub.f32 %v1147, %v1687
    %1689 = vmatpush1.msra.mxu0 %v1688
    %1690 = vmatprep.subr.mxu0 0.0
    %v1691 = vand.u32 %v1148, 4294901760
    %v1692 = vsub.f32 %v1148, %v1691
    %1693 = vmatpush1.msra.mxu0 %v1692
    %v1694 = vand.u32 %v1110, 4294901760
    %v1695 = vsub.f32 %v1110, %v1694
    %1696 = vmatprep.mubr.f32.mxu0 %v1695
    %v1697 = vand.u32 %v1109, 4294901760
    %v1698 = vsub.f32 %v1109, %v1697
    %1699 = vmatmul.mubr.f32.gmra.mrb[0].mxu0 %v1698
    %v1700 = vpop.f32.mrb[0].mxu0
    %v1701 = vadd.f32 %v1542, %v1700
    %v1702 = vpop.f32.mrb[0].mxu0
    %v1703 = vand.u32 %v1112, 4294901760
    %v1704 = vsub.f32 %v1112, %v1703
    %1705 = vmatprep.mubr.f32.mxu0 %v1704
    %v1706 = vand.u32 %v1111, 4294901760
    %v1707 = vsub.f32 %v1111, %v1706
    %1708 = vmatmul.mubr.f32.gmra.mrb[0].mxu0 %v1707
    %v1709 = vpop.f32.mrb[0].mxu0
    %v1710 = vadd.f32 %v1549, %v1709
    %v1711 = vpop.f32.mrb[0].mxu0
    %v1712 = vand.u32 %v1114, 4294901760
    %v1713 = vsub.f32 %v1114, %v1712
    %1714 = vmatprep.mubr.f32.mxu0 %v1713
    %v1715 = vand.u32 %v1113, 4294901760
    %v1716 = vsub.f32 %v1113, %v1715
    %1717 = vmatmul.mubr.f32.gmra.mrb[0].mxu0 %v1716
    %v1718 = vpop.f32.mrb[0].mxu0
    %v1719 = vadd.f32 %v1556, %v1718
    %v1720 = vpop.f32.mrb[0].mxu0
    %v1721 = vand.u32 %v1116, 4294901760
    %v1722 = vsub.f32 %v1116, %v1721
    %1723 = vmatprep.mubr.f32.mxu0 %v1722
    %v1724 = vand.u32 %v1115, 4294901760
    %v1725 = vsub.f32 %v1115, %v1724
    %1726 = vmatmul.mubr.f32.gmra.mrb[0].mxu0 %v1725
    %v1727 = vpop.f32.mrb[0].mxu0
    %v1728 = vadd.f32 %v1563, %v1727
    %v1729 = vpop.f32.mrb[0].mxu0
    %1730 = vdwg.mxu0
    %1731 = vmatprep.subr.mxu0 0.0
    %v1732 = vand.u32 %v1117, 4294901760
    %1733 = vmatpush1.msra.mxu0 %v1732
    %1734 = vmatprep.subr.mxu0 0.0
    %v1735 = vand.u32 %v1118, 4294901760
    %1736 = vmatpush1.msra.mxu0 %v1735
    %1737 = vmatprep.subr.mxu0 0.0
    %v1738 = vand.u32 %v1119, 4294901760
    %1739 = vmatpush1.msra.mxu0 %v1738
    %1740 = vmatprep.subr.mxu0 0.0
    %v1741 = vand.u32 %v1120, 4294901760
    %1742 = vmatpush1.msra.mxu0 %v1741
    %1743 = vmatprep.subr.mxu0 0.0
    %v1744 = vand.u32 %v1121, 4294901760
    %1745 = vmatpush1.msra.mxu0 %v1744
    %1746 = vmatprep.subr.mxu0 0.0
    %v1747 = vand.u32 %v1122, 4294901760
    %1748 = vmatpush1.msra.mxu0 %v1747
    %1749 = vmatprep.subr.mxu0 0.0
    %v1750 = vand.u32 %v1123, 4294901760
    %1751 = vmatpush1.msra.mxu0 %v1750
    %1752 = vmatprep.subr.mxu0 0.0
    %v1753 = vand.u32 %v1124, 4294901760
    %1754 = vmatpush1.msra.mxu0 %v1753
    %1755 = vmatprep.subr.mxu0 0.0
    %v1756 = vand.u32 %v1125, 4294901760
    %1757 = vmatpush1.msra.mxu0 %v1756
    %1758 = vmatprep.subr.mxu0 0.0
    %v1759 = vand.u32 %v1126, 4294901760
    %1760 = vmatpush1.msra.mxu0 %v1759
    %1761 = vmatprep.subr.mxu0 0.0
    %v1762 = vand.u32 %v1127, 4294901760
    %1763 = vmatpush1.msra.mxu0 %v1762
    %1764 = vmatprep.subr.mxu0 0.0
    %v1765 = vand.u32 %v1128, 4294901760
    %1766 = vmatpush1.msra.mxu0 %v1765
    %1767 = vmatprep.subr.mxu0 0.0
    %v1768 = vand.u32 %v1129, 4294901760
    %1769 = vmatpush1.msra.mxu0 %v1768
    %1770 = vmatprep.subr.mxu0 0.0
    %v1771 = vand.u32 %v1130, 4294901760
    %1772 = vmatpush1.msra.mxu0 %v1771
    %1773 = vmatprep.subr.mxu0 0.0
    %v1774 = vand.u32 %v1131, 4294901760
    %1775 = vmatpush1.msra.mxu0 %v1774
    %1776 = vmatprep.subr.mxu0 0.0
    %v1777 = vand.u32 %v1132, 4294901760
    %1778 = vmatpush1.msra.mxu0 %v1777
    %1779 = vmatprep.subr.mxu0 0.0
    %v1780 = vand.u32 %v1133, 4294901760
    %1781 = vmatpush1.msra.mxu0 %v1780
    %1782 = vmatprep.subr.mxu0 0.0
    %v1783 = vand.u32 %v1134, 4294901760
    %1784 = vmatpush1.msra.mxu0 %v1783
    %1785 = vmatprep.subr.mxu0 0.0
    %v1786 = vand.u32 %v1135, 4294901760
    %1787 = vmatpush1.msra.mxu0 %v1786
    %1788 = vmatprep.subr.mxu0 0.0
    %v1789 = vand.u32 %v1136, 4294901760
    %1790 = vmatpush1.msra.mxu0 %v1789
    %1791 = vmatprep.subr.mxu0 0.0
    %v1792 = vand.u32 %v1137, 4294901760
    %1793 = vmatpush1.msra.mxu0 %v1792
    %1794 = vmatprep.subr.mxu0 0.0
    %v1795 = vand.u32 %v1138, 4294901760
    %1796 = vmatpush1.msra.mxu0 %v1795
    %1797 = vmatprep.subr.mxu0 0.0
    %v1798 = vand.u32 %v1139, 4294901760
    %1799 = vmatpush1.msra.mxu0 %v1798
    %1800 = vmatprep.subr.mxu0 0.0
    %v1801 = vand.u32 %v1140, 4294901760
    %1802 = vmatpush1.msra.mxu0 %v1801
    %1803 = vmatprep.subr.mxu0 0.0
    %v1804 = vand.u32 %v1141, 4294901760
    %1805 = vmatpush1.msra.mxu0 %v1804
    %1806 = vmatprep.subr.mxu0 0.0
    %v1807 = vand.u32 %v1142, 4294901760
    %1808 = vmatpush1.msra.mxu0 %v1807
    %1809 = vmatprep.subr.mxu0 0.0
    %v1810 = vand.u32 %v1143, 4294901760
    %1811 = vmatpush1.msra.mxu0 %v1810
    %1812 = vmatprep.subr.mxu0 0.0
    %v1813 = vand.u32 %v1144, 4294901760
    %1814 = vmatpush1.msra.mxu0 %v1813
    %1815 = vmatprep.subr.mxu0 0.0
    %v1816 = vand.u32 %v1145, 4294901760
    %1817 = vmatpush1.msra.mxu0 %v1816
    %1818 = vmatprep.subr.mxu0 0.0
    %v1819 = vand.u32 %v1146, 4294901760
    %1820 = vmatpush1.msra.mxu0 %v1819
    %1821 = vmatprep.subr.mxu0 0.0
    %v1822 = vand.u32 %v1147, 4294901760
    %1823 = vmatpush1.msra.mxu0 %v1822
    %1824 = vmatprep.subr.mxu0 0.0
    %v1825 = vand.u32 %v1148, 4294901760
    %1826 = vmatpush1.msra.mxu0 %v1825
    %v1827 = vand.u32 %v1110, 4294901760
    %v1828 = vsub.f32 %v1110, %v1827
    %v1829 = vand.u32 %v1828, 4294901760
    %1830 = vmatprep.mubr.f32.mxu0 %v1829
    %v1831 = vand.u32 %v1109, 4294901760
    %v1832 = vsub.f32 %v1109, %v1831
    %v1833 = vand.u32 %v1832, 4294901760
    %1834 = vmatmul.mubr.f32.gmra.mrb[0].mxu0 %v1833
    %v1835 = vpop.f32.mrb[0].mxu0
    %v1836 = vadd.f32 %v1701, %v1835
    %v1837 = vpop.f32.mrb[0].mxu0
    %v1838 = vand.u32 %v1112, 4294901760
    %v1839 = vsub.f32 %v1112, %v1838
    %v1840 = vand.u32 %v1839, 4294901760
    %1841 = vmatprep.mubr.f32.mxu0 %v1840
    %v1842 = vand.u32 %v1111, 4294901760
    %v1843 = vsub.f32 %v1111, %v1842
    %v1844 = vand.u32 %v1843, 4294901760
    %1845 = vmatmul.mubr.f32.gmra.mrb[0].mxu0 %v1844
    %v1846 = vpop.f32.mrb[0].mxu0
    %v1847 = vadd.f32 %v1710, %v1846
    %v1848 = vpop.f32.mrb[0].mxu0
    %v1849 = vand.u32 %v1114, 4294901760
    %v1850 = vsub.f32 %v1114, %v1849
    %v1851 = vand.u32 %v1850, 4294901760
    %1852 = vmatprep.mubr.f32.mxu0 %v1851
    %v1853 = vand.u32 %v1113, 4294901760
    %v1854 = vsub.f32 %v1113, %v1853
    %v1855 = vand.u32 %v1854, 4294901760
    %1856 = vmatmul.mubr.f32.gmra.mrb[0].mxu0 %v1855
    %v1857 = vpop.f32.mrb[0].mxu0
    %v1858 = vadd.f32 %v1719, %v1857
    %v1859 = vpop.f32.mrb[0].mxu0
    %v1860 = vand.u32 %v1116, 4294901760
    %v1861 = vsub.f32 %v1116, %v1860
    %v1862 = vand.u32 %v1861, 4294901760
    %1863 = vmatprep.mubr.f32.mxu0 %v1862
    %v1864 = vand.u32 %v1115, 4294901760
    %v1865 = vsub.f32 %v1115, %v1864
    %v1866 = vand.u32 %v1865, 4294901760
    %1867 = vmatmul.mubr.f32.gmra.mrb[0].mxu0 %v1866
    %v1868 = vpop.f32.mrb[0].mxu0
    %v1869 = vadd.f32 %v1728, %v1868
    %v1870 = vpop.f32.mrb[0].mxu0
    %1871 = vdwg.mxu0
    %1872 = vmatprep.subr.mxu0 0.0
    %v1873 = vand.u32 %v1117, 4294901760
    %v1874 = vsub.f32 %v1117, %v1873
    %v1875 = vand.u32 %v1874, 4294901760
    %1876 = vmatpush1.msra.mxu0 %v1875
    %1877 = vmatprep.subr.mxu0 0.0
    %v1878 = vand.u32 %v1118, 4294901760
    %v1879 = vsub.f32 %v1118, %v1878
    %v1880 = vand.u32 %v1879, 4294901760
    %1881 = vmatpush1.msra.mxu0 %v1880
    %1882 = vmatprep.subr.mxu0 0.0
    %v1883 = vand.u32 %v1119, 4294901760
    %v1884 = vsub.f32 %v1119, %v1883
    %v1885 = vand.u32 %v1884, 4294901760
    %1886 = vmatpush1.msra.mxu0 %v1885
    %1887 = vmatprep.subr.mxu0 0.0
    %v1888 = vand.u32 %v1120, 4294901760
    %v1889 = vsub.f32 %v1120, %v1888
    %v1890 = vand.u32 %v1889, 4294901760
    %1891 = vmatpush1.msra.mxu0 %v1890
    %1892 = vmatprep.subr.mxu0 0.0
    %v1893 = vand.u32 %v1121, 4294901760
    %v1894 = vsub.f32 %v1121, %v1893
    %v1895 = vand.u32 %v1894, 4294901760
    %1896 = vmatpush1.msra.mxu0 %v1895
    %1897 = vmatprep.subr.mxu0 0.0
    %v1898 = vand.u32 %v1122, 4294901760
    %v1899 = vsub.f32 %v1122, %v1898
    %v1900 = vand.u32 %v1899, 4294901760
    %1901 = vmatpush1.msra.mxu0 %v1900
    %1902 = vmatprep.subr.mxu0 0.0
    %v1903 = vand.u32 %v1123, 4294901760
    %v1904 = vsub.f32 %v1123, %v1903
    %v1905 = vand.u32 %v1904, 4294901760
    %1906 = vmatpush1.msra.mxu0 %v1905
    %1907 = vmatprep.subr.mxu0 0.0
    %v1908 = vand.u32 %v1124, 4294901760
    %v1909 = vsub.f32 %v1124, %v1908
    %v1910 = vand.u32 %v1909, 4294901760
    %1911 = vmatpush1.msra.mxu0 %v1910
    %1912 = vmatprep.subr.mxu0 0.0
    %v1913 = vand.u32 %v1125, 4294901760
    %v1914 = vsub.f32 %v1125, %v1913
    %v1915 = vand.u32 %v1914, 4294901760
    %1916 = vmatpush1.msra.mxu0 %v1915
    %1917 = vmatprep.subr.mxu0 0.0
    %v1918 = vand.u32 %v1126, 4294901760
    %v1919 = vsub.f32 %v1126, %v1918
    %v1920 = vand.u32 %v1919, 4294901760
    %1921 = vmatpush1.msra.mxu0 %v1920
    %1922 = vmatprep.subr.mxu0 0.0
    %v1923 = vand.u32 %v1127, 4294901760
    %v1924 = vsub.f32 %v1127, %v1923
    %v1925 = vand.u32 %v1924, 4294901760
    %1926 = vmatpush1.msra.mxu0 %v1925
    %1927 = vmatprep.subr.mxu0 0.0
    %v1928 = vand.u32 %v1128, 4294901760
    %v1929 = vsub.f32 %v1128, %v1928
    %v1930 = vand.u32 %v1929, 4294901760
    %1931 = vmatpush1.msra.mxu0 %v1930
    %1932 = vmatprep.subr.mxu0 0.0
    %v1933 = vand.u32 %v1129, 4294901760
    %v1934 = vsub.f32 %v1129, %v1933
    %v1935 = vand.u32 %v1934, 4294901760
    %1936 = vmatpush1.msra.mxu0 %v1935
    %1937 = vmatprep.subr.mxu0 0.0
    %v1938 = vand.u32 %v1130, 4294901760
    %v1939 = vsub.f32 %v1130, %v1938
    %v1940 = vand.u32 %v1939, 4294901760
    %1941 = vmatpush1.msra.mxu0 %v1940
    %1942 = vmatprep.subr.mxu0 0.0
    %v1943 = vand.u32 %v1131, 4294901760
    %v1944 = vsub.f32 %v1131, %v1943
    %v1945 = vand.u32 %v1944, 4294901760
    %1946 = vmatpush1.msra.mxu0 %v1945
    %1947 = vmatprep.subr.mxu0 0.0
    %v1948 = vand.u32 %v1132, 4294901760
    %v1949 = vsub.f32 %v1132, %v1948
    %v1950 = vand.u32 %v1949, 4294901760
    %1951 = vmatpush1.msra.mxu0 %v1950
    %1952 = vmatprep.subr.mxu0 0.0
    %v1953 = vand.u32 %v1133, 4294901760
    %v1954 = vsub.f32 %v1133, %v1953
    %v1955 = vand.u32 %v1954, 4294901760
    %1956 = vmatpush1.msra.mxu0 %v1955
    %1957 = vmatprep.subr.mxu0 0.0
    %v1958 = vand.u32 %v1134, 4294901760
    %v1959 = vsub.f32 %v1134, %v1958
    %v1960 = vand.u32 %v1959, 4294901760
    %1961 = vmatpush1.msra.mxu0 %v1960
    %1962 = vmatprep.subr.mxu0 0.0
    %v1963 = vand.u32 %v1135, 4294901760
    %v1964 = vsub.f32 %v1135, %v1963
    %v1965 = vand.u32 %v1964, 4294901760
    %1966 = vmatpush1.msra.mxu0 %v1965
    %1967 = vmatprep.subr.mxu0 0.0
    %v1968 = vand.u32 %v1136, 4294901760
    %v1969 = vsub.f32 %v1136, %v1968
    %v1970 = vand.u32 %v1969, 4294901760
    %1971 = vmatpush1.msra.mxu0 %v1970
    %1972 = vmatprep.subr.mxu0 0.0
    %v1973 = vand.u32 %v1137, 4294901760
    %v1974 = vsub.f32 %v1137, %v1973
    %v1975 = vand.u32 %v1974, 4294901760
    %1976 = vmatpush1.msra.mxu0 %v1975
    %1977 = vmatprep.subr.mxu0 0.0
    %v1978 = vand.u32 %v1138, 4294901760
    %v1979 = vsub.f32 %v1138, %v1978
    %v1980 = vand.u32 %v1979, 4294901760
    %1981 = vmatpush1.msra.mxu0 %v1980
    %1982 = vmatprep.subr.mxu0 0.0
    %v1983 = vand.u32 %v1139, 4294901760
    %v1984 = vsub.f32 %v1139, %v1983
    %v1985 = vand.u32 %v1984, 4294901760
    %1986 = vmatpush1.msra.mxu0 %v1985
    %1987 = vmatprep.subr.mxu0 0.0
    %v1988 = vand.u32 %v1140, 4294901760
    %v1989 = vsub.f32 %v1140, %v1988
    %v1990 = vand.u32 %v1989, 4294901760
    %1991 = vmatpush1.msra.mxu0 %v1990
    %1992 = vmatprep.subr.mxu0 0.0
    %v1993 = vand.u32 %v1141, 4294901760
    %v1994 = vsub.f32 %v1141, %v1993
    %v1995 = vand.u32 %v1994, 4294901760
    %1996 = vmatpush1.msra.mxu0 %v1995
    %1997 = vmatprep.subr.mxu0 0.0
    %v1998 = vand.u32 %v1142, 4294901760
    %v1999 = vsub.f32 %v1142, %v1998
    %v2000 = vand.u32 %v1999, 4294901760
    %2001 = vmatpush1.msra.mxu0 %v2000
    %2002 = vmatprep.subr.mxu0 0.0
    %v2003 = vand.u32 %v1143, 4294901760
    %v2004 = vsub.f32 %v1143, %v2003
    %v2005 = vand.u32 %v2004, 4294901760
    %2006 = vmatpush1.msra.mxu0 %v2005
    %2007 = vmatprep.subr.mxu0 0.0
    %v2008 = vand.u32 %v1144, 4294901760
    %v2009 = vsub.f32 %v1144, %v2008
    %v2010 = vand.u32 %v2009, 4294901760
    %2011 = vmatpush1.msra.mxu0 %v2010
    %2012 = vmatprep.subr.mxu0 0.0
    %v2013 = vand.u32 %v1145, 4294901760
    %v2014 = vsub.f32 %v1145, %v2013
    %v2015 = vand.u32 %v2014, 4294901760
    %2016 = vmatpush1.msra.mxu0 %v2015
    %2017 = vmatprep.subr.mxu0 0.0
    %v2018 = vand.u32 %v1146, 4294901760
    %v2019 = vsub.f32 %v1146, %v2018
    %v2020 = vand.u32 %v2019, 4294901760
    %2021 = vmatpush1.msra.mxu0 %v2020
    %2022 = vmatprep.subr.mxu0 0.0
    %v2023 = vand.u32 %v1147, 4294901760
    %v2024 = vsub.f32 %v1147, %v2023
    %v2025 = vand.u32 %v2024, 4294901760
    %2026 = vmatpush1.msra.mxu0 %v2025
    %2027 = vmatprep.subr.mxu0 0.0
    %v2028 = vand.u32 %v1148, 4294901760
    %v2029 = vsub.f32 %v1148, %v2028
    %v2030 = vand.u32 %v2029, 4294901760
    %2031 = vmatpush1.msra.mxu0 %v2030
    %v2032 = vand.u32 %v1110, 4294901760
    %2033 = vmatprep.mubr.f32.mxu0 %v2032
    %v2034 = vand.u32 %v1109, 4294901760
    %2035 = vmatmul.mubr.f32.gmra.mrb[0].mxu0 %v2034
    %v2036 = vpop.f32.mrb[0].mxu0
    %v2037 = vadd.f32 %v1836, %v2036
    %v2038 = vpop.f32.mrb[0].mxu0
    %v2039 = vand.u32 %v1112, 4294901760
    %2040 = vmatprep.mubr.f32.mxu0 %v2039
    %v2041 = vand.u32 %v1111, 4294901760
    %2042 = vmatmul.mubr.f32.gmra.mrb[0].mxu0 %v2041
    %v2043 = vpop.f32.mrb[0].mxu0
    %v2044 = vadd.f32 %v1847, %v2043
    %v2045 = vpop.f32.mrb[0].mxu0
    %v2046 = vand.u32 %v1114, 4294901760
    %2047 = vmatprep.mubr.f32.mxu0 %v2046
    %v2048 = vand.u32 %v1113, 4294901760
    %2049 = vmatmul.mubr.f32.gmra.mrb[0].mxu0 %v2048
    %v2050 = vpop.f32.mrb[0].mxu0
    %v2051 = vadd.f32 %v1858, %v2050
    %v2052 = vpop.f32.mrb[0].mxu0
    %v2053 = vand.u32 %v1116, 4294901760
    %2054 = vmatprep.mubr.f32.mxu0 %v2053
    %v2055 = vand.u32 %v1115, 4294901760
    %2056 = vmatmul.mubr.f32.gmra.mrb[0].mxu0 %v2055
    %v2057 = vpop.f32.mrb[0].mxu0
    %v2058 = vadd.f32 %v1869, %v2057
    %v2059 = vpop.f32.mrb[0].mxu0
    %2060 = vdwg.mxu0
    %2061 = vmatprep.subr.mxu0 0.0
    %v2062 = vand.u32 %v1117, 4294901760
    %2063 = vmatpush1.msra.mxu0 %v2062
    %2064 = vmatprep.subr.mxu0 0.0
    %v2065 = vand.u32 %v1118, 4294901760
    %2066 = vmatpush1.msra.mxu0 %v2065
    %2067 = vmatprep.subr.mxu0 0.0
    %v2068 = vand.u32 %v1119, 4294901760
    %2069 = vmatpush1.msra.mxu0 %v2068
    %2070 = vmatprep.subr.mxu0 0.0
    %v2071 = vand.u32 %v1120, 4294901760
    %2072 = vmatpush1.msra.mxu0 %v2071
    %2073 = vmatprep.subr.mxu0 0.0
    %v2074 = vand.u32 %v1121, 4294901760
    %2075 = vmatpush1.msra.mxu0 %v2074
    %2076 = vmatprep.subr.mxu0 0.0
    %v2077 = vand.u32 %v1122, 4294901760
    %2078 = vmatpush1.msra.mxu0 %v2077
    %2079 = vmatprep.subr.mxu0 0.0
    %v2080 = vand.u32 %v1123, 4294901760
    %2081 = vmatpush1.msra.mxu0 %v2080
    %2082 = vmatprep.subr.mxu0 0.0
    %v2083 = vand.u32 %v1124, 4294901760
    %2084 = vmatpush1.msra.mxu0 %v2083
    %2085 = vmatprep.subr.mxu0 0.0
    %v2086 = vand.u32 %v1125, 4294901760
    %2087 = vmatpush1.msra.mxu0 %v2086
    %2088 = vmatprep.subr.mxu0 0.0
    %v2089 = vand.u32 %v1126, 4294901760
    %2090 = vmatpush1.msra.mxu0 %v2089
    %2091 = vmatprep.subr.mxu0 0.0
    %v2092 = vand.u32 %v1127, 4294901760
    %2093 = vmatpush1.msra.mxu0 %v2092
    %2094 = vmatprep.subr.mxu0 0.0
    %v2095 = vand.u32 %v1128, 4294901760
    %2096 = vmatpush1.msra.mxu0 %v2095
    %2097 = vmatprep.subr.mxu0 0.0
    %v2098 = vand.u32 %v1129, 4294901760
    %2099 = vmatpush1.msra.mxu0 %v2098
    %2100 = vmatprep.subr.mxu0 0.0
    %v2101 = vand.u32 %v1130, 4294901760
    %2102 = vmatpush1.msra.mxu0 %v2101
    %2103 = vmatprep.subr.mxu0 0.0
    %v2104 = vand.u32 %v1131, 4294901760
    %2105 = vmatpush1.msra.mxu0 %v2104
    %2106 = vmatprep.subr.mxu0 0.0
    %v2107 = vand.u32 %v1132, 4294901760
    %2108 = vmatpush1.msra.mxu0 %v2107
    %2109 = vmatprep.subr.mxu0 0.0
    %v2110 = vand.u32 %v1133, 4294901760
    %2111 = vmatpush1.msra.mxu0 %v2110
    %2112 = vmatprep.subr.mxu0 0.0
    %v2113 = vand.u32 %v1134, 4294901760
    %2114 = vmatpush1.msra.mxu0 %v2113
    %2115 = vmatprep.subr.mxu0 0.0
    %v2116 = vand.u32 %v1135, 4294901760
    %2117 = vmatpush1.msra.mxu0 %v2116
    %2118 = vmatprep.subr.mxu0 0.0
    %v2119 = vand.u32 %v1136, 4294901760
    %2120 = vmatpush1.msra.mxu0 %v2119
    %2121 = vmatprep.subr.mxu0 0.0
    %v2122 = vand.u32 %v1137, 4294901760
    %2123 = vmatpush1.msra.mxu0 %v2122
    %2124 = vmatprep.subr.mxu0 0.0
    %v2125 = vand.u32 %v1138, 4294901760
    %2126 = vmatpush1.msra.mxu0 %v2125
    %2127 = vmatprep.subr.mxu0 0.0
    %v2128 = vand.u32 %v1139, 4294901760
    %2129 = vmatpush1.msra.mxu0 %v2128
    %2130 = vmatprep.subr.mxu0 0.0
    %v2131 = vand.u32 %v1140, 4294901760
    %2132 = vmatpush1.msra.mxu0 %v2131
    %2133 = vmatprep.subr.mxu0 0.0
    %v2134 = vand.u32 %v1141, 4294901760
    %2135 = vmatpush1.msra.mxu0 %v2134
    %2136 = vmatprep.subr.mxu0 0.0
    %v2137 = vand.u32 %v1142, 4294901760
    %2138 = vmatpush1.msra.mxu0 %v2137
    %2139 = vmatprep.subr.mxu0 0.0
    %v2140 = vand.u32 %v1143, 4294901760
    %2141 = vmatpush1.msra.mxu0 %v2140
    %2142 = vmatprep.subr.mxu0 0.0
    %v2143 = vand.u32 %v1144, 4294901760
    %2144 = vmatpush1.msra.mxu0 %v2143
    %2145 = vmatprep.subr.mxu0 0.0
    %v2146 = vand.u32 %v1145, 4294901760
    %2147 = vmatpush1.msra.mxu0 %v2146
    %2148 = vmatprep.subr.mxu0 0.0
    %v2149 = vand.u32 %v1146, 4294901760
    %2150 = vmatpush1.msra.mxu0 %v2149
    %2151 = vmatprep.subr.mxu0 0.0
    %v2152 = vand.u32 %v1147, 4294901760
    %2153 = vmatpush1.msra.mxu0 %v2152
    %2154 = vmatprep.subr.mxu0 0.0
    %v2155 = vand.u32 %v1148, 4294901760
    %2156 = vmatpush1.msra.mxu0 %v2155
    %v2157 = vand.u32 %v1110, 4294901760
    %2158 = vmatprep.mubr.f32.mxu0 %v2157
    %v2159 = vand.u32 %v1109, 4294901760
    %2160 = vmatmul.mubr.f32.gmra.mrb[0].mxu0 %v2159
    %v2161 = vpop.f32.mrb[0].mxu0
    %v2162 = vadd.f32 %v2037, %v2161
    %v2163 = vpop.f32.mrb[0].mxu0
    %v2164 = vand.u32 %v1112, 4294901760
    %2165 = vmatprep.mubr.f32.mxu0 %v2164
    %v2166 = vand.u32 %v1111, 4294901760
    %2167 = vmatmul.mubr.f32.gmra.mrb[0].mxu0 %v2166
    %v2168 = vpop.f32.mrb[0].mxu0
    %v2169 = vadd.f32 %v2044, %v2168
    %v2170 = vpop.f32.mrb[0].mxu0
    %v2171 = vand.u32 %v1114, 4294901760
    %2172 = vmatprep.mubr.f32.mxu0 %v2171
    %v2173 = vand.u32 %v1113, 4294901760
    %2174 = vmatmul.mubr.f32.gmra.mrb[0].mxu0 %v2173
    %v2175 = vpop.f32.mrb[0].mxu0
    %v2176 = vadd.f32 %v2051, %v2175
    %v2177 = vpop.f32.mrb[0].mxu0
    %v2178 = vand.u32 %v1116, 4294901760
    %2179 = vmatprep.mubr.f32.mxu0 %v2178
    %v2180 = vand.u32 %v1115, 4294901760
    %2181 = vmatmul.mubr.f32.gmra.mrb[0].mxu0 %v2180
    %v2182 = vpop.f32.mrb[0].mxu0
    %v2183 = vadd.f32 %v2058, %v2182
    %v2184 = vpop.f32.mrb[0].mxu0
    %2185 = vdwg.mxu0
    %2186 = vst [vmem:[#allocation8] sm:$0xff] %v2162
    %2187 = vst [vmem:[#allocation8 + $0x8] sm:$0xff] %v2169
    %2188 = vst [vmem:[#allocation8 + $0x10] sm:$0xff] %v2176
    %2189 = vst [vmem:[#allocation8 + $0x18] sm:$0xff] %v2183
    // Predicated region
    $region34: #{tpu_custom_call.1} parent=1 // pred_check
      _
    $region35: #{tpu_custom_call.1} parent=1 // pred_check_branch
      %2191 = sbr.rel (0) target = $region37
    $region36: #{tpu_custom_call.1} parent=1 // pred_region
      %s2193 = ssub.s32 512, 512
      %2194 = vsyncadd [#allocation4], %s2193
      %s2195 = sshll.u32 [#allocation8], 4
      %s2196 = int_to_ptr.vmem [resolvable:$true] %s2195
      %2201 = dma.vmem_to_hbm [thread:$0]  %s2196, 512, %s5, [#allocation4], 128, 128, 8
    $region37: #{tpu_custom_call.1} parent=1 // pred_fallthru
      _
    // Predicated region
    $region38: #{tpu_custom_call.1} parent=1 // pred_check
      _
    $region39: #{tpu_custom_call.1} parent=1 // pred_check_branch
      %2203 = sbr.rel (0) target = $region41
    $region40: #{tpu_custom_call.1} parent=1 // pred_region
      %2204 = dma.done [#allocation4], 512
    $region41: #{tpu_custom_call.1} parent=1 // pred_fallthru
      _
    %2205 = vsyncpa [#allocation3], 1
    %2206 = vsyncpa [#allocation6], 1
    %2207 = vsyncpa [#allocation4], 1

</llo_original>
